<compile_context>
chip_gen: v6e
topology: v6e:2x2x1
jax: 0.10.0
libtpu: 0.0.40
codegen_flags: <defaults>
</compile_context>

<pallas_src>
import jax
import jax.numpy as jnp
from jax.experimental import pallas as pl
from jax.experimental.pallas import tpu as pltpu

TGT_DIM = 99          # target feature size implied by gt_W_clf = Linear(H + 99, H + 99)
GATE_LANES = 128      # per-gate / per-head lane block (lane aligned)
CLF_LANES = 256       # lane block used for the (H + 99)-wide clf gated-tanh outputs

_VMEM = pl.BlockSpec(memory_space=pltpu.MemorySpace.VMEM)


# ----------------------------------------------------------------------------
# Single fused kernel: one-hot embedding matmul + reverse LSTM + attention + head
# ----------------------------------------------------------------------------
def _fused_kernel(q_ref, img_ref, tgt_ref, rep_ref, rept_ref,
                  emb_wih_ref, whh_ref,
                  w_lp_ref, b_lp_ref,
                  w_atti_ref, w_iwa_ref, b_iwa_ref,
                  w_im_ref, b_im_ref,
                  w_c1m_ref, w_c1t_ref, b_c1_ref,
                  w_clf_ref, b_clf_ref,
                  out_ref):
    TB = q_ref.shape[0]                      # T*B question ids, time-major
    BR, F = img_ref.shape                    # image features flattened to (B*R, F)
    B = tgt_ref.shape[0]
    T = TB // B
    V = emb_wih_ref.shape[0]
    G = GATE_LANES
    PB = CLF_LANES
    f32 = jnp.float32

    def dot(a, b):
        return jnp.dot(a, b, preferred_element_type=f32)

    # ---------------- embedding gather + LSTM input projection as ONE matmul
    # emb_wih already holds embedding @ W_ih (lane-aligned gate blocks i,f,o,g)
    # with the LSTM bias folded in, so one one-hot matmul yields every step's
    # input-gate pre-activations at once.
    ids = q_ref[...]                                                   # (T*B, 1) int32
    onehot = jnp.where(
        jax.lax.broadcasted_iota(jnp.int32, (TB, V), 1) == ids, 1.0, 0.0
    ).astype(f32)                                                      # (T*B, V)
    gx_all = dot(onehot, emb_wih_ref[...])                             # (T*B, 4G)

    # ---------------- reverse-direction LSTM (the only direction forward() uses)
    # TODO(synk): if T or B grow beyond toy sizes, switch this unrolled loop to a
    # lax.fori_loop reading per-step rows from VMEM scratch.
    whh = whh_ref[...]                                                 # (G, 4G)
    h = jnp.zeros((B, G), f32)               # padded hidden: columns >= H stay exactly zero
    c = jnp.zeros((B, G), f32)
    for t in range(T - 1, -1, -1):           # reverse time, final state after t == 0
        gates = gx_all[t * B:(t + 1) * B, :] + dot(h, whh)             # (B, 4G)
        sig = jax.nn.sigmoid(gates[:, :3 * G])                         # i, f, o in one EUP pass
        i_g = sig[:, 0 * G:1 * G]
        f_g = sig[:, 1 * G:2 * G]
        o_g = sig[:, 2 * G:3 * G]
        g_g = jnp.tanh(gates[:, 3 * G:4 * G])
        c = f_g * c + i_g * g_g
        h = o_g * jnp.tanh(c)
    lp = h                                   # language prior, (B, 128) zero-padded past H

    # ---------------- everything driven by lp: one packed matmul [att | attp | q | qp]
    lp4 = dot(lp, w_lp_ref[...]) + b_lp_ref[...]                       # (B, 4G)

    # ---------------- attention over the 20 image regions (fully batched)
    img2 = img_ref[...]                                                # (B*R, F)
    # gated_tanh(cat(img, lp)): image part is one packed matmul; the lp part is
    # replicated over regions via one MXU matmul against the precomputed rep.
    att2 = dot(img2, w_atti_ref[...]) + dot(rep_ref[...], lp4[:, :2 * G])   # (B*R, 2G)
    iw_g = jnp.tanh(att2[:, :G]) * jax.nn.sigmoid(att2[:, G:2 * G])         # (B*R, G)

    # Region softmax: the score bias was pre-shifted by a bound on |scores|, so
    # scores <= 0 and exp never overflows; shift is constant per softmax group,
    # so the softmax itself is unchanged.
    scores = dot(iw_g, w_iwa_ref[...]) + b_iwa_ref[...]                # (B*R, 1)
    e = jnp.exp(scores)
    denom = dot(rept_ref[...], e)                                      # (B, 1) block sums
    attended = dot(rept_ref[...], e * img2) / denom                    # (B, F)

    # ---------------- fusion head + classifier (batched over B)
    act_lp = jnp.tanh(lp4[:, 2 * G:3 * G]) * jax.nn.sigmoid(lp4[:, 3 * G:4 * G])   # (B, G)
    im2 = dot(attended, w_im_ref[...]) + b_im_ref[...]                              # (B, 2G)
    act_im = jnp.tanh(im2[:, :G]) * jax.nn.sigmoid(im2[:, G:2 * G])                 # (B, G)
    masked = act_lp * act_im                                                        # (B, G)

    # gated_tanh(cat(masked, target)): concat split into two packed matmuls.
    tgt = tgt_ref[...]                                                 # (B, 99)
    feat2 = dot(masked, w_c1m_ref[...]) + dot(tgt, w_c1t_ref[...]) + b_c1_ref[...]  # (B, 2*PB)
    feat = jnp.tanh(feat2[:, :PB]) * jax.nn.sigmoid(feat2[:, PB:2 * PB])            # (B, PB)

    out_ref[...] = dot(feat, w_clf_ref[...]) + b_clf_ref[...]          # (B, out_dim)


# ----------------------------------------------------------------------------
# Wrapper: essentially no per-call XLA work; one pallas_call per forward.
# ----------------------------------------------------------------------------
@jax.jit
def model_forward(packed, question, image_feature, target):
    B, R, F = image_feature.shape
    T = question.shape[1]
    out_dim = packed["w_clf"].shape[1]
    q_tb = question.astype(jnp.int32).T.reshape(T * B, 1)      # time-major word ids
    img2 = image_feature.reshape(B * R, F).astype(jnp.float32)
    args = (
        q_tb, img2, target.astype(jnp.float32),
        packed["rep"], packed["rep_t"],
        packed["emb_wih"], packed["whh"],
        packed["w_lp"], packed["b_lp"],
        packed["w_atti"], packed["w_iwa"], packed["b_iwa"],
        packed["w_im"], packed["b_im"],
        packed["w_c1m"], packed["w_c1t"], packed["b_c1"],
        packed["w_clf"], packed["b_clf"],
    )
    return pl.pallas_call(
        _fused_kernel,
        out_shape=jax.ShapeDtypeStruct((B, out_dim), jnp.float32),
        in_specs=[_VMEM] * len(args),
        out_specs=_VMEM,
    )(*args)


# ----------------------------------------------------------------------------
# Parameters: PyTorch-shaped init + one-time packing for the kernel.
# ----------------------------------------------------------------------------
def init_params(key, vocab_size, emb_dim, feature_dim, hidden_dim, out_dim):
    """PyTorch-shaped parameters (only the pieces forward() actually uses)."""
    assert hidden_dim * 4 == hidden_dim + TGT_DIM, "clf requires hidden_dim == 33"

    def linear(k, out_f, in_f):
        k1, k2 = jax.random.split(k)
        bound = 1.0 / jnp.sqrt(jnp.float32(in_f))
        w = jax.random.uniform(k1, (out_f, in_f), jnp.float32, -bound, bound)
        b = jax.random.uniform(k2, (out_f,), jnp.float32, -bound, bound)
        return w, b

    keys = jax.random.split(key, 16)
    p = {}
    p["embedding"] = 0.1 * jax.random.normal(keys[0], (vocab_size, emb_dim), jnp.float32)
    # reverse-direction LSTM parameters (PyTorch weight_ih_l0_reverse etc.)
    # TODO(synk): forward-direction LSTM weights / cell state and the image_lstm_x/y,
    # gt_W_image_lstm, gt_W_whole_image, whole_image_and_word_attention layers are
    # never used by forward(); omitted.
    p["lstm_w_ih_rev"], p["lstm_b_ih_rev"] = linear(keys[1], 4 * hidden_dim, emb_dim)
    p["lstm_w_hh_rev"], p["lstm_b_hh_rev"] = linear(keys[2], 4 * hidden_dim, hidden_dim)
    fh = feature_dim + hidden_dim
    p["gt_W_image_attention_w"], p["gt_W_image_attention_b"] = linear(keys[3], hidden_dim, fh)
    p["gt_W_prime_image_attention_w"], p["gt_W_prime_image_attention_b"] = linear(keys[4], hidden_dim, fh)
    p["image_word_attention_w"], p["image_word_attention_b"] = linear(keys[5], 1, hidden_dim)
    p["gt_W_question_w"], p["gt_W_question_b"] = linear(keys[6], hidden_dim, hidden_dim)
    p["gt_W_prime_question_w"], p["gt_W_prime_question_b"] = linear(keys[7], hidden_dim, hidden_dim)
    p["gt_W_image_w"], p["gt_W_image_b"] = linear(keys[8], hidden_dim, feature_dim)
    p["gt_W_prime_image_w"], p["gt_W_prime_image_b"] = linear(keys[9], hidden_dim, feature_dim)
    p["gt_W_clf_w"], p["gt_W_clf_b"] = linear(keys[10], hidden_dim + TGT_DIM, hidden_dim + TGT_DIM)
    p["gt_W_prime_clf_w"], p["gt_W_prime_clf_b"] = linear(keys[11], hidden_dim + TGT_DIM, hidden_dim + TGT_DIM)
    p["clf_w"], p["clf_b"] = linear(keys[12], out_dim, hidden_dim * 4)  # 4H == H + 99
    return p


def prepare_params(p, emb_dim, feature_dim, hidden_dim, batch_size, num_regions):
    """One-time packing: transposes, lane-aligned gate blocks, paired-weight packs,
    emb @ W_ih pre-multiply with bias folded, softmax shift folded into bias,
    constant replication / block-sum matrices."""
    H, E, F, G = hidden_dim, emb_dim, feature_dim, GATE_LANES
    HT = H + TGT_DIM
    PB = CLF_LANES
    B, R = batch_size, num_regions

    def t(w):
        return jnp.asarray(w, jnp.float32).T

    def row(b):
        return jnp.asarray(b, jnp.float32).reshape(1, -1)

    # ---- LSTM (reverse direction); lane blocks reordered to (i, f, o, g) so the
    # kernel's three sigmoid gates occupy contiguous lanes. Padding is zero, so
    # the padded hidden/cell columns stay exactly zero through the recurrence.
    w_ih = jnp.asarray(p["lstm_w_ih_rev"], jnp.float32)            # (4H, E) torch order i,f,g,o
    w_hh = jnp.asarray(p["lstm_w_hh_rev"], jnp.float32)            # (4H, H)
    bias = jnp.asarray(p["lstm_b_ih_rev"] + p["lstm_b_hh_rev"], jnp.float32)
    wih = jnp.zeros((E, 4 * G), jnp.float32)
    whh = jnp.zeros((G, 4 * G), jnp.float32)
    b_l = jnp.zeros((1, 4 * G), jnp.float32)
    for blk, g in enumerate((0, 1, 3, 2)):                         # block -> torch gate i,f,o,g
        wih = wih.at[:, blk * G:blk * G + H].set(w_ih[g * H:(g + 1) * H, :].T)
        whh = whh.at[:H, blk * G:blk * G + H].set(w_hh[g * H:(g + 1) * H, :].T)
        b_l = b_l.at[0, blk * G:blk * G + H].set(bias[g * H:(g + 1) * H])
    emb = jnp.asarray(p["embedding"], jnp.float32)
    emb_wih = emb @ wih + b_l                                      # (V, 4G), bias folded in

    # ---- packed lp-side weights: [att_lp | attp_lp | question | question']
    w_att = t(p["gt_W_image_attention_w"])                         # (F+H, H)
    w_attp = t(p["gt_W_prime_image_attention_w"])
    w_lp = jnp.zeros((G, 4 * G), jnp.float32)
    w_lp = w_lp.at[:H, 0:H].set(w_att[F:])
    w_lp = w_lp.at[:H, G:G + H].set(w_attp[F:])
    w_lp = w_lp.at[:H, 2 * G:2 * G + H].set(t(p["gt_W_question_w"]))
    w_lp = w_lp.at[:H, 3 * G:3 * G + H].set(t(p["gt_W_prime_question_w"]))
    b_lp = jnp.zeros((1, 4 * G), jnp.float32)
    b_lp = b_lp.at[0, 0:H].set(p["gt_W_image_attention_b"])
    b_lp = b_lp.at[0, G:G + H].set(p["gt_W_prime_image_attention_b"])
    b_lp = b_lp.at[0, 2 * G:2 * G + H].set(p["gt_W_question_b"])
    b_lp = b_lp.at[0, 3 * G:3 * G + H].set(p["gt_W_prime_question_b"])

    # ---- packed image-side attention weights: [att_img | attp_img]
    w_atti = jnp.zeros((F, 2 * G), jnp.float32)
    w_atti = w_atti.at[:, 0:H].set(w_att[:F])
    w_atti = w_atti.at[:, G:G + H].set(w_attp[:F])

    # ---- attention score layer; bounded-constant shift (|scores| <= ||w||_1 + |b|,
    # since |iw_g| < 1) folded into the bias so exp(scores) never overflows and
    # never needs an in-kernel max reduce.
    w_iwa = t(p["image_word_attention_w"])                         # (H, 1)
    b_iwa = jnp.asarray(p["image_word_attention_b"], jnp.float32)  # (1,)
    shift = jnp.sum(jnp.abs(w_iwa)) + jnp.abs(b_iwa[0])
    w_iwa_pad = jnp.zeros((G, 1), jnp.float32).at[:H].set(w_iwa)
    b_iwa_shift = (b_iwa - shift).reshape(1, 1)

    # ---- packed attended-image gated tanh: [image | image']
    w_im = jnp.zeros((F, 2 * G), jnp.float32)
    w_im = w_im.at[:, 0:H].set(t(p["gt_W_image_w"]))
    w_im = w_im.at[:, G:G + H].set(t(p["gt_W_prime_image_w"]))
    b_im = jnp.zeros((1, 2 * G), jnp.float32)
    b_im = b_im.at[0, 0:H].set(p["gt_W_image_b"])
    b_im = b_im.at[0, G:G + H].set(p["gt_W_prime_image_b"])

    # ---- packed clf gated tanh, concat split into masked-rows and target-rows: [clf | clf']
    w_c1 = t(p["gt_W_clf_w"])                                      # (HT, HT)
    w_c1p = t(p["gt_W_prime_clf_w"])
    w_c1m = jnp.zeros((G, 2 * PB), jnp.float32)
    w_c1m = w_c1m.at[:H, 0:HT].set(w_c1[:H])
    w_c1m = w_c1m.at[:H, PB:PB + HT].set(w_c1p[:H])
    w_c1t = jnp.zeros((TGT_DIM, 2 * PB), jnp.float32)
    w_c1t = w_c1t.at[:, 0:HT].set(w_c1[H:])
    w_c1t = w_c1t.at[:, PB:PB + HT].set(w_c1p[H:])
    b_c1 = jnp.zeros((1, 2 * PB), jnp.float32)
    b_c1 = b_c1.at[0, 0:HT].set(p["gt_W_clf_b"])
    b_c1 = b_c1.at[0, PB:PB + HT].set(p["gt_W_prime_clf_b"])

    # ---- final classifier (rows past HT are zero; feat's padded lanes are zero too)
    w_clf = jnp.zeros((PB, p["clf_w"].shape[0]), jnp.float32).at[:HT].set(t(p["clf_w"]))

    # ---- constant block-replication (B*R, B) and block-sum (B, B*R) matrices
    ri = jnp.arange(B * R, dtype=jnp.int32)[:, None]
    ci = jnp.arange(B, dtype=jnp.int32)[None, :]
    rep = ((ri >= ci * R) & (ri < (ci + 1) * R)).astype(jnp.float32)   # (B*R, B)
    rep_t = rep.T                                                      # (B, B*R)

    return dict(
        emb_wih=emb_wih, whh=whh,
        w_lp=w_lp, b_lp=b_lp, w_atti=w_atti,
        w_iwa=w_iwa_pad, b_iwa=b_iwa_shift,
        w_im=w_im, b_im=b_im,
        w_c1m=w_c1m, w_c1t=w_c1t, b_c1=b_c1,
        w_clf=w_clf, b_clf=row(p["clf_b"]),
        rep=rep, rep_t=rep_t,
    )


if __name__ == "__main__":
    vocab_size, emb_dim, feature_dim, out_dim = 50, 32, 48, 16
    hidden_dim = 33          # required: hidden_dim * 4 == hidden_dim + 99
    B, T, R = 2, 8, 20       # batch, question length, image regions (20 hard-coded in the module)

    key = jax.random.PRNGKey(0)
    kp, kq, ki, kt = jax.random.split(key, 4)
    raw = init_params(kp, vocab_size, emb_dim, feature_dim, hidden_dim, out_dim)
    packed = prepare_params(raw, emb_dim, feature_dim, hidden_dim, B, R)   # packed ONCE

    question = jax.random.randint(kq, (B, T), 0, vocab_size)
    image_feature = jax.random.normal(ki, (B, R, feature_dim), jnp.float32)
    target = jax.random.normal(kt, (B, TGT_DIM), jnp.float32)

    pred = model_forward(packed, question, image_feature, target)
    pred = jax.block_until_ready(pred)

    assert pred.shape == (B, out_dim), pred.shape
    assert bool(jnp.all(jnp.isfinite(pred)))
    print("KERNEL_OK")
</pallas_src>

<mosaic_0001>
module attributes {stable_mosaic.version = 11 : i64} {
  func.func @_fused_kernel(%arg0: memref<16x1xi32, #tpu.memory_space<vmem>>, %arg1: memref<40x48xf32, #tpu.memory_space<vmem>>, %arg2: memref<2x99xf32, #tpu.memory_space<vmem>>, %arg3: memref<40x2xf32, #tpu.memory_space<vmem>>, %arg4: memref<2x40xf32, #tpu.memory_space<vmem>>, %arg5: memref<50x512xf32, #tpu.memory_space<vmem>>, %arg6: memref<128x512xf32, #tpu.memory_space<vmem>>, %arg7: memref<128x512xf32, #tpu.memory_space<vmem>>, %arg8: memref<1x512xf32, #tpu.memory_space<vmem>>, %arg9: memref<48x256xf32, #tpu.memory_space<vmem>>, %arg10: memref<128x1xf32, #tpu.memory_space<vmem>>, %arg11: memref<1x1xf32, #tpu.memory_space<vmem>>, %arg12: memref<48x256xf32, #tpu.memory_space<vmem>>, %arg13: memref<1x256xf32, #tpu.memory_space<vmem>>, %arg14: memref<128x512xf32, #tpu.memory_space<vmem>>, %arg15: memref<99x512xf32, #tpu.memory_space<vmem>>, %arg16: memref<1x512xf32, #tpu.memory_space<vmem>>, %arg17: memref<256x16xf32, #tpu.memory_space<vmem>>, %arg18: memref<1x16xf32, #tpu.memory_space<vmem>>, %arg19: memref<2x16xf32, #tpu.memory_space<vmem>>) attributes {dimension_semantics = [], scalar_prefetch = 0 : i64, scratch_operands = 0 : i64, tpu.core_type = #tpu.core_type<tc>} {
    %c0 = arith.constant 0 : index
    %c0_0 = arith.constant 0 : index
    %0 = vector.load %arg0[%c0, %c0_0] : memref<16x1xi32, #tpu.memory_space<vmem>>, vector<16x1xi32>
    %1 = tpu.iota {dimensions = array<i32: 1>} : vector<16x50xi32>
    %2 = vector.broadcast %0 : vector<16x1xi32> to vector<16x50xi32>
    %3 = arith.cmpi eq, %1, %2 : vector<16x50xi32>
    %cst = arith.constant 1.000000e+00 : f32
    %cst_1 = arith.constant 0.000000e+00 : f32
    %4 = vector.broadcast %cst : f32 to vector<16x50xf32>
    %5 = vector.broadcast %cst_1 : f32 to vector<16x50xf32>
    %6 = arith.select %3, %4, %5 : vector<16x50xi1>, vector<16x50xf32>
    %c0_2 = arith.constant 0 : index
    %c0_3 = arith.constant 0 : index
    %7 = vector.load %arg5[%c0_2, %c0_3] : memref<50x512xf32, #tpu.memory_space<vmem>>, vector<50x512xf32>
    %cst_4 = arith.constant dense<0.000000e+00> : vector<16x512xf32>
    %8 = tpu.matmul %6, %7, %cst_4 {dimension_numbers = #tpu.dot_dimension_numbers<[1], [0], [0], [1], [0, 0, 1, 1], [], []>} : vector<16x50xf32>, vector<50x512xf32>, vector<16x512xf32> -> vector<16x512xf32>
    %c0_5 = arith.constant 0 : index
    %c0_6 = arith.constant 0 : index
    %9 = vector.load %arg6[%c0_5, %c0_6] : memref<128x512xf32, #tpu.memory_space<vmem>>, vector<128x512xf32>
    %cst_7 = arith.constant 0.000000e+00 : f32
    %10 = vector.broadcast %cst_7 : f32 to vector<2x128xf32>
    %cst_8 = arith.constant 0.000000e+00 : f32
    %11 = vector.broadcast %cst_8 : f32 to vector<2x128xf32>
    %12 = vector.extract_strided_slice %8 {offsets = [14, 0], sizes = [2, 512], strides = [1, 1]} : vector<16x512xf32> to vector<2x512xf32>
    %cst_9 = arith.constant dense<0.000000e+00> : vector<2x512xf32>
    %13 = tpu.matmul %10, %9, %cst_9 {dimension_numbers = #tpu.dot_dimension_numbers<[1], [0], [0], [1], [0, 0, 1, 1], [], []>} : vector<2x128xf32>, vector<128x512xf32>, vector<2x512xf32> -> vector<2x512xf32>
    %14 = arith.addf %12, %13 : vector<2x512xf32>
    %15 = vector.extract_strided_slice %14 {offsets = [0, 0], sizes = [2, 384], strides = [1, 1]} : vector<2x512xf32> to vector<2x384xf32>
    %16 = arith.negf %15 : vector<2x384xf32>
    %17 = math.exp %16 : vector<2x384xf32>
    %cst_10 = arith.constant 1.000000e+00 : f32
    %18 = vector.broadcast %cst_10 : f32 to vector<2x384xf32>
    %19 = arith.addf %18, %17 : vector<2x384xf32>
    %20 = arith.divf %18, %19 : vector<2x384xf32>
    %21 = vector.extract_strided_slice %20 {offsets = [0, 0], sizes = [2, 128], strides = [1, 1]} : vector<2x384xf32> to vector<2x128xf32>
    %22 = vector.extract_strided_slice %20 {offsets = [0, 128], sizes = [2, 128], strides = [1, 1]} : vector<2x384xf32> to vector<2x128xf32>
    %23 = vector.extract_strided_slice %20 {offsets = [0, 256], sizes = [2, 128], strides = [1, 1]} : vector<2x384xf32> to vector<2x128xf32>
    %24 = vector.extract_strided_slice %14 {offsets = [0, 384], sizes = [2, 128], strides = [1, 1]} : vector<2x512xf32> to vector<2x128xf32>
    %25 = math.tanh %24 : vector<2x128xf32>
    %26 = arith.mulf %22, %11 : vector<2x128xf32>
    %27 = arith.mulf %21, %25 : vector<2x128xf32>
    %28 = arith.addf %26, %27 : vector<2x128xf32>
    %29 = math.tanh %28 : vector<2x128xf32>
    %30 = arith.mulf %23, %29 : vector<2x128xf32>
    %31 = vector.extract_strided_slice %8 {offsets = [12, 0], sizes = [2, 512], strides = [1, 1]} : vector<16x512xf32> to vector<2x512xf32>
    %cst_11 = arith.constant dense<0.000000e+00> : vector<2x512xf32>
    %32 = tpu.matmul %30, %9, %cst_11 {dimension_numbers = #tpu.dot_dimension_numbers<[1], [0], [0], [1], [0, 0, 1, 1], [], []>} : vector<2x128xf32>, vector<128x512xf32>, vector<2x512xf32> -> vector<2x512xf32>
    %33 = arith.addf %31, %32 : vector<2x512xf32>
    %34 = vector.extract_strided_slice %33 {offsets = [0, 0], sizes = [2, 384], strides = [1, 1]} : vector<2x512xf32> to vector<2x384xf32>
    %35 = arith.negf %34 : vector<2x384xf32>
    %36 = math.exp %35 : vector<2x384xf32>
    %cst_12 = arith.constant 1.000000e+00 : f32
    %37 = vector.broadcast %cst_12 : f32 to vector<2x384xf32>
    %38 = arith.addf %37, %36 : vector<2x384xf32>
    %39 = arith.divf %37, %38 : vector<2x384xf32>
    %40 = vector.extract_strided_slice %39 {offsets = [0, 0], sizes = [2, 128], strides = [1, 1]} : vector<2x384xf32> to vector<2x128xf32>
    %41 = vector.extract_strided_slice %39 {offsets = [0, 128], sizes = [2, 128], strides = [1, 1]} : vector<2x384xf32> to vector<2x128xf32>
    %42 = vector.extract_strided_slice %39 {offsets = [0, 256], sizes = [2, 128], strides = [1, 1]} : vector<2x384xf32> to vector<2x128xf32>
    %43 = vector.extract_strided_slice %33 {offsets = [0, 384], sizes = [2, 128], strides = [1, 1]} : vector<2x512xf32> to vector<2x128xf32>
    %44 = math.tanh %43 : vector<2x128xf32>
    %45 = arith.mulf %41, %28 : vector<2x128xf32>
    %46 = arith.mulf %40, %44 : vector<2x128xf32>
    %47 = arith.addf %45, %46 : vector<2x128xf32>
    %48 = math.tanh %47 : vector<2x128xf32>
    %49 = arith.mulf %42, %48 : vector<2x128xf32>
    %50 = vector.extract_strided_slice %8 {offsets = [10, 0], sizes = [2, 512], strides = [1, 1]} : vector<16x512xf32> to vector<2x512xf32>
    %cst_13 = arith.constant dense<0.000000e+00> : vector<2x512xf32>
    %51 = tpu.matmul %49, %9, %cst_13 {dimension_numbers = #tpu.dot_dimension_numbers<[1], [0], [0], [1], [0, 0, 1, 1], [], []>} : vector<2x128xf32>, vector<128x512xf32>, vector<2x512xf32> -> vector<2x512xf32>
    %52 = arith.addf %50, %51 : vector<2x512xf32>
    %53 = vector.extract_strided_slice %52 {offsets = [0, 0], sizes = [2, 384], strides = [1, 1]} : vector<2x512xf32> to vector<2x384xf32>
    %54 = arith.negf %53 : vector<2x384xf32>
    %55 = math.exp %54 : vector<2x384xf32>
    %cst_14 = arith.constant 1.000000e+00 : f32
    %56 = vector.broadcast %cst_14 : f32 to vector<2x384xf32>
    %57 = arith.addf %56, %55 : vector<2x384xf32>
    %58 = arith.divf %56, %57 : vector<2x384xf32>
    %59 = vector.extract_strided_slice %58 {offsets = [0, 0], sizes = [2, 128], strides = [1, 1]} : vector<2x384xf32> to vector<2x128xf32>
    %60 = vector.extract_strided_slice %58 {offsets = [0, 128], sizes = [2, 128], strides = [1, 1]} : vector<2x384xf32> to vector<2x128xf32>
    %61 = vector.extract_strided_slice %58 {offsets = [0, 256], sizes = [2, 128], strides = [1, 1]} : vector<2x384xf32> to vector<2x128xf32>
    %62 = vector.extract_strided_slice %52 {offsets = [0, 384], sizes = [2, 128], strides = [1, 1]} : vector<2x512xf32> to vector<2x128xf32>
    %63 = math.tanh %62 : vector<2x128xf32>
    %64 = arith.mulf %60, %47 : vector<2x128xf32>
    %65 = arith.mulf %59, %63 : vector<2x128xf32>
    %66 = arith.addf %64, %65 : vector<2x128xf32>
    %67 = math.tanh %66 : vector<2x128xf32>
    %68 = arith.mulf %61, %67 : vector<2x128xf32>
    %69 = vector.extract_strided_slice %8 {offsets = [8, 0], sizes = [2, 512], strides = [1, 1]} : vector<16x512xf32> to vector<2x512xf32>
    %cst_15 = arith.constant dense<0.000000e+00> : vector<2x512xf32>
    %70 = tpu.matmul %68, %9, %cst_15 {dimension_numbers = #tpu.dot_dimension_numbers<[1], [0], [0], [1], [0, 0, 1, 1], [], []>} : vector<2x128xf32>, vector<128x512xf32>, vector<2x512xf32> -> vector<2x512xf32>
    %71 = arith.addf %69, %70 : vector<2x512xf32>
    %72 = vector.extract_strided_slice %71 {offsets = [0, 0], sizes = [2, 384], strides = [1, 1]} : vector<2x512xf32> to vector<2x384xf32>
    %73 = arith.negf %72 : vector<2x384xf32>
    %74 = math.exp %73 : vector<2x384xf32>
    %cst_16 = arith.constant 1.000000e+00 : f32
    %75 = vector.broadcast %cst_16 : f32 to vector<2x384xf32>
    %76 = arith.addf %75, %74 : vector<2x384xf32>
    %77 = arith.divf %75, %76 : vector<2x384xf32>
    %78 = vector.extract_strided_slice %77 {offsets = [0, 0], sizes = [2, 128], strides = [1, 1]} : vector<2x384xf32> to vector<2x128xf32>
    %79 = vector.extract_strided_slice %77 {offsets = [0, 128], sizes = [2, 128], strides = [1, 1]} : vector<2x384xf32> to vector<2x128xf32>
    %80 = vector.extract_strided_slice %77 {offsets = [0, 256], sizes = [2, 128], strides = [1, 1]} : vector<2x384xf32> to vector<2x128xf32>
    %81 = vector.extract_strided_slice %71 {offsets = [0, 384], sizes = [2, 128], strides = [1, 1]} : vector<2x512xf32> to vector<2x128xf32>
    %82 = math.tanh %81 : vector<2x128xf32>
    %83 = arith.mulf %79, %66 : vector<2x128xf32>
    %84 = arith.mulf %78, %82 : vector<2x128xf32>
    %85 = arith.addf %83, %84 : vector<2x128xf32>
    %86 = math.tanh %85 : vector<2x128xf32>
    %87 = arith.mulf %80, %86 : vector<2x128xf32>
    %88 = vector.extract_strided_slice %8 {offsets = [6, 0], sizes = [2, 512], strides = [1, 1]} : vector<16x512xf32> to vector<2x512xf32>
    %cst_17 = arith.constant dense<0.000000e+00> : vector<2x512xf32>
    %89 = tpu.matmul %87, %9, %cst_17 {dimension_numbers = #tpu.dot_dimension_numbers<[1], [0], [0], [1], [0, 0, 1, 1], [], []>} : vector<2x128xf32>, vector<128x512xf32>, vector<2x512xf32> -> vector<2x512xf32>
    %90 = arith.addf %88, %89 : vector<2x512xf32>
    %91 = vector.extract_strided_slice %90 {offsets = [0, 0], sizes = [2, 384], strides = [1, 1]} : vector<2x512xf32> to vector<2x384xf32>
    %92 = arith.negf %91 : vector<2x384xf32>
    %93 = math.exp %92 : vector<2x384xf32>
    %cst_18 = arith.constant 1.000000e+00 : f32
    %94 = vector.broadcast %cst_18 : f32 to vector<2x384xf32>
    %95 = arith.addf %94, %93 : vector<2x384xf32>
    %96 = arith.divf %94, %95 : vector<2x384xf32>
    %97 = vector.extract_strided_slice %96 {offsets = [0, 0], sizes = [2, 128], strides = [1, 1]} : vector<2x384xf32> to vector<2x128xf32>
    %98 = vector.extract_strided_slice %96 {offsets = [0, 128], sizes = [2, 128], strides = [1, 1]} : vector<2x384xf32> to vector<2x128xf32>
    %99 = vector.extract_strided_slice %96 {offsets = [0, 256], sizes = [2, 128], strides = [1, 1]} : vector<2x384xf32> to vector<2x128xf32>
    %100 = vector.extract_strided_slice %90 {offsets = [0, 384], sizes = [2, 128], strides = [1, 1]} : vector<2x512xf32> to vector<2x128xf32>
    %101 = math.tanh %100 : vector<2x128xf32>
    %102 = arith.mulf %98, %85 : vector<2x128xf32>
    %103 = arith.mulf %97, %101 : vector<2x128xf32>
    %104 = arith.addf %102, %103 : vector<2x128xf32>
    %105 = math.tanh %104 : vector<2x128xf32>
    %106 = arith.mulf %99, %105 : vector<2x128xf32>
    %107 = vector.extract_strided_slice %8 {offsets = [4, 0], sizes = [2, 512], strides = [1, 1]} : vector<16x512xf32> to vector<2x512xf32>
    %cst_19 = arith.constant dense<0.000000e+00> : vector<2x512xf32>
    %108 = tpu.matmul %106, %9, %cst_19 {dimension_numbers = #tpu.dot_dimension_numbers<[1], [0], [0], [1], [0, 0, 1, 1], [], []>} : vector<2x128xf32>, vector<128x512xf32>, vector<2x512xf32> -> vector<2x512xf32>
    %109 = arith.addf %107, %108 : vector<2x512xf32>
    %110 = vector.extract_strided_slice %109 {offsets = [0, 0], sizes = [2, 384], strides = [1, 1]} : vector<2x512xf32> to vector<2x384xf32>
    %111 = arith.negf %110 : vector<2x384xf32>
    %112 = math.exp %111 : vector<2x384xf32>
    %cst_20 = arith.constant 1.000000e+00 : f32
    %113 = vector.broadcast %cst_20 : f32 to vector<2x384xf32>
    %114 = arith.addf %113, %112 : vector<2x384xf32>
    %115 = arith.divf %113, %114 : vector<2x384xf32>
    %116 = vector.extract_strided_slice %115 {offsets = [0, 0], sizes = [2, 128], strides = [1, 1]} : vector<2x384xf32> to vector<2x128xf32>
    %117 = vector.extract_strided_slice %115 {offsets = [0, 128], sizes = [2, 128], strides = [1, 1]} : vector<2x384xf32> to vector<2x128xf32>
    %118 = vector.extract_strided_slice %115 {offsets = [0, 256], sizes = [2, 128], strides = [1, 1]} : vector<2x384xf32> to vector<2x128xf32>
    %119 = vector.extract_strided_slice %109 {offsets = [0, 384], sizes = [2, 128], strides = [1, 1]} : vector<2x512xf32> to vector<2x128xf32>
    %120 = math.tanh %119 : vector<2x128xf32>
    %121 = arith.mulf %117, %104 : vector<2x128xf32>
    %122 = arith.mulf %116, %120 : vector<2x128xf32>
    %123 = arith.addf %121, %122 : vector<2x128xf32>
    %124 = math.tanh %123 : vector<2x128xf32>
    %125 = arith.mulf %118, %124 : vector<2x128xf32>
    %126 = vector.extract_strided_slice %8 {offsets = [2, 0], sizes = [2, 512], strides = [1, 1]} : vector<16x512xf32> to vector<2x512xf32>
    %cst_21 = arith.constant dense<0.000000e+00> : vector<2x512xf32>
    %127 = tpu.matmul %125, %9, %cst_21 {dimension_numbers = #tpu.dot_dimension_numbers<[1], [0], [0], [1], [0, 0, 1, 1], [], []>} : vector<2x128xf32>, vector<128x512xf32>, vector<2x512xf32> -> vector<2x512xf32>
    %128 = arith.addf %126, %127 : vector<2x512xf32>
    %129 = vector.extract_strided_slice %128 {offsets = [0, 0], sizes = [2, 384], strides = [1, 1]} : vector<2x512xf32> to vector<2x384xf32>
    %130 = arith.negf %129 : vector<2x384xf32>
    %131 = math.exp %130 : vector<2x384xf32>
    %cst_22 = arith.constant 1.000000e+00 : f32
    %132 = vector.broadcast %cst_22 : f32 to vector<2x384xf32>
    %133 = arith.addf %132, %131 : vector<2x384xf32>
    %134 = arith.divf %132, %133 : vector<2x384xf32>
    %135 = vector.extract_strided_slice %134 {offsets = [0, 0], sizes = [2, 128], strides = [1, 1]} : vector<2x384xf32> to vector<2x128xf32>
    %136 = vector.extract_strided_slice %134 {offsets = [0, 128], sizes = [2, 128], strides = [1, 1]} : vector<2x384xf32> to vector<2x128xf32>
    %137 = vector.extract_strided_slice %134 {offsets = [0, 256], sizes = [2, 128], strides = [1, 1]} : vector<2x384xf32> to vector<2x128xf32>
    %138 = vector.extract_strided_slice %128 {offsets = [0, 384], sizes = [2, 128], strides = [1, 1]} : vector<2x512xf32> to vector<2x128xf32>
    %139 = math.tanh %138 : vector<2x128xf32>
    %140 = arith.mulf %136, %123 : vector<2x128xf32>
    %141 = arith.mulf %135, %139 : vector<2x128xf32>
    %142 = arith.addf %140, %141 : vector<2x128xf32>
    %143 = math.tanh %142 : vector<2x128xf32>
    %144 = arith.mulf %137, %143 : vector<2x128xf32>
    %145 = vector.extract_strided_slice %8 {offsets = [0, 0], sizes = [2, 512], strides = [1, 1]} : vector<16x512xf32> to vector<2x512xf32>
    %cst_23 = arith.constant dense<0.000000e+00> : vector<2x512xf32>
    %146 = tpu.matmul %144, %9, %cst_23 {dimension_numbers = #tpu.dot_dimension_numbers<[1], [0], [0], [1], [0, 0, 1, 1], [], []>} : vector<2x128xf32>, vector<128x512xf32>, vector<2x512xf32> -> vector<2x512xf32>
    %147 = arith.addf %145, %146 : vector<2x512xf32>
    %148 = vector.extract_strided_slice %147 {offsets = [0, 0], sizes = [2, 384], strides = [1, 1]} : vector<2x512xf32> to vector<2x384xf32>
    %149 = arith.negf %148 : vector<2x384xf32>
    %150 = math.exp %149 : vector<2x384xf32>
    %cst_24 = arith.constant 1.000000e+00 : f32
    %151 = vector.broadcast %cst_24 : f32 to vector<2x384xf32>
    %152 = arith.addf %151, %150 : vector<2x384xf32>
    %153 = arith.divf %151, %152 : vector<2x384xf32>
    %154 = vector.extract_strided_slice %153 {offsets = [0, 0], sizes = [2, 128], strides = [1, 1]} : vector<2x384xf32> to vector<2x128xf32>
    %155 = vector.extract_strided_slice %153 {offsets = [0, 128], sizes = [2, 128], strides = [1, 1]} : vector<2x384xf32> to vector<2x128xf32>
    %156 = vector.extract_strided_slice %153 {offsets = [0, 256], sizes = [2, 128], strides = [1, 1]} : vector<2x384xf32> to vector<2x128xf32>
    %157 = vector.extract_strided_slice %147 {offsets = [0, 384], sizes = [2, 128], strides = [1, 1]} : vector<2x512xf32> to vector<2x128xf32>
    %158 = math.tanh %157 : vector<2x128xf32>
    %159 = arith.mulf %155, %142 : vector<2x128xf32>
    %160 = arith.mulf %154, %158 : vector<2x128xf32>
    %161 = arith.addf %159, %160 : vector<2x128xf32>
    %162 = math.tanh %161 : vector<2x128xf32>
    %163 = arith.mulf %156, %162 : vector<2x128xf32>
    %c0_25 = arith.constant 0 : index
    %c0_26 = arith.constant 0 : index
    %164 = vector.load %arg7[%c0_25, %c0_26] : memref<128x512xf32, #tpu.memory_space<vmem>>, vector<128x512xf32>
    %cst_27 = arith.constant dense<0.000000e+00> : vector<2x512xf32>
    %165 = tpu.matmul %163, %164, %cst_27 {dimension_numbers = #tpu.dot_dimension_numbers<[1], [0], [0], [1], [0, 0, 1, 1], [], []>} : vector<2x128xf32>, vector<128x512xf32>, vector<2x512xf32> -> vector<2x512xf32>
    %c0_28 = arith.constant 0 : index
    %c0_29 = arith.constant 0 : index
    %166 = vector.load %arg8[%c0_28, %c0_29] : memref<1x512xf32, #tpu.memory_space<vmem>>, vector<1x512xf32>
    %167 = vector.broadcast %166 : vector<1x512xf32> to vector<2x512xf32>
    %168 = arith.addf %165, %167 : vector<2x512xf32>
    %c0_30 = arith.constant 0 : index
    %c0_31 = arith.constant 0 : index
    %169 = vector.load %arg1[%c0_30, %c0_31] : memref<40x48xf32, #tpu.memory_space<vmem>>, vector<40x48xf32>
    %c0_32 = arith.constant 0 : index
    %c0_33 = arith.constant 0 : index
    %170 = vector.load %arg9[%c0_32, %c0_33] : memref<48x256xf32, #tpu.memory_space<vmem>>, vector<48x256xf32>
    %cst_34 = arith.constant dense<0.000000e+00> : vector<40x256xf32>
    %171 = tpu.matmul %169, %170, %cst_34 {dimension_numbers = #tpu.dot_dimension_numbers<[1], [0], [0], [1], [0, 0, 1, 1], [], []>} : vector<40x48xf32>, vector<48x256xf32>, vector<40x256xf32> -> vector<40x256xf32>
    %c0_35 = arith.constant 0 : index
    %c0_36 = arith.constant 0 : index
    %172 = vector.load %arg3[%c0_35, %c0_36] : memref<40x2xf32, #tpu.memory_space<vmem>>, vector<40x2xf32>
    %173 = vector.extract_strided_slice %168 {offsets = [0, 0], sizes = [2, 256], strides = [1, 1]} : vector<2x512xf32> to vector<2x256xf32>
    %cst_37 = arith.constant dense<0.000000e+00> : vector<40x256xf32>
    %174 = tpu.matmul %172, %173, %cst_37 {dimension_numbers = #tpu.dot_dimension_numbers<[1], [0], [0], [1], [0, 0, 1, 1], [], []>} : vector<40x2xf32>, vector<2x256xf32>, vector<40x256xf32> -> vector<40x256xf32>
    %175 = arith.addf %171, %174 : vector<40x256xf32>
    %176 = vector.extract_strided_slice %175 {offsets = [0, 0], sizes = [40, 128], strides = [1, 1]} : vector<40x256xf32> to vector<40x128xf32>
    %177 = math.tanh %176 : vector<40x128xf32>
    %178 = vector.extract_strided_slice %175 {offsets = [0, 128], sizes = [40, 128], strides = [1, 1]} : vector<40x256xf32> to vector<40x128xf32>
    %179 = arith.negf %178 : vector<40x128xf32>
    %180 = math.exp %179 : vector<40x128xf32>
    %cst_38 = arith.constant 1.000000e+00 : f32
    %181 = vector.broadcast %cst_38 : f32 to vector<40x128xf32>
    %182 = arith.addf %181, %180 : vector<40x128xf32>
    %183 = arith.divf %181, %182 : vector<40x128xf32>
    %184 = arith.mulf %177, %183 : vector<40x128xf32>
    %c0_39 = arith.constant 0 : index
    %c0_40 = arith.constant 0 : index
    %185 = vector.load %arg10[%c0_39, %c0_40] : memref<128x1xf32, #tpu.memory_space<vmem>>, vector<128x1xf32>
    %cst_41 = arith.constant dense<0.000000e+00> : vector<40x1xf32>
    %186 = tpu.matmul %184, %185, %cst_41 {dimension_numbers = #tpu.dot_dimension_numbers<[1], [0], [0], [1], [0, 0, 1, 1], [], []>} : vector<40x128xf32>, vector<128x1xf32>, vector<40x1xf32> -> vector<40x1xf32>
    %c0_42 = arith.constant 0 : index
    %c0_43 = arith.constant 0 : index
    %187 = vector.load %arg11[%c0_42, %c0_43] : memref<1x1xf32, #tpu.memory_space<vmem>>, vector<1x1xf32>
    %188 = vector.broadcast %187 : vector<1x1xf32> to vector<40x1xf32>
    %189 = arith.addf %186, %188 : vector<40x1xf32>
    %190 = math.exp %189 : vector<40x1xf32>
    %c0_44 = arith.constant 0 : index
    %c0_45 = arith.constant 0 : index
    %191 = vector.load %arg4[%c0_44, %c0_45] : memref<2x40xf32, #tpu.memory_space<vmem>>, vector<2x40xf32>
    %cst_46 = arith.constant dense<0.000000e+00> : vector<2x1xf32>
    %192 = tpu.matmul %191, %190, %cst_46 {dimension_numbers = #tpu.dot_dimension_numbers<[1], [0], [0], [1], [0, 0, 1, 1], [], []>} : vector<2x40xf32>, vector<40x1xf32>, vector<2x1xf32> -> vector<2x1xf32>
    %c0_47 = arith.constant 0 : index
    %c0_48 = arith.constant 0 : index
    %193 = vector.load %arg4[%c0_47, %c0_48] : memref<2x40xf32, #tpu.memory_space<vmem>>, vector<2x40xf32>
    %194 = vector.broadcast %190 : vector<40x1xf32> to vector<40x48xf32>
    %195 = arith.mulf %194, %169 : vector<40x48xf32>
    %cst_49 = arith.constant dense<0.000000e+00> : vector<2x48xf32>
    %196 = tpu.matmul %193, %195, %cst_49 {dimension_numbers = #tpu.dot_dimension_numbers<[1], [0], [0], [1], [0, 0, 1, 1], [], []>} : vector<2x40xf32>, vector<40x48xf32>, vector<2x48xf32> -> vector<2x48xf32>
    %197 = vector.broadcast %192 : vector<2x1xf32> to vector<2x48xf32>
    %198 = arith.divf %196, %197 : vector<2x48xf32>
    %199 = vector.extract_strided_slice %168 {offsets = [0, 256], sizes = [2, 128], strides = [1, 1]} : vector<2x512xf32> to vector<2x128xf32>
    %200 = math.tanh %199 : vector<2x128xf32>
    %201 = vector.extract_strided_slice %168 {offsets = [0, 384], sizes = [2, 128], strides = [1, 1]} : vector<2x512xf32> to vector<2x128xf32>
    %202 = arith.negf %201 : vector<2x128xf32>
    %203 = math.exp %202 : vector<2x128xf32>
    %cst_50 = arith.constant 1.000000e+00 : f32
    %204 = vector.broadcast %cst_50 : f32 to vector<2x128xf32>
    %205 = arith.addf %204, %203 : vector<2x128xf32>
    %206 = arith.divf %204, %205 : vector<2x128xf32>
    %207 = arith.mulf %200, %206 : vector<2x128xf32>
    %c0_51 = arith.constant 0 : index
    %c0_52 = arith.constant 0 : index
    %208 = vector.load %arg12[%c0_51, %c0_52] : memref<48x256xf32, #tpu.memory_space<vmem>>, vector<48x256xf32>
    %cst_53 = arith.constant dense<0.000000e+00> : vector<2x256xf32>
    %209 = tpu.matmul %198, %208, %cst_53 {dimension_numbers = #tpu.dot_dimension_numbers<[1], [0], [0], [1], [0, 0, 1, 1], [], []>} : vector<2x48xf32>, vector<48x256xf32>, vector<2x256xf32> -> vector<2x256xf32>
    %c0_54 = arith.constant 0 : index
    %c0_55 = arith.constant 0 : index
    %210 = vector.load %arg13[%c0_54, %c0_55] : memref<1x256xf32, #tpu.memory_space<vmem>>, vector<1x256xf32>
    %211 = vector.broadcast %210 : vector<1x256xf32> to vector<2x256xf32>
    %212 = arith.addf %209, %211 : vector<2x256xf32>
    %213 = vector.extract_strided_slice %212 {offsets = [0, 0], sizes = [2, 128], strides = [1, 1]} : vector<2x256xf32> to vector<2x128xf32>
    %214 = math.tanh %213 : vector<2x128xf32>
    %215 = vector.extract_strided_slice %212 {offsets = [0, 128], sizes = [2, 128], strides = [1, 1]} : vector<2x256xf32> to vector<2x128xf32>
    %216 = arith.negf %215 : vector<2x128xf32>
    %217 = math.exp %216 : vector<2x128xf32>
    %cst_56 = arith.constant 1.000000e+00 : f32
    %218 = vector.broadcast %cst_56 : f32 to vector<2x128xf32>
    %219 = arith.addf %218, %217 : vector<2x128xf32>
    %220 = arith.divf %218, %219 : vector<2x128xf32>
    %221 = arith.mulf %214, %220 : vector<2x128xf32>
    %222 = arith.mulf %207, %221 : vector<2x128xf32>
    %c0_57 = arith.constant 0 : index
    %c0_58 = arith.constant 0 : index
    %223 = vector.load %arg2[%c0_57, %c0_58] : memref<2x99xf32, #tpu.memory_space<vmem>>, vector<2x99xf32>
    %c0_59 = arith.constant 0 : index
    %c0_60 = arith.constant 0 : index
    %224 = vector.load %arg14[%c0_59, %c0_60] : memref<128x512xf32, #tpu.memory_space<vmem>>, vector<128x512xf32>
    %cst_61 = arith.constant dense<0.000000e+00> : vector<2x512xf32>
    %225 = tpu.matmul %222, %224, %cst_61 {dimension_numbers = #tpu.dot_dimension_numbers<[1], [0], [0], [1], [0, 0, 1, 1], [], []>} : vector<2x128xf32>, vector<128x512xf32>, vector<2x512xf32> -> vector<2x512xf32>
    %c0_62 = arith.constant 0 : index
    %c0_63 = arith.constant 0 : index
    %226 = vector.load %arg15[%c0_62, %c0_63] : memref<99x512xf32, #tpu.memory_space<vmem>>, vector<99x512xf32>
    %cst_64 = arith.constant dense<0.000000e+00> : vector<2x512xf32>
    %227 = tpu.matmul %223, %226, %cst_64 {dimension_numbers = #tpu.dot_dimension_numbers<[1], [0], [0], [1], [0, 0, 1, 1], [], []>} : vector<2x99xf32>, vector<99x512xf32>, vector<2x512xf32> -> vector<2x512xf32>
    %228 = arith.addf %225, %227 : vector<2x512xf32>
    %c0_65 = arith.constant 0 : index
    %c0_66 = arith.constant 0 : index
    %229 = vector.load %arg16[%c0_65, %c0_66] : memref<1x512xf32, #tpu.memory_space<vmem>>, vector<1x512xf32>
    %230 = vector.broadcast %229 : vector<1x512xf32> to vector<2x512xf32>
    %231 = arith.addf %228, %230 : vector<2x512xf32>
    %232 = vector.extract_strided_slice %231 {offsets = [0, 0], sizes = [2, 256], strides = [1, 1]} : vector<2x512xf32> to vector<2x256xf32>
    %233 = math.tanh %232 : vector<2x256xf32>
    %234 = vector.extract_strided_slice %231 {offsets = [0, 256], sizes = [2, 256], strides = [1, 1]} : vector<2x512xf32> to vector<2x256xf32>
    %235 = arith.negf %234 : vector<2x256xf32>
    %236 = math.exp %235 : vector<2x256xf32>
    %cst_67 = arith.constant 1.000000e+00 : f32
    %237 = vector.broadcast %cst_67 : f32 to vector<2x256xf32>
    %238 = arith.addf %237, %236 : vector<2x256xf32>
    %239 = arith.divf %237, %238 : vector<2x256xf32>
    %240 = arith.mulf %233, %239 : vector<2x256xf32>
    %c0_68 = arith.constant 0 : index
    %c0_69 = arith.constant 0 : index
    %241 = vector.load %arg17[%c0_68, %c0_69] : memref<256x16xf32, #tpu.memory_space<vmem>>, vector<256x16xf32>
    %cst_70 = arith.constant dense<0.000000e+00> : vector<2x16xf32>
    %242 = tpu.matmul %240, %241, %cst_70 {dimension_numbers = #tpu.dot_dimension_numbers<[1], [0], [0], [1], [0, 0, 1, 1], [], []>} : vector<2x256xf32>, vector<256x16xf32>, vector<2x16xf32> -> vector<2x16xf32>
    %c0_71 = arith.constant 0 : index
    %c0_72 = arith.constant 0 : index
    %243 = vector.load %arg18[%c0_71, %c0_72] : memref<1x16xf32, #tpu.memory_space<vmem>>, vector<1x16xf32>
    %244 = vector.broadcast %243 : vector<1x16xf32> to vector<2x16xf32>
    %245 = arith.addf %242, %244 : vector<2x16xf32>
    %c0_73 = arith.constant 0 : index
    %c0_74 = arith.constant 0 : index
    %246 = vector.load %arg19[%c0_73, %c0_74] : memref<2x16xf32, #tpu.memory_space<vmem>>, vector<2x16xf32>
    tpu.vector_store %arg19[%c0_73, %c0_74], %245 {strides = array<i32>} : memref<2x16xf32, #tpu.memory_space<vmem>>, vector<2x16xf32>,
    return
  }
}

</mosaic_0001>

<llo_original>
// kernel: model_forward.1
$region0: #{model_forward.1}
  #allocation0 [shape = 'u32[]', space=smem, size = 0x4, offset = 0x4, fixed_abs, tag = 'smem constant byte address 0x4 - core index']
  #allocation1 [shape = 'u32[144,128]{1,0:T(1,128)}', space=vmem, size = 0x12000, scoped, tag = 'internal scratch']
  #allocation2 [shape = 'f32[1,1]{1,0:T(1,128)S(1)}', space=vmem, size = 0x200, scoped, tag = 'scoped memory for model_forward.1']
  %s0 = inlined_call_operand.vmem [shape: s32[16,1], index: 0, kind: input, shape index: {}]
  %s1 = inlined_call_operand.vmem [shape: f32[40,48], index: 1, kind: input, shape index: {}]
  %s2 = inlined_call_operand.vmem [shape: f32[2,99], index: 2, kind: input, shape index: {}]
  %s3 = inlined_call_operand.vmem [shape: f32[40,2], index: 3, kind: input, shape index: {}]
  %s4 = inlined_call_operand.vmem [shape: f32[2,40], index: 4, kind: input, shape index: {}]
  %s5 = inlined_call_operand.hbm [shape: f32[50,512], index: 5, kind: input, shape index: {}]
  %s6 = inlined_call_operand.vmem [shape: f32[128,512], index: 6, kind: input, shape index: {}]
  %s7 = inlined_call_operand.hbm [shape: f32[128,512], index: 7, kind: input, shape index: {}]
  %s8 = inlined_call_operand.vmem [shape: f32[1,512], index: 8, kind: input, shape index: {}]
  %s9 = inlined_call_operand.vmem [shape: f32[48,256], index: 9, kind: input, shape index: {}]
  %s10 = inlined_call_operand.vmem [shape: f32[128,1], index: 10, kind: input, shape index: {}]
  %s11 = inlined_call_operand.<no memory space> [shape: f32[1,1], index: 11, kind: input, shape index: {}]
  %s12 = inlined_call_operand.hbm [shape: f32[48,256], index: 12, kind: input, shape index: {}]
  %s13 = inlined_call_operand.vmem [shape: f32[1,256], index: 13, kind: input, shape index: {}]
  %s14 = inlined_call_operand.hbm [shape: f32[128,512], index: 14, kind: input, shape index: {}]
  %s15 = inlined_call_operand.hbm [shape: f32[99,512], index: 15, kind: input, shape index: {}]
  %s16 = inlined_call_operand.vmem [shape: f32[1,512], index: 16, kind: input, shape index: {}]
  %s17 = inlined_call_operand.vmem [shape: f32[256,16], index: 17, kind: input, shape index: {}]
  %s18 = inlined_call_operand.vmem [shape: f32[1,16], index: 18, kind: input, shape index: {}]
  %s19 = inlined_call_operand.hbm [shape: f32[2,16], index: 19, kind: output, shape index: {}]
  %s20 = sld [smem:[#allocation0]]
  $region106: #{model_forward.1} parent=0
    _
  %s22 = ssub.s32 1, %s20
  %s23 = scalar_select 0, %s22, %s20
  %v24 = vstv %s11
  %25 = vst [vmem:[#allocation2] sm:$0x1] %v24
  $region1: #{model_forward.1} parent=0
    #allocation3 [shape = 'u8[114688]{0}', space=vmem, size = 0x1c000, scoped, tag = 'input window, operand 5, single buffered']
    #allocation4 [shape = 's32[1]{0}', space=sflag, size = 0x4, scoped, tag = 'scoped memory for model_forward.1']
    #allocation5 [shape = 's32[1]{0}', space=sflag, size = 0x4, scoped, tag = 'scoped memory for model_forward.1']
    #allocation6 [shape = 'u8[262144]{0}', space=vmem, size = 0x40000, scoped, tag = 'input window, operand 7, single buffered']
    #allocation7 [shape = 's32[1]{0}', space=sflag, size = 0x4, scoped, tag = 'scoped memory for model_forward.1']
    #allocation8 [shape = 'u8[49152]{0}', space=vmem, size = 0xc000, scoped, tag = 'input window, operand 12, single buffered']
    #allocation9 [shape = 'u8[262144]{0}', space=vmem, size = 0x40000, scoped, tag = 'input window, operand 14, single buffered']
    #allocation10 [shape = 's32[1]{0}', space=sflag, size = 0x4, scoped, tag = 'scoped memory for model_forward.1']
    #allocation11 [shape = 'u8[212992]{0}', space=vmem, size = 0x34000, scoped, tag = 'input window, operand 15, single buffered']
    #allocation12 [shape = 'u8[1024]{0}', space=vmem, size = 0x400, scoped, tag = 'output window, operand 0, single buffered']
    %26 = vsyncpa [#allocation4], 0
    %27 = vsyncpa [#allocation7], 0
    %28 = vsyncpa [#allocation10], 0
    %29 = vsyncpa [#allocation5], 0
    // Predicated region
    $region2: #{model_forward.1} parent=1 // pred_check
      _
    $region3: #{model_forward.1} parent=1 // pred_check_branch
      %31 = sbr.rel (0) target = $region5
    $region4: #{model_forward.1} parent=1 // pred_region
      _
    $region5: #{model_forward.1} parent=1 // pred_fallthru
      _
    // Predicated region
    $region6: #{model_forward.1} parent=1 // pred_check
      _
    $region7: #{model_forward.1} parent=1 // pred_check_branch
      %33 = sbr.rel (0) target = $region9
    $region8: #{model_forward.1} parent=1 // pred_region
      _
    $region9: #{model_forward.1} parent=1 // pred_fallthru
      _
    // Predicated region
    $region10: #{model_forward.1} parent=1 // pred_check
      _
    $region11: #{model_forward.1} parent=1 // pred_check_branch
      %35 = sbr.rel (0) target = $region13
    $region12: #{model_forward.1} parent=1 // pred_region
      _
    $region13: #{model_forward.1} parent=1 // pred_fallthru
      _
    // Predicated region
    $region14: #{model_forward.1} parent=1 // pred_check
      _
    $region15: #{model_forward.1} parent=1 // pred_check_branch
      %37 = sbr.rel (0) target = $region17
    $region16: #{model_forward.1} parent=1 // pred_region
      _
    $region17: #{model_forward.1} parent=1 // pred_fallthru
      _
    // Predicated region
    $region18: #{model_forward.1} parent=1 // pred_check
      _
    $region19: #{model_forward.1} parent=1 // pred_check_branch
      %39 = sbr.rel (0) target = $region21
    $region20: #{model_forward.1} parent=1 // pred_region
      _
    $region21: #{model_forward.1} parent=1 // pred_fallthru
      _
    // Predicated region
    $region22: #{model_forward.1} parent=1 // pred_check
      _
    $region23: #{model_forward.1} parent=1 // pred_check_branch
      %41 = sbr.rel (0) target = $region25
    $region24: #{model_forward.1} parent=1 // pred_region
      %s43 = ssub.s32 3584, 3584
      %44 = vsyncadd [#allocation4], %s43
      %s45 = sshll.u32 [#allocation3], 4
      %s46 = int_to_ptr.vmem [resolvable:$true] %s45
      %51 = dma.hbm_to_vmem [thread:$0]  %s5, 3584, %s46, [#allocation4], 512, 512, 32
    $region25: #{model_forward.1} parent=1 // pred_fallthru
      _
    // Predicated region
    $region26: #{model_forward.1} parent=1 // pred_check
      _
    $region27: #{model_forward.1} parent=1 // pred_check_branch
      %53 = sbr.rel (0) target = $region29
    $region28: #{model_forward.1} parent=1 // pred_region
      _
    $region29: #{model_forward.1} parent=1 // pred_fallthru
      _
    // Predicated region
    $region30: #{model_forward.1} parent=1 // pred_check
      _
    $region31: #{model_forward.1} parent=1 // pred_check_branch
      %55 = sbr.rel (0) target = $region33
    $region32: #{model_forward.1} parent=1 // pred_region
      %s57 = ssub.s32 8192, 8192
      %58 = vsyncadd [#allocation7], %s57
      %s59 = sshll.u32 [#allocation6], 4
      %s60 = int_to_ptr.vmem [resolvable:$true] %s59
      %65 = dma.hbm_to_vmem [thread:$0]  %s7, 8192, %s60, [#allocation7], 512, 512, 32
    $region33: #{model_forward.1} parent=1 // pred_fallthru
      _
    // Predicated region
    $region34: #{model_forward.1} parent=1 // pred_check
      _
    $region35: #{model_forward.1} parent=1 // pred_check_branch
      %67 = sbr.rel (0) target = $region37
    $region36: #{model_forward.1} parent=1 // pred_region
      _
    $region37: #{model_forward.1} parent=1 // pred_fallthru
      _
    // Predicated region
    $region38: #{model_forward.1} parent=1 // pred_check
      _
    $region39: #{model_forward.1} parent=1 // pred_check_branch
      %69 = sbr.rel (0) target = $region41
    $region40: #{model_forward.1} parent=1 // pred_region
      _
    $region41: #{model_forward.1} parent=1 // pred_fallthru
      _
    // Predicated region
    $region42: #{model_forward.1} parent=1 // pred_check
      _
    $region43: #{model_forward.1} parent=1 // pred_check_branch
      %71 = sbr.rel (0) target = $region45
    $region44: #{model_forward.1} parent=1 // pred_region
      _
    $region45: #{model_forward.1} parent=1 // pred_fallthru
      _
    // Predicated region
    $region46: #{model_forward.1} parent=1 // pred_check
      _
    $region47: #{model_forward.1} parent=1 // pred_check_branch
      %73 = sbr.rel (0) target = $region49
    $region48: #{model_forward.1} parent=1 // pred_region
      _
    $region49: #{model_forward.1} parent=1 // pred_fallthru
      _
    // Predicated region
    $region50: #{model_forward.1} parent=1 // pred_check
      _
    $region51: #{model_forward.1} parent=1 // pred_check_branch
      %75 = sbr.rel (0) target = $region53
    $region52: #{model_forward.1} parent=1 // pred_region
      %s77 = ssub.s32 1536, 1536
      %78 = vsyncadd [#allocation7], %s77
      %s79 = sshll.u32 [#allocation8], 4
      %s80 = int_to_ptr.vmem [resolvable:$true] %s79
      %85 = dma.hbm_to_vmem [thread:$0]  %s12, 1536, %s80, [#allocation7], 256, 256, 16
    $region53: #{model_forward.1} parent=1 // pred_fallthru
      _
    // Predicated region
    $region54: #{model_forward.1} parent=1 // pred_check
      _
    $region55: #{model_forward.1} parent=1 // pred_check_branch
      %87 = sbr.rel (0) target = $region57
    $region56: #{model_forward.1} parent=1 // pred_region
      _
    $region57: #{model_forward.1} parent=1 // pred_fallthru
      _
    // Predicated region
    $region58: #{model_forward.1} parent=1 // pred_check
      _
    $region59: #{model_forward.1} parent=1 // pred_check_branch
      %89 = sbr.rel (0) target = $region61
    $region60: #{model_forward.1} parent=1 // pred_region
      %s91 = ssub.s32 8192, 8192
      %92 = vsyncadd [#allocation10], %s91
      %s93 = sshll.u32 [#allocation9], 4
      %s94 = int_to_ptr.vmem [resolvable:$true] %s93
      %99 = dma.hbm_to_vmem [thread:$0]  %s14, 8192, %s94, [#allocation10], 512, 512, 32
    $region61: #{model_forward.1} parent=1 // pred_fallthru
      _
    // Predicated region
    $region62: #{model_forward.1} parent=1 // pred_check
      _
    $region63: #{model_forward.1} parent=1 // pred_check_branch
      %101 = sbr.rel (0) target = $region65
    $region64: #{model_forward.1} parent=1 // pred_region
      %s103 = ssub.s32 6656, 6656
      %104 = vsyncadd [#allocation10], %s103
      %s105 = sshll.u32 [#allocation11], 4
      %s106 = int_to_ptr.vmem [resolvable:$true] %s105
      %111 = dma.hbm_to_vmem [thread:$0]  %s15, 6656, %s106, [#allocation10], 512, 512, 32
    $region65: #{model_forward.1} parent=1 // pred_fallthru
      _
    // Predicated region
    $region66: #{model_forward.1} parent=1 // pred_check
      _
    $region67: #{model_forward.1} parent=1 // pred_check_branch
      %113 = sbr.rel (0) target = $region69
    $region68: #{model_forward.1} parent=1 // pred_region
      _
    $region69: #{model_forward.1} parent=1 // pred_fallthru
      _
    // Predicated region
    $region70: #{model_forward.1} parent=1 // pred_check
      _
    $region71: #{model_forward.1} parent=1 // pred_check_branch
      %115 = sbr.rel (0) target = $region73
    $region72: #{model_forward.1} parent=1 // pred_region
      _
    $region73: #{model_forward.1} parent=1 // pred_fallthru
      _
    // Predicated region
    $region74: #{model_forward.1} parent=1 // pred_check
      _
    $region75: #{model_forward.1} parent=1 // pred_check_branch
      %117 = sbr.rel (0) target = $region77
    $region76: #{model_forward.1} parent=1 // pred_region
      _
    $region77: #{model_forward.1} parent=1 // pred_fallthru
      _
    // Predicated region
    $region78: #{model_forward.1} parent=1 // pred_check
      _
    $region79: #{model_forward.1} parent=1 // pred_check_branch
      %119 = sbr.rel (0) target = $region81
    $region80: #{model_forward.1} parent=1 // pred_region
      %120 = dma.done [#allocation4], 3584
    $region81: #{model_forward.1} parent=1 // pred_fallthru
      _
    // Predicated region
    $region82: #{model_forward.1} parent=1 // pred_check
      _
    $region83: #{model_forward.1} parent=1 // pred_check_branch
      %122 = sbr.rel (0) target = $region85
    $region84: #{model_forward.1} parent=1 // pred_region
      %123 = dma.done [#allocation7], 8192
    $region85: #{model_forward.1} parent=1 // pred_fallthru
      _
    // Predicated region
    $region86: #{model_forward.1} parent=1 // pred_check
      _
    $region87: #{model_forward.1} parent=1 // pred_check_branch
      %125 = sbr.rel (0) target = $region89
    $region88: #{model_forward.1} parent=1 // pred_region
      %126 = dma.done [#allocation7], 1536
    $region89: #{model_forward.1} parent=1 // pred_fallthru
      _
    // Predicated region
    $region90: #{model_forward.1} parent=1 // pred_check
      _
    $region91: #{model_forward.1} parent=1 // pred_check_branch
      %128 = sbr.rel (0) target = $region93
    $region92: #{model_forward.1} parent=1 // pred_region
      %129 = dma.done [#allocation10], 8192
    $region93: #{model_forward.1} parent=1 // pred_fallthru
      _
    // Predicated region
    $region94: #{model_forward.1} parent=1 // pred_check
      _
    $region95: #{model_forward.1} parent=1 // pred_check_branch
      %131 = sbr.rel (0) target = $region97
    $region96: #{model_forward.1} parent=1 // pred_region
      %132 = dma.done [#allocation10], 6656
    $region97: #{model_forward.1} parent=1 // pred_fallthru
      _
    %v133 = vld [vmem:[%s0] sm:$0xff]
    %v134 = vld [vmem:[%s0 + $0x8] sm:$0xff]
    %v135 = vlaneseq
    %v136 = vand.u32 %v135, 127
    %137 = vset.pattern.permute.xlu0 0
    %138 = vperm.xlu0 %137, %v133
    %v139 = vpop.permute.xlu0 %138
    %140 = vset.pattern.permute.xlu0 0
    %141 = vperm.xlu0 %140, %v134
    %v142 = vpop.permute.xlu0 %141
    %vm143 = vcmp.eq.s32.totalorder %v136, %v139
    %vm144 = vcmp.eq.s32.totalorder %v136, %v142
    %v145 = vsel %vm143, 1.0, 0.0
    %v146 = vsel %vm144, 1.0, 0.0
    %v147 = vld [vmem:[#allocation3] sm:$0xff]
    %v148 = vld [vmem:[#allocation3 + $0x8] sm:$0xff]
    %v149 = vld [vmem:[#allocation3 + $0x10] sm:$0xff]
    %v150 = vld [vmem:[#allocation3 + $0x18] sm:$0xff]
    %v151 = vld [vmem:[#allocation3 + $0x20] sm:$0xff]
    %v152 = vld [vmem:[#allocation3 + $0x28] sm:$0xff]
    %v153 = vld [vmem:[#allocation3 + $0x30] sm:$0xff]
    %v154 = vld [vmem:[#allocation3 + $0x38] sm:$0xff]
    %v155 = vld [vmem:[#allocation3 + $0x40] sm:$0xff]
    %v156 = vld [vmem:[#allocation3 + $0x48] sm:$0xff]
    %v157 = vld [vmem:[#allocation3 + $0x50] sm:$0xff]
    %v158 = vld [vmem:[#allocation3 + $0x58] sm:$0xff]
    %v159 = vld [vmem:[#allocation3 + $0x60] sm:$0xff]
    %v160 = vld [vmem:[#allocation3 + $0x68] sm:$0xff]
    %v161 = vld [vmem:[#allocation3 + $0x70] sm:$0xff]
    %v162 = vld [vmem:[#allocation3 + $0x78] sm:$0xff]
    %v163 = vld [vmem:[#allocation3 + $0x80] sm:$0xff]
    %v164 = vld [vmem:[#allocation3 + $0x88] sm:$0xff]
    %v165 = vld [vmem:[#allocation3 + $0x90] sm:$0xff]
    %v166 = vld [vmem:[#allocation3 + $0x98] sm:$0xff]
    %v167 = vld [vmem:[#allocation3 + $0xa0] sm:$0xff]
    %v168 = vld [vmem:[#allocation3 + $0xa8] sm:$0xff]
    %v169 = vld [vmem:[#allocation3 + $0xb0] sm:$0xff]
    %v170 = vld [vmem:[#allocation3 + $0xb8] sm:$0xff]
    %v171 = vld [vmem:[#allocation3 + $0xc0] sm:$0x3]
    %v172 = vld [vmem:[#allocation3 + $0xc8] sm:$0x3]
    %v173 = vld [vmem:[#allocation3 + $0xd0] sm:$0x3]
    %v174 = vld [vmem:[#allocation3 + $0xd8] sm:$0x3]
    %vm175 = vcmask 408576
    %v177 = vsel %vm175, %v145, 0
    %v180 = vsel %vm175, %v146, 0
    %vm182 = vcmask 1041408
    %v184 = vsel %vm182, %v171, 0
    %v187 = vsel %vm182, %v172, 0
    %v190 = vsel %vm182, %v173, 0
    %v193 = vsel %vm182, %v174, 0
    %195 = vmatprep.subr.mxu0 0.0
    %196 = vmatpush1.msra.mxu0 0.0
    %197 = vmatprep.subr.mxu0 0.0
    %198 = vmatpush1.msra.mxu0 0.0
    %199 = vmatprep.subr.mxu0 0.0
    %200 = vmatpush1.msra.mxu0 0.0
    %201 = vmatprep.subr.mxu0 0.0
    %202 = vmatpush1.msra.mxu0 0.0
    %203 = vmatprep.subr.mxu0 0.0
    %204 = vmatpush1.msra.mxu0 0.0
    %205 = vmatprep.subr.mxu0 0.0
    %206 = vmatpush1.msra.mxu0 0.0
    %207 = vmatprep.subr.mxu0 0.0
    %208 = vmatpush1.msra.mxu0 0.0
    %209 = vmatprep.subr.mxu0 0.0
    %210 = vmatpush1.msra.mxu0 0.0
    %211 = vmatprep.subr.mxu0 0.0
    %212 = vmatpush1.msra.mxu0 0.0
    %213 = vmatprep.subr.mxu0 %v187
    %214 = vmatpush1.msra.mxu0 %v184
    %215 = vmatprep.subr.mxu0 %v168
    %216 = vmatpush1.msra.mxu0 %v167
    %217 = vmatprep.subr.mxu0 %v164
    %218 = vmatpush1.msra.mxu0 %v163
    %219 = vmatprep.subr.mxu0 %v160
    %220 = vmatpush1.msra.mxu0 %v159
    %221 = vmatprep.subr.mxu0 %v156
    %222 = vmatpush1.msra.mxu0 %v155
    %223 = vmatprep.subr.mxu0 %v152
    %224 = vmatpush1.msra.mxu0 %v151
    %225 = vmatprep.subr.mxu0 %v148
    %226 = vmatpush1.msra.mxu0 %v147
    %227 = vmatprep.subr.mxu0 0.0
    %228 = vmatpush2.msra.mxu0 0.0
    %229 = vmatprep.subr.mxu0 0.0
    %230 = vmatpush2.msra.mxu0 0.0
    %231 = vmatprep.subr.mxu0 0.0
    %232 = vmatpush2.msra.mxu0 0.0
    %233 = vmatprep.subr.mxu0 0.0
    %234 = vmatpush2.msra.mxu0 0.0
    %235 = vmatprep.subr.mxu0 0.0
    %236 = vmatpush2.msra.mxu0 0.0
    %237 = vmatprep.subr.mxu0 0.0
    %238 = vmatpush2.msra.mxu0 0.0
    %239 = vmatprep.subr.mxu0 0.0
    %240 = vmatpush2.msra.mxu0 0.0
    %241 = vmatprep.subr.mxu0 0.0
    %242 = vmatpush2.msra.mxu0 0.0
    %243 = vmatprep.subr.mxu0 0.0
    %244 = vmatpush2.msra.mxu0 0.0
    %245 = vmatprep.subr.mxu0 0.0
    %246 = vmatpush2.msra.mxu0 0.0
    %247 = vmatprep.subr.mxu0 0.0
    %248 = vmatpush2.msra.mxu0 0.0
    %249 = vmatprep.subr.mxu0 0.0
    %250 = vmatpush2.msra.mxu0 0.0
    %251 = vmatprep.subr.mxu0 0.0
    %252 = vmatpush2.msra.mxu0 0.0
    %253 = vmatprep.subr.mxu0 0.0
    %254 = vmatpush2.msra.mxu0 0.0
    %255 = vmatprep.subr.mxu0 0.0
    %256 = vmatpush2.msra.mxu0 0.0
    %257 = vmatprep.subr.mxu0 0.0
    %258 = vmatpush2.msra.mxu0 0.0
    %259 = vmatprep.mubr.f32.mxu0 0.0
    %260 = vmatmul.mubr.f32.gmra.mxu0 %v177
    %v261 = vpop.f32.mrf.mxu0
    %v262 = vadd.f32 0.0, %v261
    %v263 = vpop.f32.mrf.mxu0
    %v264 = vadd.f32 0.0, %v263
    %265 = vmatprep.mubr.f32.mxu0 0.0
    %266 = vmatmul.mubr.f32.gmra.mxu0 %v180
    %v267 = vpop.f32.mrf.mxu0
    %v268 = vadd.f32 0.0, %v267
    %v269 = vpop.f32.mrf.mxu0
    %v270 = vadd.f32 0.0, %v269
    %271 = vdwg.mxu0
    %272 = vmatprep.subr.mxu0 0.0
    %273 = vmatpush1.msra.mxu0 0.0
    %274 = vmatprep.subr.mxu0 0.0
    %275 = vmatpush1.msra.mxu0 0.0
    %276 = vmatprep.subr.mxu0 0.0
    %277 = vmatpush1.msra.mxu0 0.0
    %278 = vmatprep.subr.mxu0 0.0
    %279 = vmatpush1.msra.mxu0 0.0
    %280 = vmatprep.subr.mxu0 0.0
    %281 = vmatpush1.msra.mxu0 0.0
    %282 = vmatprep.subr.mxu0 0.0
    %283 = vmatpush1.msra.mxu0 0.0
    %284 = vmatprep.subr.mxu0 0.0
    %285 = vmatpush1.msra.mxu0 0.0
    %286 = vmatprep.subr.mxu0 0.0
    %287 = vmatpush1.msra.mxu0 0.0
    %288 = vmatprep.subr.mxu0 0.0
    %289 = vmatpush1.msra.mxu0 0.0
    %290 = vmatprep.subr.mxu0 %v193
    %291 = vmatpush1.msra.mxu0 %v190
    %292 = vmatprep.subr.mxu0 %v170
    %293 = vmatpush1.msra.mxu0 %v169
    %294 = vmatprep.subr.mxu0 %v166
    %295 = vmatpush1.msra.mxu0 %v165
    %296 = vmatprep.subr.mxu0 %v162
    %297 = vmatpush1.msra.mxu0 %v161
    %298 = vmatprep.subr.mxu0 %v158
    %299 = vmatpush1.msra.mxu0 %v157
    %300 = vmatprep.subr.mxu0 %v154
    %301 = vmatpush1.msra.mxu0 %v153
    %302 = vmatprep.subr.mxu0 %v150
    %303 = vmatpush1.msra.mxu0 %v149
    %304 = vmatprep.subr.mxu0 0.0
    %305 = vmatpush2.msra.mxu0 0.0
    %306 = vmatprep.subr.mxu0 0.0
    %307 = vmatpush2.msra.mxu0 0.0
    %308 = vmatprep.subr.mxu0 0.0
    %309 = vmatpush2.msra.mxu0 0.0
    %310 = vmatprep.subr.mxu0 0.0
    %311 = vmatpush2.msra.mxu0 0.0
    %312 = vmatprep.subr.mxu0 0.0
    %313 = vmatpush2.msra.mxu0 0.0
    %314 = vmatprep.subr.mxu0 0.0
    %315 = vmatpush2.msra.mxu0 0.0
    %316 = vmatprep.subr.mxu0 0.0
    %317 = vmatpush2.msra.mxu0 0.0
    %318 = vmatprep.subr.mxu0 0.0
    %319 = vmatpush2.msra.mxu0 0.0
    %320 = vmatprep.subr.mxu0 0.0
    %321 = vmatpush2.msra.mxu0 0.0
    %322 = vmatprep.subr.mxu0 0.0
    %323 = vmatpush2.msra.mxu0 0.0
    %324 = vmatprep.subr.mxu0 0.0
    %325 = vmatpush2.msra.mxu0 0.0
    %326 = vmatprep.subr.mxu0 0.0
    %327 = vmatpush2.msra.mxu0 0.0
    %328 = vmatprep.subr.mxu0 0.0
    %329 = vmatpush2.msra.mxu0 0.0
    %330 = vmatprep.subr.mxu0 0.0
    %331 = vmatpush2.msra.mxu0 0.0
    %332 = vmatprep.subr.mxu0 0.0
    %333 = vmatpush2.msra.mxu0 0.0
    %334 = vmatprep.subr.mxu0 0.0
    %335 = vmatpush2.msra.mxu0 0.0
    %336 = vmatprep.mubr.f32.mxu0 0.0
    %337 = vmatmul.mubr.f32.gmra.mxu0 %v177
    %v338 = vpop.f32.mrf.mxu0
    %v339 = vadd.f32 0.0, %v338
    %v340 = vpop.f32.mrf.mxu0
    %v341 = vadd.f32 0.0, %v340
    %342 = vmatprep.mubr.f32.mxu0 0.0
    %343 = vmatmul.mubr.f32.gmra.mxu0 %v180
    %v344 = vpop.f32.mrf.mxu0
    %v345 = vadd.f32 0.0, %v344
    %v346 = vpop.f32.mrf.mxu0
    %v347 = vadd.f32 0.0, %v346
    %348 = vdwg.mxu0
    %v349 = vld [vmem:[%s6] sm:$0xff]
    %v350 = vld [vmem:[%s6 + $0x8] sm:$0xff]
    %v351 = vld [vmem:[%s6 + $0x10] sm:$0xff]
    %v352 = vld [vmem:[%s6 + $0x18] sm:$0xff]
    %v353 = vld [vmem:[%s6 + $0x20] sm:$0xff]
    %v354 = vld [vmem:[%s6 + $0x28] sm:$0xff]
    %v355 = vld [vmem:[%s6 + $0x30] sm:$0xff]
    %v356 = vld [vmem:[%s6 + $0x38] sm:$0xff]
    %v357 = vld [vmem:[%s6 + $0x40] sm:$0xff]
    %v358 = vld [vmem:[%s6 + $0x48] sm:$0xff]
    %v359 = vld [vmem:[%s6 + $0x50] sm:$0xff]
    %v360 = vld [vmem:[%s6 + $0x58] sm:$0xff]
    %v361 = vld [vmem:[%s6 + $0x60] sm:$0xff]
    %v362 = vld [vmem:[%s6 + $0x68] sm:$0xff]
    %v363 = vld [vmem:[%s6 + $0x70] sm:$0xff]
    %v364 = vld [vmem:[%s6 + $0x78] sm:$0xff]
    %v365 = vld [vmem:[%s6 + $0x80] sm:$0xff]
    %v366 = vld [vmem:[%s6 + $0x88] sm:$0xff]
    %v367 = vld [vmem:[%s6 + $0x90] sm:$0xff]
    %v368 = vld [vmem:[%s6 + $0x98] sm:$0xff]
    %v369 = vld [vmem:[%s6 + $0xa0] sm:$0xff]
    %v370 = vld [vmem:[%s6 + $0xa8] sm:$0xff]
    %v371 = vld [vmem:[%s6 + $0xb0] sm:$0xff]
    %v372 = vld [vmem:[%s6 + $0xb8] sm:$0xff]
    %v373 = vld [vmem:[%s6 + $0xc0] sm:$0xff]
    %v374 = vld [vmem:[%s6 + $0xc8] sm:$0xff]
    %v375 = vld [vmem:[%s6 + $0xd0] sm:$0xff]
    %v376 = vld [vmem:[%s6 + $0xd8] sm:$0xff]
    %v377 = vld [vmem:[%s6 + $0xe0] sm:$0xff]
    %v378 = vld [vmem:[%s6 + $0xe8] sm:$0xff]
    %v379 = vld [vmem:[%s6 + $0xf0] sm:$0xff]
    %v380 = vld [vmem:[%s6 + $0xf8] sm:$0xff]
    %v381 = vld [vmem:[%s6 + $0x100] sm:$0xff]
    %v382 = vld [vmem:[%s6 + $0x108] sm:$0xff]
    %v383 = vld [vmem:[%s6 + $0x110] sm:$0xff]
    %v384 = vld [vmem:[%s6 + $0x118] sm:$0xff]
    %v385 = vld [vmem:[%s6 + $0x120] sm:$0xff]
    %v386 = vld [vmem:[%s6 + $0x128] sm:$0xff]
    %v387 = vld [vmem:[%s6 + $0x130] sm:$0xff]
    %v388 = vld [vmem:[%s6 + $0x138] sm:$0xff]
    %v389 = vld [vmem:[%s6 + $0x140] sm:$0xff]
    %v390 = vld [vmem:[%s6 + $0x148] sm:$0xff]
    %v391 = vld [vmem:[%s6 + $0x150] sm:$0xff]
    %v392 = vld [vmem:[%s6 + $0x158] sm:$0xff]
    %v393 = vld [vmem:[%s6 + $0x160] sm:$0xff]
    %v394 = vld [vmem:[%s6 + $0x168] sm:$0xff]
    %v395 = vld [vmem:[%s6 + $0x170] sm:$0xff]
    %v396 = vld [vmem:[%s6 + $0x178] sm:$0xff]
    %v397 = vld [vmem:[%s6 + $0x180] sm:$0xff]
    %v398 = vld [vmem:[%s6 + $0x188] sm:$0xff]
    %v399 = vld [vmem:[%s6 + $0x190] sm:$0xff]
    %v400 = vld [vmem:[%s6 + $0x198] sm:$0xff]
    %v401 = vld [vmem:[%s6 + $0x1a0] sm:$0xff]
    %v402 = vld [vmem:[%s6 + $0x1a8] sm:$0xff]
    %v403 = vld [vmem:[%s6 + $0x1b0] sm:$0xff]
    %v404 = vld [vmem:[%s6 + $0x1b8] sm:$0xff]
    %v405 = vld [vmem:[%s6 + $0x1c0] sm:$0xff]
    %v406 = vld [vmem:[%s6 + $0x1c8] sm:$0xff]
    %v407 = vld [vmem:[%s6 + $0x1d0] sm:$0xff]
    %v408 = vld [vmem:[%s6 + $0x1d8] sm:$0xff]
    %v409 = vld [vmem:[%s6 + $0x1e0] sm:$0xff]
    %v410 = vld [vmem:[%s6 + $0x1e8] sm:$0xff]
    %v411 = vld [vmem:[%s6 + $0x1f0] sm:$0xff]
    %v412 = vld [vmem:[%s6 + $0x1f8] sm:$0xff]
    %413 = vmatprep.subr.mxu0 %v410
    %414 = vmatpush1.msra.mxu0 %v409
    %415 = vmatprep.subr.mxu0 %v406
    %416 = vmatpush1.msra.mxu0 %v405
    %417 = vmatprep.subr.mxu0 %v402
    %418 = vmatpush1.msra.mxu0 %v401
    %419 = vmatprep.subr.mxu0 %v398
    %420 = vmatpush1.msra.mxu0 %v397
    %421 = vmatprep.subr.mxu0 %v394
    %422 = vmatpush1.msra.mxu0 %v393
    %423 = vmatprep.subr.mxu0 %v390
    %424 = vmatpush1.msra.mxu0 %v389
    %425 = vmatprep.subr.mxu0 %v386
    %426 = vmatpush1.msra.mxu0 %v385
    %427 = vmatprep.subr.mxu0 %v382
    %428 = vmatpush1.msra.mxu0 %v381
    %429 = vmatprep.subr.mxu0 %v378
    %430 = vmatpush1.msra.mxu0 %v377
    %431 = vmatprep.subr.mxu0 %v374
    %432 = vmatpush1.msra.mxu0 %v373
    %433 = vmatprep.subr.mxu0 %v370
    %434 = vmatpush1.msra.mxu0 %v369
    %435 = vmatprep.subr.mxu0 %v366
    %436 = vmatpush1.msra.mxu0 %v365
    %437 = vmatprep.subr.mxu0 %v362
    %438 = vmatpush1.msra.mxu0 %v361
    %439 = vmatprep.subr.mxu0 %v358
    %440 = vmatpush1.msra.mxu0 %v357
    %441 = vmatprep.subr.mxu0 %v354
    %442 = vmatpush1.msra.mxu0 %v353
    %443 = vmatprep.subr.mxu0 %v350
    %444 = vmatpush1.msra.mxu0 %v349
    %445 = vmatprep.subr.mxu0 0.0
    %446 = vmatpush2.msra.mxu0 0.0
    %447 = vmatprep.subr.mxu0 0.0
    %448 = vmatpush2.msra.mxu0 0.0
    %449 = vmatprep.subr.mxu0 0.0
    %450 = vmatpush2.msra.mxu0 0.0
    %451 = vmatprep.subr.mxu0 0.0
    %452 = vmatpush2.msra.mxu0 0.0
    %453 = vmatprep.subr.mxu0 0.0
    %454 = vmatpush2.msra.mxu0 0.0
    %455 = vmatprep.subr.mxu0 0.0
    %456 = vmatpush2.msra.mxu0 0.0
    %457 = vmatprep.subr.mxu0 0.0
    %458 = vmatpush2.msra.mxu0 0.0
    %459 = vmatprep.subr.mxu0 0.0
    %460 = vmatpush2.msra.mxu0 0.0
    %461 = vmatprep.subr.mxu0 0.0
    %462 = vmatpush2.msra.mxu0 0.0
    %463 = vmatprep.subr.mxu0 0.0
    %464 = vmatpush2.msra.mxu0 0.0
    %465 = vmatprep.subr.mxu0 0.0
    %466 = vmatpush2.msra.mxu0 0.0
    %467 = vmatprep.subr.mxu0 0.0
    %468 = vmatpush2.msra.mxu0 0.0
    %469 = vmatprep.subr.mxu0 0.0
    %470 = vmatpush2.msra.mxu0 0.0
    %471 = vmatprep.subr.mxu0 0.0
    %472 = vmatpush2.msra.mxu0 0.0
    %473 = vmatprep.subr.mxu0 0.0
    %474 = vmatpush2.msra.mxu0 0.0
    %475 = vmatprep.subr.mxu0 0.0
    %476 = vmatpush2.msra.mxu0 0.0
    %477 = vmatprep.mubr.f32.mxu0 0.0
    %478 = vmatmul.mubr.f32.gmra.mxu0 0.0
    %v479 = vpop.f32.mrf.mxu0
    %v480 = vadd.f32 0.0, %v479
    %v481 = vpop.f32.mrf.mxu0
    %v482 = vadd.f32 0.0, %v481
    %483 = vdwg.mxu0
    %484 = vmatprep.subr.mxu0 %v412
    %485 = vmatpush1.msra.mxu0 %v411
    %486 = vmatprep.subr.mxu0 %v408
    %487 = vmatpush1.msra.mxu0 %v407
    %488 = vmatprep.subr.mxu0 %v404
    %489 = vmatpush1.msra.mxu0 %v403
    %490 = vmatprep.subr.mxu0 %v400
    %491 = vmatpush1.msra.mxu0 %v399
    %492 = vmatprep.subr.mxu0 %v396
    %493 = vmatpush1.msra.mxu0 %v395
    %494 = vmatprep.subr.mxu0 %v392
    %495 = vmatpush1.msra.mxu0 %v391
    %496 = vmatprep.subr.mxu0 %v388
    %497 = vmatpush1.msra.mxu0 %v387
    %498 = vmatprep.subr.mxu0 %v384
    %499 = vmatpush1.msra.mxu0 %v383
    %500 = vmatprep.subr.mxu0 %v380
    %501 = vmatpush1.msra.mxu0 %v379
    %502 = vmatprep.subr.mxu0 %v376
    %503 = vmatpush1.msra.mxu0 %v375
    %504 = vmatprep.subr.mxu0 %v372
    %505 = vmatpush1.msra.mxu0 %v371
    %506 = vmatprep.subr.mxu0 %v368
    %507 = vmatpush1.msra.mxu0 %v367
    %508 = vmatprep.subr.mxu0 %v364
    %509 = vmatpush1.msra.mxu0 %v363
    %510 = vmatprep.subr.mxu0 %v360
    %511 = vmatpush1.msra.mxu0 %v359
    %512 = vmatprep.subr.mxu0 %v356
    %513 = vmatpush1.msra.mxu0 %v355
    %514 = vmatprep.subr.mxu0 %v352
    %515 = vmatpush1.msra.mxu0 %v351
    %516 = vmatprep.subr.mxu0 0.0
    %517 = vmatpush2.msra.mxu0 0.0
    %518 = vmatprep.subr.mxu0 0.0
    %519 = vmatpush2.msra.mxu0 0.0
    %520 = vmatprep.subr.mxu0 0.0
    %521 = vmatpush2.msra.mxu0 0.0
    %522 = vmatprep.subr.mxu0 0.0
    %523 = vmatpush2.msra.mxu0 0.0
    %524 = vmatprep.subr.mxu0 0.0
    %525 = vmatpush2.msra.mxu0 0.0
    %526 = vmatprep.subr.mxu0 0.0
    %527 = vmatpush2.msra.mxu0 0.0
    %528 = vmatprep.subr.mxu0 0.0
    %529 = vmatpush2.msra.mxu0 0.0
    %530 = vmatprep.subr.mxu0 0.0
    %531 = vmatpush2.msra.mxu0 0.0
    %532 = vmatprep.subr.mxu0 0.0
    %533 = vmatpush2.msra.mxu0 0.0
    %534 = vmatprep.subr.mxu0 0.0
    %535 = vmatpush2.msra.mxu0 0.0
    %536 = vmatprep.subr.mxu0 0.0
    %537 = vmatpush2.msra.mxu0 0.0
    %538 = vmatprep.subr.mxu0 0.0
    %539 = vmatpush2.msra.mxu0 0.0
    %540 = vmatprep.subr.mxu0 0.0
    %541 = vmatpush2.msra.mxu0 0.0
    %542 = vmatprep.subr.mxu0 0.0
    %543 = vmatpush2.msra.mxu0 0.0
    %544 = vmatprep.subr.mxu0 0.0
    %545 = vmatpush2.msra.mxu0 0.0
    %546 = vmatprep.subr.mxu0 0.0
    %547 = vmatpush2.msra.mxu0 0.0
    %548 = vmatprep.mubr.f32.mxu0 0.0
    %549 = vmatmul.mubr.f32.gmra.mxu0 0.0
    %v550 = vpop.f32.mrf.mxu0
    %v551 = vadd.f32 0.0, %v550
    %v552 = vpop.f32.mrf.mxu0
    %v553 = vadd.f32 0.0, %v552
    %554 = vdwg.mxu0
    %v559 = vrot.slane %v480, 2
    %v560 = vrot.slane %v482, 2
    %v561 = vrot.slane %v551, 2
    %v562 = vrot.slane %v553, 2
    %v567 = vadd.f32 %v268, %v559
    %v568 = vadd.f32 %v270, %v560
    %v569 = vadd.f32 %v345, %v561
    %v570 = vadd.f32 %v347, %v562
    %v571 = vxor.u32 %v567, 2147483648
    %v572 = vxor.u32 %v568, 2147483648
    %v573 = vxor.u32 %v569, 2147483648
    %v574 = vmul.f32 %v571, 1.442695
    %v575 = vpow.pop %v574
    %v576 = vmul.f32 %v572, 1.442695
    %v577 = vpow.pop %v576
    %v578 = vmul.f32 %v573, 1.442695
    %v579 = vpow.pop %v578
    %v580 = vadd.f32 %v575, 1.0
    %v581 = vadd.f32 %v577, 1.0
    %v582 = vadd.f32 %v579, 1.0
    %v583 = vrcp.pop %v580
    %v584 = vmul.f32 1.0, %v583
    %v585 = vrcp.pop %v581
    %v586 = vmul.f32 1.0, %v585
    %v587 = vrcp.pop %v582
    %v588 = vmul.f32 1.0, %v587
    %v589 = vtanh.pop %v570
    %v590 = vmul.f32 %v586, 0.0
    %v591 = vmul.f32 %v584, %v589
    %v592 = vadd.f32 %v590, %v591
    %v593 = vtanh.pop %v592
    %v594 = vmul.f32 %v588, %v593
    %v596 = vrot.slane %v594, 6
    %598 = vmatprep.subr.mxu0 %v410
    %599 = vmatpush1.msra.mxu0 %v409
    %600 = vmatprep.subr.mxu0 %v406
    %601 = vmatpush1.msra.mxu0 %v405
    %602 = vmatprep.subr.mxu0 %v402
    %603 = vmatpush1.msra.mxu0 %v401
    %604 = vmatprep.subr.mxu0 %v398
    %605 = vmatpush1.msra.mxu0 %v397
    %606 = vmatprep.subr.mxu0 %v394
    %607 = vmatpush1.msra.mxu0 %v393
    %608 = vmatprep.subr.mxu0 %v390
    %609 = vmatpush1.msra.mxu0 %v389
    %610 = vmatprep.subr.mxu0 %v386
    %611 = vmatpush1.msra.mxu0 %v385
    %612 = vmatprep.subr.mxu0 %v382
    %613 = vmatpush1.msra.mxu0 %v381
    %614 = vmatprep.subr.mxu0 %v378
    %615 = vmatpush1.msra.mxu0 %v377
    %616 = vmatprep.subr.mxu0 %v374
    %617 = vmatpush1.msra.mxu0 %v373
    %618 = vmatprep.subr.mxu0 %v370
    %619 = vmatpush1.msra.mxu0 %v369
    %620 = vmatprep.subr.mxu0 %v366
    %621 = vmatpush1.msra.mxu0 %v365
    %622 = vmatprep.subr.mxu0 %v362
    %623 = vmatpush1.msra.mxu0 %v361
    %624 = vmatprep.subr.mxu0 %v358
    %625 = vmatpush1.msra.mxu0 %v357
    %626 = vmatprep.subr.mxu0 %v354
    %627 = vmatpush1.msra.mxu0 %v353
    %628 = vmatprep.subr.mxu0 %v350
    %629 = vmatpush1.msra.mxu0 %v349
    %630 = vmatprep.subr.mxu0 0.0
    %631 = vmatpush2.msra.mxu0 0.0
    %632 = vmatprep.subr.mxu0 0.0
    %633 = vmatpush2.msra.mxu0 0.0
    %634 = vmatprep.subr.mxu0 0.0
    %635 = vmatpush2.msra.mxu0 0.0
    %636 = vmatprep.subr.mxu0 0.0
    %637 = vmatpush2.msra.mxu0 0.0
    %638 = vmatprep.subr.mxu0 0.0
    %639 = vmatpush2.msra.mxu0 0.0
    %640 = vmatprep.subr.mxu0 0.0
    %641 = vmatpush2.msra.mxu0 0.0
    %642 = vmatprep.subr.mxu0 0.0
    %643 = vmatpush2.msra.mxu0 0.0
    %644 = vmatprep.subr.mxu0 0.0
    %645 = vmatpush2.msra.mxu0 0.0
    %646 = vmatprep.subr.mxu0 0.0
    %647 = vmatpush2.msra.mxu0 0.0
    %648 = vmatprep.subr.mxu0 0.0
    %649 = vmatpush2.msra.mxu0 0.0
    %650 = vmatprep.subr.mxu0 0.0
    %651 = vmatpush2.msra.mxu0 0.0
    %652 = vmatprep.subr.mxu0 0.0
    %653 = vmatpush2.msra.mxu0 0.0
    %654 = vmatprep.subr.mxu0 0.0
    %655 = vmatpush2.msra.mxu0 0.0
    %656 = vmatprep.subr.mxu0 0.0
    %657 = vmatpush2.msra.mxu0 0.0
    %658 = vmatprep.subr.mxu0 0.0
    %659 = vmatpush2.msra.mxu0 0.0
    %660 = vmatprep.subr.mxu0 0.0
    %661 = vmatpush2.msra.mxu0 0.0
    %662 = vmatprep.mubr.f32.mxu0 0.0
    %663 = vmatmul.mubr.f32.gmra.mxu0 %v596
    %v664 = vpop.f32.mrf.mxu0
    %v665 = vadd.f32 0.0, %v664
    %v666 = vpop.f32.mrf.mxu0
    %v667 = vadd.f32 0.0, %v666
    %668 = vdwg.mxu0
    %669 = vmatprep.subr.mxu0 %v412
    %670 = vmatpush1.msra.mxu0 %v411
    %671 = vmatprep.subr.mxu0 %v408
    %672 = vmatpush1.msra.mxu0 %v407
    %673 = vmatprep.subr.mxu0 %v404
    %674 = vmatpush1.msra.mxu0 %v403
    %675 = vmatprep.subr.mxu0 %v400
    %676 = vmatpush1.msra.mxu0 %v399
    %677 = vmatprep.subr.mxu0 %v396
    %678 = vmatpush1.msra.mxu0 %v395
    %679 = vmatprep.subr.mxu0 %v392
    %680 = vmatpush1.msra.mxu0 %v391
    %681 = vmatprep.subr.mxu0 %v388
    %682 = vmatpush1.msra.mxu0 %v387
    %683 = vmatprep.subr.mxu0 %v384
    %684 = vmatpush1.msra.mxu0 %v383
    %685 = vmatprep.subr.mxu0 %v380
    %686 = vmatpush1.msra.mxu0 %v379
    %687 = vmatprep.subr.mxu0 %v376
    %688 = vmatpush1.msra.mxu0 %v375
    %689 = vmatprep.subr.mxu0 %v372
    %690 = vmatpush1.msra.mxu0 %v371
    %691 = vmatprep.subr.mxu0 %v368
    %692 = vmatpush1.msra.mxu0 %v367
    %693 = vmatprep.subr.mxu0 %v364
    %694 = vmatpush1.msra.mxu0 %v363
    %695 = vmatprep.subr.mxu0 %v360
    %696 = vmatpush1.msra.mxu0 %v359
    %697 = vmatprep.subr.mxu0 %v356
    %698 = vmatpush1.msra.mxu0 %v355
    %699 = vmatprep.subr.mxu0 %v352
    %700 = vmatpush1.msra.mxu0 %v351
    %701 = vmatprep.subr.mxu0 0.0
    %702 = vmatpush2.msra.mxu0 0.0
    %703 = vmatprep.subr.mxu0 0.0
    %704 = vmatpush2.msra.mxu0 0.0
    %705 = vmatprep.subr.mxu0 0.0
    %706 = vmatpush2.msra.mxu0 0.0
    %707 = vmatprep.subr.mxu0 0.0
    %708 = vmatpush2.msra.mxu0 0.0
    %709 = vmatprep.subr.mxu0 0.0
    %710 = vmatpush2.msra.mxu0 0.0
    %711 = vmatprep.subr.mxu0 0.0
    %712 = vmatpush2.msra.mxu0 0.0
    %713 = vmatprep.subr.mxu0 0.0
    %714 = vmatpush2.msra.mxu0 0.0
    %715 = vmatprep.subr.mxu0 0.0
    %716 = vmatpush2.msra.mxu0 0.0
    %717 = vmatprep.subr.mxu0 0.0
    %718 = vmatpush2.msra.mxu0 0.0
    %719 = vmatprep.subr.mxu0 0.0
    %720 = vmatpush2.msra.mxu0 0.0
    %721 = vmatprep.subr.mxu0 0.0
    %722 = vmatpush2.msra.mxu0 0.0
    %723 = vmatprep.subr.mxu0 0.0
    %724 = vmatpush2.msra.mxu0 0.0
    %725 = vmatprep.subr.mxu0 0.0
    %726 = vmatpush2.msra.mxu0 0.0
    %727 = vmatprep.subr.mxu0 0.0
    %728 = vmatpush2.msra.mxu0 0.0
    %729 = vmatprep.subr.mxu0 0.0
    %730 = vmatpush2.msra.mxu0 0.0
    %731 = vmatprep.subr.mxu0 0.0
    %732 = vmatpush2.msra.mxu0 0.0
    %733 = vmatprep.mubr.f32.mxu0 0.0
    %734 = vmatmul.mubr.f32.gmra.mxu0 %v596
    %v735 = vpop.f32.mrf.mxu0
    %v736 = vadd.f32 0.0, %v735
    %v737 = vpop.f32.mrf.mxu0
    %v738 = vadd.f32 0.0, %v737
    %739 = vdwg.mxu0
    %v744 = vrot.slane %v665, 4
    %v745 = vrot.slane %v667, 4
    %v746 = vrot.slane %v736, 4
    %v747 = vrot.slane %v738, 4
    %v752 = vadd.f32 %v268, %v744
    %v753 = vadd.f32 %v270, %v745
    %v754 = vadd.f32 %v345, %v746
    %v755 = vadd.f32 %v347, %v747
    %v756 = vxor.u32 %v752, 2147483648
    %v757 = vxor.u32 %v753, 2147483648
    %v758 = vxor.u32 %v754, 2147483648
    %v759 = vmul.f32 %v756, 1.442695
    %v760 = vpow.pop %v759
    %v761 = vmul.f32 %v757, 1.442695
    %v762 = vpow.pop %v761
    %v763 = vmul.f32 %v758, 1.442695
    %v764 = vpow.pop %v763
    %v765 = vadd.f32 %v760, 1.0
    %v766 = vadd.f32 %v762, 1.0
    %v767 = vadd.f32 %v764, 1.0
    %v768 = vrcp.pop %v765
    %v769 = vmul.f32 1.0, %v768
    %v770 = vrcp.pop %v766
    %v771 = vmul.f32 1.0, %v770
    %v772 = vrcp.pop %v767
    %v773 = vmul.f32 1.0, %v772
    %v774 = vtanh.pop %v755
    %v776 = vrot.slane %v592, 2
    %v778 = vmul.f32 %v771, %v776
    %v779 = vmul.f32 %v769, %v774
    %v780 = vadd.f32 %v778, %v779
    %v781 = vtanh.pop %v780
    %v782 = vmul.f32 %v773, %v781
    %v784 = vrot.slane %v782, 4
    %786 = vmatprep.subr.mxu0 %v410
    %787 = vmatpush1.msra.mxu0 %v409
    %788 = vmatprep.subr.mxu0 %v406
    %789 = vmatpush1.msra.mxu0 %v405
    %790 = vmatprep.subr.mxu0 %v402
    %791 = vmatpush1.msra.mxu0 %v401
    %792 = vmatprep.subr.mxu0 %v398
    %793 = vmatpush1.msra.mxu0 %v397
    %794 = vmatprep.subr.mxu0 %v394
    %795 = vmatpush1.msra.mxu0 %v393
    %796 = vmatprep.subr.mxu0 %v390
    %797 = vmatpush1.msra.mxu0 %v389
    %798 = vmatprep.subr.mxu0 %v386
    %799 = vmatpush1.msra.mxu0 %v385
    %800 = vmatprep.subr.mxu0 %v382
    %801 = vmatpush1.msra.mxu0 %v381
    %802 = vmatprep.subr.mxu0 %v378
    %803 = vmatpush1.msra.mxu0 %v377
    %804 = vmatprep.subr.mxu0 %v374
    %805 = vmatpush1.msra.mxu0 %v373
    %806 = vmatprep.subr.mxu0 %v370
    %807 = vmatpush1.msra.mxu0 %v369
    %808 = vmatprep.subr.mxu0 %v366
    %809 = vmatpush1.msra.mxu0 %v365
    %810 = vmatprep.subr.mxu0 %v362
    %811 = vmatpush1.msra.mxu0 %v361
    %812 = vmatprep.subr.mxu0 %v358
    %813 = vmatpush1.msra.mxu0 %v357
    %814 = vmatprep.subr.mxu0 %v354
    %815 = vmatpush1.msra.mxu0 %v353
    %816 = vmatprep.subr.mxu0 %v350
    %817 = vmatpush1.msra.mxu0 %v349
    %818 = vmatprep.subr.mxu0 0.0
    %819 = vmatpush2.msra.mxu0 0.0
    %820 = vmatprep.subr.mxu0 0.0
    %821 = vmatpush2.msra.mxu0 0.0
    %822 = vmatprep.subr.mxu0 0.0
    %823 = vmatpush2.msra.mxu0 0.0
    %824 = vmatprep.subr.mxu0 0.0
    %825 = vmatpush2.msra.mxu0 0.0
    %826 = vmatprep.subr.mxu0 0.0
    %827 = vmatpush2.msra.mxu0 0.0
    %828 = vmatprep.subr.mxu0 0.0
    %829 = vmatpush2.msra.mxu0 0.0
    %830 = vmatprep.subr.mxu0 0.0
    %831 = vmatpush2.msra.mxu0 0.0
    %832 = vmatprep.subr.mxu0 0.0
    %833 = vmatpush2.msra.mxu0 0.0
    %834 = vmatprep.subr.mxu0 0.0
    %835 = vmatpush2.msra.mxu0 0.0
    %836 = vmatprep.subr.mxu0 0.0
    %837 = vmatpush2.msra.mxu0 0.0
    %838 = vmatprep.subr.mxu0 0.0
    %839 = vmatpush2.msra.mxu0 0.0
    %840 = vmatprep.subr.mxu0 0.0
    %841 = vmatpush2.msra.mxu0 0.0
    %842 = vmatprep.subr.mxu0 0.0
    %843 = vmatpush2.msra.mxu0 0.0
    %844 = vmatprep.subr.mxu0 0.0
    %845 = vmatpush2.msra.mxu0 0.0
    %846 = vmatprep.subr.mxu0 0.0
    %847 = vmatpush2.msra.mxu0 0.0
    %848 = vmatprep.subr.mxu0 0.0
    %849 = vmatpush2.msra.mxu0 0.0
    %850 = vmatprep.mubr.f32.mxu0 0.0
    %851 = vmatmul.mubr.f32.gmra.mxu0 %v784
    %v852 = vpop.f32.mrf.mxu0
    %v853 = vadd.f32 0.0, %v852
    %v854 = vpop.f32.mrf.mxu0
    %v855 = vadd.f32 0.0, %v854
    %856 = vdwg.mxu0
    %857 = vmatprep.subr.mxu0 %v412
    %858 = vmatpush1.msra.mxu0 %v411
    %859 = vmatprep.subr.mxu0 %v408
    %860 = vmatpush1.msra.mxu0 %v407
    %861 = vmatprep.subr.mxu0 %v404
    %862 = vmatpush1.msra.mxu0 %v403
    %863 = vmatprep.subr.mxu0 %v400
    %864 = vmatpush1.msra.mxu0 %v399
    %865 = vmatprep.subr.mxu0 %v396
    %866 = vmatpush1.msra.mxu0 %v395
    %867 = vmatprep.subr.mxu0 %v392
    %868 = vmatpush1.msra.mxu0 %v391
    %869 = vmatprep.subr.mxu0 %v388
    %870 = vmatpush1.msra.mxu0 %v387
    %871 = vmatprep.subr.mxu0 %v384
    %872 = vmatpush1.msra.mxu0 %v383
    %873 = vmatprep.subr.mxu0 %v380
    %874 = vmatpush1.msra.mxu0 %v379
    %875 = vmatprep.subr.mxu0 %v376
    %876 = vmatpush1.msra.mxu0 %v375
    %877 = vmatprep.subr.mxu0 %v372
    %878 = vmatpush1.msra.mxu0 %v371
    %879 = vmatprep.subr.mxu0 %v368
    %880 = vmatpush1.msra.mxu0 %v367
    %881 = vmatprep.subr.mxu0 %v364
    %882 = vmatpush1.msra.mxu0 %v363
    %883 = vmatprep.subr.mxu0 %v360
    %884 = vmatpush1.msra.mxu0 %v359
    %885 = vmatprep.subr.mxu0 %v356
    %886 = vmatpush1.msra.mxu0 %v355
    %887 = vmatprep.subr.mxu0 %v352
    %888 = vmatpush1.msra.mxu0 %v351
    %889 = vmatprep.subr.mxu0 0.0
    %890 = vmatpush2.msra.mxu0 0.0
    %891 = vmatprep.subr.mxu0 0.0
    %892 = vmatpush2.msra.mxu0 0.0
    %893 = vmatprep.subr.mxu0 0.0
    %894 = vmatpush2.msra.mxu0 0.0
    %895 = vmatprep.subr.mxu0 0.0
    %896 = vmatpush2.msra.mxu0 0.0
    %897 = vmatprep.subr.mxu0 0.0
    %898 = vmatpush2.msra.mxu0 0.0
    %899 = vmatprep.subr.mxu0 0.0
    %900 = vmatpush2.msra.mxu0 0.0
    %901 = vmatprep.subr.mxu0 0.0
    %902 = vmatpush2.msra.mxu0 0.0
    %903 = vmatprep.subr.mxu0 0.0
    %904 = vmatpush2.msra.mxu0 0.0
    %905 = vmatprep.subr.mxu0 0.0
    %906 = vmatpush2.msra.mxu0 0.0
    %907 = vmatprep.subr.mxu0 0.0
    %908 = vmatpush2.msra.mxu0 0.0
    %909 = vmatprep.subr.mxu0 0.0
    %910 = vmatpush2.msra.mxu0 0.0
    %911 = vmatprep.subr.mxu0 0.0
    %912 = vmatpush2.msra.mxu0 0.0
    %913 = vmatprep.subr.mxu0 0.0
    %914 = vmatpush2.msra.mxu0 0.0
    %915 = vmatprep.subr.mxu0 0.0
    %916 = vmatpush2.msra.mxu0 0.0
    %917 = vmatprep.subr.mxu0 0.0
    %918 = vmatpush2.msra.mxu0 0.0
    %919 = vmatprep.subr.mxu0 0.0
    %920 = vmatpush2.msra.mxu0 0.0
    %921 = vmatprep.mubr.f32.mxu0 0.0
    %922 = vmatmul.mubr.f32.gmra.mxu0 %v784
    %v923 = vpop.f32.mrf.mxu0
    %v924 = vadd.f32 0.0, %v923
    %v925 = vpop.f32.mrf.mxu0
    %v926 = vadd.f32 0.0, %v925
    %927 = vdwg.mxu0
    %v932 = vrot.slane %v853, 6
    %v933 = vrot.slane %v855, 6
    %v934 = vrot.slane %v924, 6
    %v935 = vrot.slane %v926, 6
    %v940 = vadd.f32 %v268, %v932
    %v941 = vadd.f32 %v270, %v933
    %v942 = vadd.f32 %v345, %v934
    %v943 = vadd.f32 %v347, %v935
    %v944 = vxor.u32 %v940, 2147483648
    %v945 = vxor.u32 %v941, 2147483648
    %v946 = vxor.u32 %v942, 2147483648
    %v947 = vmul.f32 %v944, 1.442695
    %v948 = vpow.pop %v947
    %v949 = vmul.f32 %v945, 1.442695
    %v950 = vpow.pop %v949
    %v951 = vmul.f32 %v946, 1.442695
    %v952 = vpow.pop %v951
    %v953 = vadd.f32 %v948, 1.0
    %v954 = vadd.f32 %v950, 1.0
    %v955 = vadd.f32 %v952, 1.0
    %v956 = vrcp.pop %v953
    %v957 = vmul.f32 1.0, %v956
    %v958 = vrcp.pop %v954
    %v959 = vmul.f32 1.0, %v958
    %v960 = vrcp.pop %v955
    %v961 = vmul.f32 1.0, %v960
    %v962 = vtanh.pop %v943
    %v964 = vrot.slane %v780, 2
    %v966 = vmul.f32 %v959, %v964
    %v967 = vmul.f32 %v957, %v962
    %v968 = vadd.f32 %v966, %v967
    %v969 = vtanh.pop %v968
    %v970 = vmul.f32 %v961, %v969
    %v972 = vrot.slane %v970, 2
    %974 = vmatprep.subr.mxu0 %v410
    %975 = vmatpush1.msra.mxu0 %v409
    %976 = vmatprep.subr.mxu0 %v406
    %977 = vmatpush1.msra.mxu0 %v405
    %978 = vmatprep.subr.mxu0 %v402
    %979 = vmatpush1.msra.mxu0 %v401
    %980 = vmatprep.subr.mxu0 %v398
    %981 = vmatpush1.msra.mxu0 %v397
    %982 = vmatprep.subr.mxu0 %v394
    %983 = vmatpush1.msra.mxu0 %v393
    %984 = vmatprep.subr.mxu0 %v390
    %985 = vmatpush1.msra.mxu0 %v389
    %986 = vmatprep.subr.mxu0 %v386
    %987 = vmatpush1.msra.mxu0 %v385
    %988 = vmatprep.subr.mxu0 %v382
    %989 = vmatpush1.msra.mxu0 %v381
    %990 = vmatprep.subr.mxu0 %v378
    %991 = vmatpush1.msra.mxu0 %v377
    %992 = vmatprep.subr.mxu0 %v374
    %993 = vmatpush1.msra.mxu0 %v373
    %994 = vmatprep.subr.mxu0 %v370
    %995 = vmatpush1.msra.mxu0 %v369
    %996 = vmatprep.subr.mxu0 %v366
    %997 = vmatpush1.msra.mxu0 %v365
    %998 = vmatprep.subr.mxu0 %v362
    %999 = vmatpush1.msra.mxu0 %v361
    %1000 = vmatprep.subr.mxu0 %v358
    %1001 = vmatpush1.msra.mxu0 %v357
    %1002 = vmatprep.subr.mxu0 %v354
    %1003 = vmatpush1.msra.mxu0 %v353
    %1004 = vmatprep.subr.mxu0 %v350
    %1005 = vmatpush1.msra.mxu0 %v349
    %1006 = vmatprep.subr.mxu0 0.0
    %1007 = vmatpush2.msra.mxu0 0.0
    %1008 = vmatprep.subr.mxu0 0.0
    %1009 = vmatpush2.msra.mxu0 0.0
    %1010 = vmatprep.subr.mxu0 0.0
    %1011 = vmatpush2.msra.mxu0 0.0
    %1012 = vmatprep.subr.mxu0 0.0
    %1013 = vmatpush2.msra.mxu0 0.0
    %1014 = vmatprep.subr.mxu0 0.0
    %1015 = vmatpush2.msra.mxu0 0.0
    %1016 = vmatprep.subr.mxu0 0.0
    %1017 = vmatpush2.msra.mxu0 0.0
    %1018 = vmatprep.subr.mxu0 0.0
    %1019 = vmatpush2.msra.mxu0 0.0
    %1020 = vmatprep.subr.mxu0 0.0
    %1021 = vmatpush2.msra.mxu0 0.0
    %1022 = vmatprep.subr.mxu0 0.0
    %1023 = vmatpush2.msra.mxu0 0.0
    %1024 = vmatprep.subr.mxu0 0.0
    %1025 = vmatpush2.msra.mxu0 0.0
    %1026 = vmatprep.subr.mxu0 0.0
    %1027 = vmatpush2.msra.mxu0 0.0
    %1028 = vmatprep.subr.mxu0 0.0
    %1029 = vmatpush2.msra.mxu0 0.0
    %1030 = vmatprep.subr.mxu0 0.0
    %1031 = vmatpush2.msra.mxu0 0.0
    %1032 = vmatprep.subr.mxu0 0.0
    %1033 = vmatpush2.msra.mxu0 0.0
    %1034 = vmatprep.subr.mxu0 0.0
    %1035 = vmatpush2.msra.mxu0 0.0
    %1036 = vmatprep.subr.mxu0 0.0
    %1037 = vmatpush2.msra.mxu0 0.0
    %1038 = vmatprep.mubr.f32.mxu0 0.0
    %1039 = vmatmul.mubr.f32.gmra.mxu0 %v972
    %v1040 = vpop.f32.mrf.mxu0
    %v1041 = vadd.f32 0.0, %v1040
    %v1042 = vpop.f32.mrf.mxu0
    %v1043 = vadd.f32 0.0, %v1042
    %1044 = vdwg.mxu0
    %1045 = vmatprep.subr.mxu0 %v412
    %1046 = vmatpush1.msra.mxu0 %v411
    %1047 = vmatprep.subr.mxu0 %v408
    %1048 = vmatpush1.msra.mxu0 %v407
    %1049 = vmatprep.subr.mxu0 %v404
    %1050 = vmatpush1.msra.mxu0 %v403
    %1051 = vmatprep.subr.mxu0 %v400
    %1052 = vmatpush1.msra.mxu0 %v399
    %1053 = vmatprep.subr.mxu0 %v396
    %1054 = vmatpush1.msra.mxu0 %v395
    %1055 = vmatprep.subr.mxu0 %v392
    %1056 = vmatpush1.msra.mxu0 %v391
    %1057 = vmatprep.subr.mxu0 %v388
    %1058 = vmatpush1.msra.mxu0 %v387
    %1059 = vmatprep.subr.mxu0 %v384
    %1060 = vmatpush1.msra.mxu0 %v383
    %1061 = vmatprep.subr.mxu0 %v380
    %1062 = vmatpush1.msra.mxu0 %v379
    %1063 = vmatprep.subr.mxu0 %v376
    %1064 = vmatpush1.msra.mxu0 %v375
    %1065 = vmatprep.subr.mxu0 %v372
    %1066 = vmatpush1.msra.mxu0 %v371
    %1067 = vmatprep.subr.mxu0 %v368
    %1068 = vmatpush1.msra.mxu0 %v367
    %1069 = vmatprep.subr.mxu0 %v364
    %1070 = vmatpush1.msra.mxu0 %v363
    %1071 = vmatprep.subr.mxu0 %v360
    %1072 = vmatpush1.msra.mxu0 %v359
    %1073 = vmatprep.subr.mxu0 %v356
    %1074 = vmatpush1.msra.mxu0 %v355
    %1075 = vmatprep.subr.mxu0 %v352
    %1076 = vmatpush1.msra.mxu0 %v351
    %1077 = vmatprep.subr.mxu0 0.0
    %1078 = vmatpush2.msra.mxu0 0.0
    %1079 = vmatprep.subr.mxu0 0.0
    %1080 = vmatpush2.msra.mxu0 0.0
    %1081 = vmatprep.subr.mxu0 0.0
    %1082 = vmatpush2.msra.mxu0 0.0
    %1083 = vmatprep.subr.mxu0 0.0
    %1084 = vmatpush2.msra.mxu0 0.0
    %1085 = vmatprep.subr.mxu0 0.0
    %1086 = vmatpush2.msra.mxu0 0.0
    %1087 = vmatprep.subr.mxu0 0.0
    %1088 = vmatpush2.msra.mxu0 0.0
    %1089 = vmatprep.subr.mxu0 0.0
    %1090 = vmatpush2.msra.mxu0 0.0
    %1091 = vmatprep.subr.mxu0 0.0
    %1092 = vmatpush2.msra.mxu0 0.0
    %1093 = vmatprep.subr.mxu0 0.0
    %1094 = vmatpush2.msra.mxu0 0.0
    %1095 = vmatprep.subr.mxu0 0.0
    %1096 = vmatpush2.msra.mxu0 0.0
    %1097 = vmatprep.subr.mxu0 0.0
    %1098 = vmatpush2.msra.mxu0 0.0
    %1099 = vmatprep.subr.mxu0 0.0
    %1100 = vmatpush2.msra.mxu0 0.0
    %1101 = vmatprep.subr.mxu0 0.0
    %1102 = vmatpush2.msra.mxu0 0.0
    %1103 = vmatprep.subr.mxu0 0.0
    %1104 = vmatpush2.msra.mxu0 0.0
    %1105 = vmatprep.subr.mxu0 0.0
    %1106 = vmatpush2.msra.mxu0 0.0
    %1107 = vmatprep.subr.mxu0 0.0
    %1108 = vmatpush2.msra.mxu0 0.0
    %1109 = vmatprep.mubr.f32.mxu0 0.0
    %1110 = vmatmul.mubr.f32.gmra.mxu0 %v972
    %v1111 = vpop.f32.mrf.mxu0
    %v1112 = vadd.f32 0.0, %v1111
    %v1113 = vpop.f32.mrf.mxu0
    %v1114 = vadd.f32 0.0, %v1113
    %1115 = vdwg.mxu0
    %v1116 = vadd.f32 %v268, %v1041
    %v1117 = vadd.f32 %v270, %v1043
    %v1118 = vadd.f32 %v345, %v1112
    %v1119 = vadd.f32 %v347, %v1114
    %v1120 = vxor.u32 %v1116, 2147483648
    %v1121 = vxor.u32 %v1117, 2147483648
    %v1122 = vxor.u32 %v1118, 2147483648
    %v1123 = vmul.f32 %v1120, 1.442695
    %v1124 = vpow.pop %v1123
    %v1125 = vmul.f32 %v1121, 1.442695
    %v1126 = vpow.pop %v1125
    %v1127 = vmul.f32 %v1122, 1.442695
    %v1128 = vpow.pop %v1127
    %v1129 = vadd.f32 %v1124, 1.0
    %v1130 = vadd.f32 %v1126, 1.0
    %v1131 = vadd.f32 %v1128, 1.0
    %v1132 = vrcp.pop %v1129
    %v1133 = vmul.f32 1.0, %v1132
    %v1134 = vrcp.pop %v1130
    %v1135 = vmul.f32 1.0, %v1134
    %v1136 = vrcp.pop %v1131
    %v1137 = vmul.f32 1.0, %v1136
    %v1138 = vtanh.pop %v1119
    %v1140 = vrot.slane %v968, 2
    %v1142 = vmul.f32 %v1135, %v1140
    %v1143 = vmul.f32 %v1133, %v1138
    %v1144 = vadd.f32 %v1142, %v1143
    %v1145 = vtanh.pop %v1144
    %v1146 = vmul.f32 %v1137, %v1145
    %1147 = vmatprep.subr.mxu0 %v410
    %1148 = vmatpush1.msra.mxu0 %v409
    %1149 = vmatprep.subr.mxu0 %v406
    %1150 = vmatpush1.msra.mxu0 %v405
    %1151 = vmatprep.subr.mxu0 %v402
    %1152 = vmatpush1.msra.mxu0 %v401
    %1153 = vmatprep.subr.mxu0 %v398
    %1154 = vmatpush1.msra.mxu0 %v397
    %1155 = vmatprep.subr.mxu0 %v394
    %1156 = vmatpush1.msra.mxu0 %v393
    %1157 = vmatprep.subr.mxu0 %v390
    %1158 = vmatpush1.msra.mxu0 %v389
    %1159 = vmatprep.subr.mxu0 %v386
    %1160 = vmatpush1.msra.mxu0 %v385
    %1161 = vmatprep.subr.mxu0 %v382
    %1162 = vmatpush1.msra.mxu0 %v381
    %1163 = vmatprep.subr.mxu0 %v378
    %1164 = vmatpush1.msra.mxu0 %v377
    %1165 = vmatprep.subr.mxu0 %v374
    %1166 = vmatpush1.msra.mxu0 %v373
    %1167 = vmatprep.subr.mxu0 %v370
    %1168 = vmatpush1.msra.mxu0 %v369
    %1169 = vmatprep.subr.mxu0 %v366
    %1170 = vmatpush1.msra.mxu0 %v365
    %1171 = vmatprep.subr.mxu0 %v362
    %1172 = vmatpush1.msra.mxu0 %v361
    %1173 = vmatprep.subr.mxu0 %v358
    %1174 = vmatpush1.msra.mxu0 %v357
    %1175 = vmatprep.subr.mxu0 %v354
    %1176 = vmatpush1.msra.mxu0 %v353
    %1177 = vmatprep.subr.mxu0 %v350
    %1178 = vmatpush1.msra.mxu0 %v349
    %1179 = vmatprep.subr.mxu0 0.0
    %1180 = vmatpush2.msra.mxu0 0.0
    %1181 = vmatprep.subr.mxu0 0.0
    %1182 = vmatpush2.msra.mxu0 0.0
    %1183 = vmatprep.subr.mxu0 0.0
    %1184 = vmatpush2.msra.mxu0 0.0
    %1185 = vmatprep.subr.mxu0 0.0
    %1186 = vmatpush2.msra.mxu0 0.0
    %1187 = vmatprep.subr.mxu0 0.0
    %1188 = vmatpush2.msra.mxu0 0.0
    %1189 = vmatprep.subr.mxu0 0.0
    %1190 = vmatpush2.msra.mxu0 0.0
    %1191 = vmatprep.subr.mxu0 0.0
    %1192 = vmatpush2.msra.mxu0 0.0
    %1193 = vmatprep.subr.mxu0 0.0
    %1194 = vmatpush2.msra.mxu0 0.0
    %1195 = vmatprep.subr.mxu0 0.0
    %1196 = vmatpush2.msra.mxu0 0.0
    %1197 = vmatprep.subr.mxu0 0.0
    %1198 = vmatpush2.msra.mxu0 0.0
    %1199 = vmatprep.subr.mxu0 0.0
    %1200 = vmatpush2.msra.mxu0 0.0
    %1201 = vmatprep.subr.mxu0 0.0
    %1202 = vmatpush2.msra.mxu0 0.0
    %1203 = vmatprep.subr.mxu0 0.0
    %1204 = vmatpush2.msra.mxu0 0.0
    %1205 = vmatprep.subr.mxu0 0.0
    %1206 = vmatpush2.msra.mxu0 0.0
    %1207 = vmatprep.subr.mxu0 0.0
    %1208 = vmatpush2.msra.mxu0 0.0
    %1209 = vmatprep.subr.mxu0 0.0
    %1210 = vmatpush2.msra.mxu0 0.0
    %1211 = vmatprep.mubr.f32.mxu0 0.0
    %1212 = vmatmul.mubr.f32.gmra.mxu0 %v1146
    %v1213 = vpop.f32.mrf.mxu0
    %v1214 = vadd.f32 0.0, %v1213
    %v1215 = vpop.f32.mrf.mxu0
    %v1216 = vadd.f32 0.0, %v1215
    %1217 = vdwg.mxu0
    %1218 = vmatprep.subr.mxu0 %v412
    %1219 = vmatpush1.msra.mxu0 %v411
    %1220 = vmatprep.subr.mxu0 %v408
    %1221 = vmatpush1.msra.mxu0 %v407
    %1222 = vmatprep.subr.mxu0 %v404
    %1223 = vmatpush1.msra.mxu0 %v403
    %1224 = vmatprep.subr.mxu0 %v400
    %1225 = vmatpush1.msra.mxu0 %v399
    %1226 = vmatprep.subr.mxu0 %v396
    %1227 = vmatpush1.msra.mxu0 %v395
    %1228 = vmatprep.subr.mxu0 %v392
    %1229 = vmatpush1.msra.mxu0 %v391
    %1230 = vmatprep.subr.mxu0 %v388
    %1231 = vmatpush1.msra.mxu0 %v387
    %1232 = vmatprep.subr.mxu0 %v384
    %1233 = vmatpush1.msra.mxu0 %v383
    %1234 = vmatprep.subr.mxu0 %v380
    %1235 = vmatpush1.msra.mxu0 %v379
    %1236 = vmatprep.subr.mxu0 %v376
    %1237 = vmatpush1.msra.mxu0 %v375
    %1238 = vmatprep.subr.mxu0 %v372
    %1239 = vmatpush1.msra.mxu0 %v371
    %1240 = vmatprep.subr.mxu0 %v368
    %1241 = vmatpush1.msra.mxu0 %v367
    %1242 = vmatprep.subr.mxu0 %v364
    %1243 = vmatpush1.msra.mxu0 %v363
    %1244 = vmatprep.subr.mxu0 %v360
    %1245 = vmatpush1.msra.mxu0 %v359
    %1246 = vmatprep.subr.mxu0 %v356
    %1247 = vmatpush1.msra.mxu0 %v355
    %1248 = vmatprep.subr.mxu0 %v352
    %1249 = vmatpush1.msra.mxu0 %v351
    %1250 = vmatprep.subr.mxu0 0.0
    %1251 = vmatpush2.msra.mxu0 0.0
    %1252 = vmatprep.subr.mxu0 0.0
    %1253 = vmatpush2.msra.mxu0 0.0
    %1254 = vmatprep.subr.mxu0 0.0
    %1255 = vmatpush2.msra.mxu0 0.0
    %1256 = vmatprep.subr.mxu0 0.0
    %1257 = vmatpush2.msra.mxu0 0.0
    %1258 = vmatprep.subr.mxu0 0.0
    %1259 = vmatpush2.msra.mxu0 0.0
    %1260 = vmatprep.subr.mxu0 0.0
    %1261 = vmatpush2.msra.mxu0 0.0
    %1262 = vmatprep.subr.mxu0 0.0
    %1263 = vmatpush2.msra.mxu0 0.0
    %1264 = vmatprep.subr.mxu0 0.0
    %1265 = vmatpush2.msra.mxu0 0.0
    %1266 = vmatprep.subr.mxu0 0.0
    %1267 = vmatpush2.msra.mxu0 0.0
    %1268 = vmatprep.subr.mxu0 0.0
    %1269 = vmatpush2.msra.mxu0 0.0
    %1270 = vmatprep.subr.mxu0 0.0
    %1271 = vmatpush2.msra.mxu0 0.0
    %1272 = vmatprep.subr.mxu0 0.0
    %1273 = vmatpush2.msra.mxu0 0.0
    %1274 = vmatprep.subr.mxu0 0.0
    %1275 = vmatpush2.msra.mxu0 0.0
    %1276 = vmatprep.subr.mxu0 0.0
    %1277 = vmatpush2.msra.mxu0 0.0
    %1278 = vmatprep.subr.mxu0 0.0
    %1279 = vmatpush2.msra.mxu0 0.0
    %1280 = vmatprep.subr.mxu0 0.0
    %1281 = vmatpush2.msra.mxu0 0.0
    %1282 = vmatprep.mubr.f32.mxu0 0.0
    %1283 = vmatmul.mubr.f32.gmra.mxu0 %v1146
    %v1284 = vpop.f32.mrf.mxu0
    %v1285 = vadd.f32 0.0, %v1284
    %v1286 = vpop.f32.mrf.mxu0
    %v1287 = vadd.f32 0.0, %v1286
    %1288 = vdwg.mxu0
    %v1293 = vrot.slane %v1214, 2
    %v1294 = vrot.slane %v1216, 2
    %v1295 = vrot.slane %v1285, 2
    %v1296 = vrot.slane %v1287, 2
    %v1301 = vadd.f32 %v262, %v1293
    %v1302 = vadd.f32 %v264, %v1294
    %v1303 = vadd.f32 %v339, %v1295
    %v1304 = vadd.f32 %v341, %v1296
    %v1305 = vxor.u32 %v1301, 2147483648
    %v1306 = vxor.u32 %v1302, 2147483648
    %v1307 = vxor.u32 %v1303, 2147483648
    %v1308 = vmul.f32 %v1305, 1.442695
    %v1309 = vpow.pop %v1308
    %v1310 = vmul.f32 %v1306, 1.442695
    %v1311 = vpow.pop %v1310
    %v1312 = vmul.f32 %v1307, 1.442695
    %v1313 = vpow.pop %v1312
    %v1314 = vadd.f32 %v1309, 1.0
    %v1315 = vadd.f32 %v1311, 1.0
    %v1316 = vadd.f32 %v1313, 1.0
    %v1317 = vrcp.pop %v1314
    %v1318 = vmul.f32 1.0, %v1317
    %v1319 = vrcp.pop %v1315
    %v1320 = vmul.f32 1.0, %v1319
    %v1321 = vrcp.pop %v1316
    %v1322 = vmul.f32 1.0, %v1321
    %v1323 = vtanh.pop %v1304
    %v1325 = vrot.slane %v1144, 2
    %v1327 = vmul.f32 %v1320, %v1325
    %v1328 = vmul.f32 %v1318, %v1323
    %v1329 = vadd.f32 %v1327, %v1328
    %v1330 = vtanh.pop %v1329
    %v1331 = vmul.f32 %v1322, %v1330
    %v1333 = vrot.slane %v1331, 6
    %1335 = vmatprep.subr.mxu0 %v410
    %1336 = vmatpush1.msra.mxu0 %v409
    %1337 = vmatprep.subr.mxu0 %v406
    %1338 = vmatpush1.msra.mxu0 %v405
    %1339 = vmatprep.subr.mxu0 %v402
    %1340 = vmatpush1.msra.mxu0 %v401
    %1341 = vmatprep.subr.mxu0 %v398
    %1342 = vmatpush1.msra.mxu0 %v397
    %1343 = vmatprep.subr.mxu0 %v394
    %1344 = vmatpush1.msra.mxu0 %v393
    %1345 = vmatprep.subr.mxu0 %v390
    %1346 = vmatpush1.msra.mxu0 %v389
    %1347 = vmatprep.subr.mxu0 %v386
    %1348 = vmatpush1.msra.mxu0 %v385
    %1349 = vmatprep.subr.mxu0 %v382
    %1350 = vmatpush1.msra.mxu0 %v381
    %1351 = vmatprep.subr.mxu0 %v378
    %1352 = vmatpush1.msra.mxu0 %v377
    %1353 = vmatprep.subr.mxu0 %v374
    %1354 = vmatpush1.msra.mxu0 %v373
    %1355 = vmatprep.subr.mxu0 %v370
    %1356 = vmatpush1.msra.mxu0 %v369
    %1357 = vmatprep.subr.mxu0 %v366
    %1358 = vmatpush1.msra.mxu0 %v365
    %1359 = vmatprep.subr.mxu0 %v362
    %1360 = vmatpush1.msra.mxu0 %v361
    %1361 = vmatprep.subr.mxu0 %v358
    %1362 = vmatpush1.msra.mxu0 %v357
    %1363 = vmatprep.subr.mxu0 %v354
    %1364 = vmatpush1.msra.mxu0 %v353
    %1365 = vmatprep.subr.mxu0 %v350
    %1366 = vmatpush1.msra.mxu0 %v349
    %1367 = vmatprep.subr.mxu0 0.0
    %1368 = vmatpush2.msra.mxu0 0.0
    %1369 = vmatprep.subr.mxu0 0.0
    %1370 = vmatpush2.msra.mxu0 0.0
    %1371 = vmatprep.subr.mxu0 0.0
    %1372 = vmatpush2.msra.mxu0 0.0
    %1373 = vmatprep.subr.mxu0 0.0
    %1374 = vmatpush2.msra.mxu0 0.0
    %1375 = vmatprep.subr.mxu0 0.0
    %1376 = vmatpush2.msra.mxu0 0.0
    %1377 = vmatprep.subr.mxu0 0.0
    %1378 = vmatpush2.msra.mxu0 0.0
    %1379 = vmatprep.subr.mxu0 0.0
    %1380 = vmatpush2.msra.mxu0 0.0
    %1381 = vmatprep.subr.mxu0 0.0
    %1382 = vmatpush2.msra.mxu0 0.0
    %1383 = vmatprep.subr.mxu0 0.0
    %1384 = vmatpush2.msra.mxu0 0.0
    %1385 = vmatprep.subr.mxu0 0.0
    %1386 = vmatpush2.msra.mxu0 0.0
    %1387 = vmatprep.subr.mxu0 0.0
    %1388 = vmatpush2.msra.mxu0 0.0
    %1389 = vmatprep.subr.mxu0 0.0
    %1390 = vmatpush2.msra.mxu0 0.0
    %1391 = vmatprep.subr.mxu0 0.0
    %1392 = vmatpush2.msra.mxu0 0.0
    %1393 = vmatprep.subr.mxu0 0.0
    %1394 = vmatpush2.msra.mxu0 0.0
    %1395 = vmatprep.subr.mxu0 0.0
    %1396 = vmatpush2.msra.mxu0 0.0
    %1397 = vmatprep.subr.mxu0 0.0
    %1398 = vmatpush2.msra.mxu0 0.0
    %1399 = vmatprep.mubr.f32.mxu0 0.0
    %1400 = vmatmul.mubr.f32.gmra.mxu0 %v1333
    %v1401 = vpop.f32.mrf.mxu0
    %v1402 = vadd.f32 0.0, %v1401
    %v1403 = vpop.f32.mrf.mxu0
    %v1404 = vadd.f32 0.0, %v1403
    %1405 = vdwg.mxu0
    %1406 = vmatprep.subr.mxu0 %v412
    %1407 = vmatpush1.msra.mxu0 %v411
    %1408 = vmatprep.subr.mxu0 %v408
    %1409 = vmatpush1.msra.mxu0 %v407
    %1410 = vmatprep.subr.mxu0 %v404
    %1411 = vmatpush1.msra.mxu0 %v403
    %1412 = vmatprep.subr.mxu0 %v400
    %1413 = vmatpush1.msra.mxu0 %v399
    %1414 = vmatprep.subr.mxu0 %v396
    %1415 = vmatpush1.msra.mxu0 %v395
    %1416 = vmatprep.subr.mxu0 %v392
    %1417 = vmatpush1.msra.mxu0 %v391
    %1418 = vmatprep.subr.mxu0 %v388
    %1419 = vmatpush1.msra.mxu0 %v387
    %1420 = vmatprep.subr.mxu0 %v384
    %1421 = vmatpush1.msra.mxu0 %v383
    %1422 = vmatprep.subr.mxu0 %v380
    %1423 = vmatpush1.msra.mxu0 %v379
    %1424 = vmatprep.subr.mxu0 %v376
    %1425 = vmatpush1.msra.mxu0 %v375
    %1426 = vmatprep.subr.mxu0 %v372
    %1427 = vmatpush1.msra.mxu0 %v371
    %1428 = vmatprep.subr.mxu0 %v368
    %1429 = vmatpush1.msra.mxu0 %v367
    %1430 = vmatprep.subr.mxu0 %v364
    %1431 = vmatpush1.msra.mxu0 %v363
    %1432 = vmatprep.subr.mxu0 %v360
    %1433 = vmatpush1.msra.mxu0 %v359
    %1434 = vmatprep.subr.mxu0 %v356
    %1435 = vmatpush1.msra.mxu0 %v355
    %1436 = vmatprep.subr.mxu0 %v352
    %1437 = vmatpush1.msra.mxu0 %v351
    %1438 = vmatprep.subr.mxu0 0.0
    %1439 = vmatpush2.msra.mxu0 0.0
    %1440 = vmatprep.subr.mxu0 0.0
    %1441 = vmatpush2.msra.mxu0 0.0
    %1442 = vmatprep.subr.mxu0 0.0
    %1443 = vmatpush2.msra.mxu0 0.0
    %1444 = vmatprep.subr.mxu0 0.0
    %1445 = vmatpush2.msra.mxu0 0.0
    %1446 = vmatprep.subr.mxu0 0.0
    %1447 = vmatpush2.msra.mxu0 0.0
    %1448 = vmatprep.subr.mxu0 0.0
    %1449 = vmatpush2.msra.mxu0 0.0
    %1450 = vmatprep.subr.mxu0 0.0
    %1451 = vmatpush2.msra.mxu0 0.0
    %1452 = vmatprep.subr.mxu0 0.0
    %1453 = vmatpush2.msra.mxu0 0.0
    %1454 = vmatprep.subr.mxu0 0.0
    %1455 = vmatpush2.msra.mxu0 0.0
    %1456 = vmatprep.subr.mxu0 0.0
    %1457 = vmatpush2.msra.mxu0 0.0
    %1458 = vmatprep.subr.mxu0 0.0
    %1459 = vmatpush2.msra.mxu0 0.0
    %1460 = vmatprep.subr.mxu0 0.0
    %1461 = vmatpush2.msra.mxu0 0.0
    %1462 = vmatprep.subr.mxu0 0.0
    %1463 = vmatpush2.msra.mxu0 0.0
    %1464 = vmatprep.subr.mxu0 0.0
    %1465 = vmatpush2.msra.mxu0 0.0
    %1466 = vmatprep.subr.mxu0 0.0
    %1467 = vmatpush2.msra.mxu0 0.0
    %1468 = vmatprep.subr.mxu0 0.0
    %1469 = vmatpush2.msra.mxu0 0.0
    %1470 = vmatprep.mubr.f32.mxu0 0.0
    %1471 = vmatmul.mubr.f32.gmra.mxu0 %v1333
    %v1472 = vpop.f32.mrf.mxu0
    %v1473 = vadd.f32 0.0, %v1472
    %v1474 = vpop.f32.mrf.mxu0
    %v1475 = vadd.f32 0.0, %v1474
    %1476 = vdwg.mxu0
    %v1481 = vrot.slane %v1402, 4
    %v1482 = vrot.slane %v1404, 4
    %v1483 = vrot.slane %v1473, 4
    %v1484 = vrot.slane %v1475, 4
    %v1489 = vadd.f32 %v262, %v1481
    %v1490 = vadd.f32 %v264, %v1482
    %v1491 = vadd.f32 %v339, %v1483
    %v1492 = vadd.f32 %v341, %v1484
    %v1493 = vxor.u32 %v1489, 2147483648
    %v1494 = vxor.u32 %v1490, 2147483648
    %v1495 = vxor.u32 %v1491, 2147483648
    %v1496 = vmul.f32 %v1493, 1.442695
    %v1497 = vpow.pop %v1496
    %v1498 = vmul.f32 %v1494, 1.442695
    %v1499 = vpow.pop %v1498
    %v1500 = vmul.f32 %v1495, 1.442695
    %v1501 = vpow.pop %v1500
    %v1502 = vadd.f32 %v1497, 1.0
    %v1503 = vadd.f32 %v1499, 1.0
    %v1504 = vadd.f32 %v1501, 1.0
    %v1505 = vrcp.pop %v1502
    %v1506 = vmul.f32 1.0, %v1505
    %v1507 = vrcp.pop %v1503
    %v1508 = vmul.f32 1.0, %v1507
    %v1509 = vrcp.pop %v1504
    %v1510 = vmul.f32 1.0, %v1509
    %v1511 = vtanh.pop %v1492
    %v1513 = vrot.slane %v1329, 2
    %v1515 = vmul.f32 %v1508, %v1513
    %v1516 = vmul.f32 %v1506, %v1511
    %v1517 = vadd.f32 %v1515, %v1516
    %v1518 = vtanh.pop %v1517
    %v1519 = vmul.f32 %v1510, %v1518
    %v1521 = vrot.slane %v1519, 4
    %1523 = vmatprep.subr.mxu0 %v410
    %1524 = vmatpush1.msra.mxu0 %v409
    %1525 = vmatprep.subr.mxu0 %v406
    %1526 = vmatpush1.msra.mxu0 %v405
    %1527 = vmatprep.subr.mxu0 %v402
    %1528 = vmatpush1.msra.mxu0 %v401
    %1529 = vmatprep.subr.mxu0 %v398
    %1530 = vmatpush1.msra.mxu0 %v397
    %1531 = vmatprep.subr.mxu0 %v394
    %1532 = vmatpush1.msra.mxu0 %v393
    %1533 = vmatprep.subr.mxu0 %v390
    %1534 = vmatpush1.msra.mxu0 %v389
    %1535 = vmatprep.subr.mxu0 %v386
    %1536 = vmatpush1.msra.mxu0 %v385
    %1537 = vmatprep.subr.mxu0 %v382
    %1538 = vmatpush1.msra.mxu0 %v381
    %1539 = vmatprep.subr.mxu0 %v378
    %1540 = vmatpush1.msra.mxu0 %v377
    %1541 = vmatprep.subr.mxu0 %v374
    %1542 = vmatpush1.msra.mxu0 %v373
    %1543 = vmatprep.subr.mxu0 %v370
    %1544 = vmatpush1.msra.mxu0 %v369
    %1545 = vmatprep.subr.mxu0 %v366
    %1546 = vmatpush1.msra.mxu0 %v365
    %1547 = vmatprep.subr.mxu0 %v362
    %1548 = vmatpush1.msra.mxu0 %v361
    %1549 = vmatprep.subr.mxu0 %v358
    %1550 = vmatpush1.msra.mxu0 %v357
    %1551 = vmatprep.subr.mxu0 %v354
    %1552 = vmatpush1.msra.mxu0 %v353
    %1553 = vmatprep.subr.mxu0 %v350
    %1554 = vmatpush1.msra.mxu0 %v349
    %1555 = vmatprep.subr.mxu0 0.0
    %1556 = vmatpush2.msra.mxu0 0.0
    %1557 = vmatprep.subr.mxu0 0.0
    %1558 = vmatpush2.msra.mxu0 0.0
    %1559 = vmatprep.subr.mxu0 0.0
    %1560 = vmatpush2.msra.mxu0 0.0
    %1561 = vmatprep.subr.mxu0 0.0
    %1562 = vmatpush2.msra.mxu0 0.0
    %1563 = vmatprep.subr.mxu0 0.0
    %1564 = vmatpush2.msra.mxu0 0.0
    %1565 = vmatprep.subr.mxu0 0.0
    %1566 = vmatpush2.msra.mxu0 0.0
    %1567 = vmatprep.subr.mxu0 0.0
    %1568 = vmatpush2.msra.mxu0 0.0
    %1569 = vmatprep.subr.mxu0 0.0
    %1570 = vmatpush2.msra.mxu0 0.0
    %1571 = vmatprep.subr.mxu0 0.0
    %1572 = vmatpush2.msra.mxu0 0.0
    %1573 = vmatprep.subr.mxu0 0.0
    %1574 = vmatpush2.msra.mxu0 0.0
    %1575 = vmatprep.subr.mxu0 0.0
    %1576 = vmatpush2.msra.mxu0 0.0
    %1577 = vmatprep.subr.mxu0 0.0
    %1578 = vmatpush2.msra.mxu0 0.0
    %1579 = vmatprep.subr.mxu0 0.0
    %1580 = vmatpush2.msra.mxu0 0.0
    %1581 = vmatprep.subr.mxu0 0.0
    %1582 = vmatpush2.msra.mxu0 0.0
    %1583 = vmatprep.subr.mxu0 0.0
    %1584 = vmatpush2.msra.mxu0 0.0
    %1585 = vmatprep.subr.mxu0 0.0
    %1586 = vmatpush2.msra.mxu0 0.0
    %1587 = vmatprep.mubr.f32.mxu0 0.0
    %1588 = vmatmul.mubr.f32.gmra.mxu0 %v1521
    %v1589 = vpop.f32.mrf.mxu0
    %v1590 = vadd.f32 0.0, %v1589
    %v1591 = vpop.f32.mrf.mxu0
    %v1592 = vadd.f32 0.0, %v1591
    %1593 = vdwg.mxu0
    %1594 = vmatprep.subr.mxu0 %v412
    %1595 = vmatpush1.msra.mxu0 %v411
    %1596 = vmatprep.subr.mxu0 %v408
    %1597 = vmatpush1.msra.mxu0 %v407
    %1598 = vmatprep.subr.mxu0 %v404
    %1599 = vmatpush1.msra.mxu0 %v403
    %1600 = vmatprep.subr.mxu0 %v400
    %1601 = vmatpush1.msra.mxu0 %v399
    %1602 = vmatprep.subr.mxu0 %v396
    %1603 = vmatpush1.msra.mxu0 %v395
    %1604 = vmatprep.subr.mxu0 %v392
    %1605 = vmatpush1.msra.mxu0 %v391
    %1606 = vmatprep.subr.mxu0 %v388
    %1607 = vmatpush1.msra.mxu0 %v387
    %1608 = vmatprep.subr.mxu0 %v384
    %1609 = vmatpush1.msra.mxu0 %v383
    %1610 = vmatprep.subr.mxu0 %v380
    %1611 = vmatpush1.msra.mxu0 %v379
    %1612 = vmatprep.subr.mxu0 %v376
    %1613 = vmatpush1.msra.mxu0 %v375
    %1614 = vmatprep.subr.mxu0 %v372
    %1615 = vmatpush1.msra.mxu0 %v371
    %1616 = vmatprep.subr.mxu0 %v368
    %1617 = vmatpush1.msra.mxu0 %v367
    %1618 = vmatprep.subr.mxu0 %v364
    %1619 = vmatpush1.msra.mxu0 %v363
    %1620 = vmatprep.subr.mxu0 %v360
    %1621 = vmatpush1.msra.mxu0 %v359
    %1622 = vmatprep.subr.mxu0 %v356
    %1623 = vmatpush1.msra.mxu0 %v355
    %1624 = vmatprep.subr.mxu0 %v352
    %1625 = vmatpush1.msra.mxu0 %v351
    %1626 = vmatprep.subr.mxu0 0.0
    %1627 = vmatpush2.msra.mxu0 0.0
    %1628 = vmatprep.subr.mxu0 0.0
    %1629 = vmatpush2.msra.mxu0 0.0
    %1630 = vmatprep.subr.mxu0 0.0
    %1631 = vmatpush2.msra.mxu0 0.0
    %1632 = vmatprep.subr.mxu0 0.0
    %1633 = vmatpush2.msra.mxu0 0.0
    %1634 = vmatprep.subr.mxu0 0.0
    %1635 = vmatpush2.msra.mxu0 0.0
    %1636 = vmatprep.subr.mxu0 0.0
    %1637 = vmatpush2.msra.mxu0 0.0
    %1638 = vmatprep.subr.mxu0 0.0
    %1639 = vmatpush2.msra.mxu0 0.0
    %1640 = vmatprep.subr.mxu0 0.0
    %1641 = vmatpush2.msra.mxu0 0.0
    %1642 = vmatprep.subr.mxu0 0.0
    %1643 = vmatpush2.msra.mxu0 0.0
    %1644 = vmatprep.subr.mxu0 0.0
    %1645 = vmatpush2.msra.mxu0 0.0
    %1646 = vmatprep.subr.mxu0 0.0
    %1647 = vmatpush2.msra.mxu0 0.0
    %1648 = vmatprep.subr.mxu0 0.0
    %1649 = vmatpush2.msra.mxu0 0.0
    %1650 = vmatprep.subr.mxu0 0.0
    %1651 = vmatpush2.msra.mxu0 0.0
    %1652 = vmatprep.subr.mxu0 0.0
    %1653 = vmatpush2.msra.mxu0 0.0
    %1654 = vmatprep.subr.mxu0 0.0
    %1655 = vmatpush2.msra.mxu0 0.0
    %1656 = vmatprep.subr.mxu0 0.0
    %1657 = vmatpush2.msra.mxu0 0.0
    %1658 = vmatprep.mubr.f32.mxu0 0.0
    %1659 = vmatmul.mubr.f32.gmra.mxu0 %v1521
    %v1660 = vpop.f32.mrf.mxu0
    %v1661 = vadd.f32 0.0, %v1660
    %v1662 = vpop.f32.mrf.mxu0
    %v1663 = vadd.f32 0.0, %v1662
    %1664 = vdwg.mxu0
    %v1669 = vrot.slane %v1590, 6
    %v1670 = vrot.slane %v1592, 6
    %v1671 = vrot.slane %v1661, 6
    %v1672 = vrot.slane %v1663, 6
    %v1677 = vadd.f32 %v262, %v1669
    %v1678 = vadd.f32 %v264, %v1670
    %v1679 = vadd.f32 %v339, %v1671
    %v1680 = vadd.f32 %v341, %v1672
    %v1681 = vxor.u32 %v1677, 2147483648
    %v1682 = vxor.u32 %v1678, 2147483648
    %v1683 = vxor.u32 %v1679, 2147483648
    %v1684 = vmul.f32 %v1681, 1.442695
    %v1685 = vpow.pop %v1684
    %v1686 = vmul.f32 %v1682, 1.442695
    %v1687 = vpow.pop %v1686
    %v1688 = vmul.f32 %v1683, 1.442695
    %v1689 = vpow.pop %v1688
    %v1690 = vadd.f32 %v1685, 1.0
    %v1691 = vadd.f32 %v1687, 1.0
    %v1692 = vadd.f32 %v1689, 1.0
    %v1693 = vrcp.pop %v1690
    %v1694 = vmul.f32 1.0, %v1693
    %v1695 = vrcp.pop %v1691
    %v1696 = vmul.f32 1.0, %v1695
    %v1697 = vrcp.pop %v1692
    %v1698 = vmul.f32 1.0, %v1697
    %v1699 = vtanh.pop %v1680
    %v1701 = vrot.slane %v1517, 2
    %v1703 = vmul.f32 %v1696, %v1701
    %v1704 = vmul.f32 %v1694, %v1699
    %v1705 = vadd.f32 %v1703, %v1704
    %v1706 = vtanh.pop %v1705
    %v1707 = vmul.f32 %v1698, %v1706
    %v1709 = vrot.slane %v1707, 2
    %1711 = vmatprep.subr.mxu0 %v410
    %1712 = vmatpush1.msra.mxu0 %v409
    %1713 = vmatprep.subr.mxu0 %v406
    %1714 = vmatpush1.msra.mxu0 %v405
    %1715 = vmatprep.subr.mxu0 %v402
    %1716 = vmatpush1.msra.mxu0 %v401
    %1717 = vmatprep.subr.mxu0 %v398
    %1718 = vmatpush1.msra.mxu0 %v397
    %1719 = vmatprep.subr.mxu0 %v394
    %1720 = vmatpush1.msra.mxu0 %v393
    %1721 = vmatprep.subr.mxu0 %v390
    %1722 = vmatpush1.msra.mxu0 %v389
    %1723 = vmatprep.subr.mxu0 %v386
    %1724 = vmatpush1.msra.mxu0 %v385
    %1725 = vmatprep.subr.mxu0 %v382
    %1726 = vmatpush1.msra.mxu0 %v381
    %1727 = vmatprep.subr.mxu0 %v378
    %1728 = vmatpush1.msra.mxu0 %v377
    %1729 = vmatprep.subr.mxu0 %v374
    %1730 = vmatpush1.msra.mxu0 %v373
    %1731 = vmatprep.subr.mxu0 %v370
    %1732 = vmatpush1.msra.mxu0 %v369
    %1733 = vmatprep.subr.mxu0 %v366
    %1734 = vmatpush1.msra.mxu0 %v365
    %1735 = vmatprep.subr.mxu0 %v362
    %1736 = vmatpush1.msra.mxu0 %v361
    %1737 = vmatprep.subr.mxu0 %v358
    %1738 = vmatpush1.msra.mxu0 %v357
    %1739 = vmatprep.subr.mxu0 %v354
    %1740 = vmatpush1.msra.mxu0 %v353
    %1741 = vmatprep.subr.mxu0 %v350
    %1742 = vmatpush1.msra.mxu0 %v349
    %1743 = vmatprep.subr.mxu0 0.0
    %1744 = vmatpush2.msra.mxu0 0.0
    %1745 = vmatprep.subr.mxu0 0.0
    %1746 = vmatpush2.msra.mxu0 0.0
    %1747 = vmatprep.subr.mxu0 0.0
    %1748 = vmatpush2.msra.mxu0 0.0
    %1749 = vmatprep.subr.mxu0 0.0
    %1750 = vmatpush2.msra.mxu0 0.0
    %1751 = vmatprep.subr.mxu0 0.0
    %1752 = vmatpush2.msra.mxu0 0.0
    %1753 = vmatprep.subr.mxu0 0.0
    %1754 = vmatpush2.msra.mxu0 0.0
    %1755 = vmatprep.subr.mxu0 0.0
    %1756 = vmatpush2.msra.mxu0 0.0
    %1757 = vmatprep.subr.mxu0 0.0
    %1758 = vmatpush2.msra.mxu0 0.0
    %1759 = vmatprep.subr.mxu0 0.0
    %1760 = vmatpush2.msra.mxu0 0.0
    %1761 = vmatprep.subr.mxu0 0.0
    %1762 = vmatpush2.msra.mxu0 0.0
    %1763 = vmatprep.subr.mxu0 0.0
    %1764 = vmatpush2.msra.mxu0 0.0
    %1765 = vmatprep.subr.mxu0 0.0
    %1766 = vmatpush2.msra.mxu0 0.0
    %1767 = vmatprep.subr.mxu0 0.0
    %1768 = vmatpush2.msra.mxu0 0.0
    %1769 = vmatprep.subr.mxu0 0.0
    %1770 = vmatpush2.msra.mxu0 0.0
    %1771 = vmatprep.subr.mxu0 0.0
    %1772 = vmatpush2.msra.mxu0 0.0
    %1773 = vmatprep.subr.mxu0 0.0
    %1774 = vmatpush2.msra.mxu0 0.0
    %1775 = vmatprep.mubr.f32.mxu0 0.0
    %1776 = vmatmul.mubr.f32.gmra.mxu0 %v1709
    %v1777 = vpop.f32.mrf.mxu0
    %v1778 = vadd.f32 0.0, %v1777
    %v1779 = vpop.f32.mrf.mxu0
    %v1780 = vadd.f32 0.0, %v1779
    %1781 = vdwg.mxu0
    %1782 = vmatprep.subr.mxu0 %v412
    %1783 = vmatpush1.msra.mxu0 %v411
    %1784 = vmatprep.subr.mxu0 %v408
    %1785 = vmatpush1.msra.mxu0 %v407
    %1786 = vmatprep.subr.mxu0 %v404
    %1787 = vmatpush1.msra.mxu0 %v403
    %1788 = vmatprep.subr.mxu0 %v400
    %1789 = vmatpush1.msra.mxu0 %v399
    %1790 = vmatprep.subr.mxu0 %v396
    %1791 = vmatpush1.msra.mxu0 %v395
    %1792 = vmatprep.subr.mxu0 %v392
    %1793 = vmatpush1.msra.mxu0 %v391
    %1794 = vmatprep.subr.mxu0 %v388
    %1795 = vmatpush1.msra.mxu0 %v387
    %1796 = vmatprep.subr.mxu0 %v384
    %1797 = vmatpush1.msra.mxu0 %v383
    %1798 = vmatprep.subr.mxu0 %v380
    %1799 = vmatpush1.msra.mxu0 %v379
    %1800 = vmatprep.subr.mxu0 %v376
    %1801 = vmatpush1.msra.mxu0 %v375
    %1802 = vmatprep.subr.mxu0 %v372
    %1803 = vmatpush1.msra.mxu0 %v371
    %1804 = vmatprep.subr.mxu0 %v368
    %1805 = vmatpush1.msra.mxu0 %v367
    %1806 = vmatprep.subr.mxu0 %v364
    %1807 = vmatpush1.msra.mxu0 %v363
    %1808 = vmatprep.subr.mxu0 %v360
    %1809 = vmatpush1.msra.mxu0 %v359
    %1810 = vmatprep.subr.mxu0 %v356
    %1811 = vmatpush1.msra.mxu0 %v355
    %1812 = vmatprep.subr.mxu0 %v352
    %1813 = vmatpush1.msra.mxu0 %v351
    %1814 = vmatprep.subr.mxu0 0.0
    %1815 = vmatpush2.msra.mxu0 0.0
    %1816 = vmatprep.subr.mxu0 0.0
    %1817 = vmatpush2.msra.mxu0 0.0
    %1818 = vmatprep.subr.mxu0 0.0
    %1819 = vmatpush2.msra.mxu0 0.0
    %1820 = vmatprep.subr.mxu0 0.0
    %1821 = vmatpush2.msra.mxu0 0.0
    %1822 = vmatprep.subr.mxu0 0.0
    %1823 = vmatpush2.msra.mxu0 0.0
    %1824 = vmatprep.subr.mxu0 0.0
    %1825 = vmatpush2.msra.mxu0 0.0
    %1826 = vmatprep.subr.mxu0 0.0
    %1827 = vmatpush2.msra.mxu0 0.0
    %1828 = vmatprep.subr.mxu0 0.0
    %1829 = vmatpush2.msra.mxu0 0.0
    %1830 = vmatprep.subr.mxu0 0.0
    %1831 = vmatpush2.msra.mxu0 0.0
    %1832 = vmatprep.subr.mxu0 0.0
    %1833 = vmatpush2.msra.mxu0 0.0
    %1834 = vmatprep.subr.mxu0 0.0
    %1835 = vmatpush2.msra.mxu0 0.0
    %1836 = vmatprep.subr.mxu0 0.0
    %1837 = vmatpush2.msra.mxu0 0.0
    %1838 = vmatprep.subr.mxu0 0.0
    %1839 = vmatpush2.msra.mxu0 0.0
    %1840 = vmatprep.subr.mxu0 0.0
    %1841 = vmatpush2.msra.mxu0 0.0
    %1842 = vmatprep.subr.mxu0 0.0
    %1843 = vmatpush2.msra.mxu0 0.0
    %1844 = vmatprep.subr.mxu0 0.0
    %1845 = vmatpush2.msra.mxu0 0.0
    %1846 = vmatprep.mubr.f32.mxu0 0.0
    %1847 = vmatmul.mubr.f32.gmra.mxu0 %v1709
    %v1848 = vpop.f32.mrf.mxu0
    %v1849 = vadd.f32 0.0, %v1848
    %v1850 = vpop.f32.mrf.mxu0
    %v1851 = vadd.f32 0.0, %v1850
    %1852 = vdwg.mxu0
    %v1853 = vadd.f32 %v262, %v1778
    %v1854 = vadd.f32 %v264, %v1780
    %v1855 = vadd.f32 %v339, %v1849
    %v1856 = vadd.f32 %v341, %v1851
    %v1857 = vxor.u32 %v1853, 2147483648
    %v1858 = vxor.u32 %v1854, 2147483648
    %v1859 = vxor.u32 %v1855, 2147483648
    %v1860 = vmul.f32 %v1857, 1.442695
    %v1861 = vpow.pop %v1860
    %v1862 = vmul.f32 %v1858, 1.442695
    %v1863 = vpow.pop %v1862
    %v1864 = vmul.f32 %v1859, 1.442695
    %v1865 = vpow.pop %v1864
    %v1866 = vadd.f32 %v1861, 1.0
    %v1867 = vadd.f32 %v1863, 1.0
    %v1868 = vadd.f32 %v1865, 1.0
    %v1869 = vrcp.pop %v1866
    %v1870 = vmul.f32 1.0, %v1869
    %v1871 = vrcp.pop %v1867
    %v1872 = vmul.f32 1.0, %v1871
    %v1873 = vrcp.pop %v1868
    %v1874 = vmul.f32 1.0, %v1873
    %v1875 = vtanh.pop %v1856
    %v1877 = vrot.slane %v1705, 2
    %v1879 = vmul.f32 %v1872, %v1877
    %v1880 = vmul.f32 %v1870, %v1875
    %v1881 = vadd.f32 %v1879, %v1880
    %v1882 = vtanh.pop %v1881
    %v1883 = vmul.f32 %v1874, %v1882
    %v1884 = vld [vmem:[#allocation6] sm:$0xff]
    %v1885 = vld [vmem:[#allocation6 + $0x8] sm:$0xff]
    %v1886 = vld [vmem:[#allocation6 + $0x10] sm:$0xff]
    %v1887 = vld [vmem:[#allocation6 + $0x18] sm:$0xff]
    %v1888 = vld [vmem:[#allocation6 + $0x20] sm:$0xff]
    %v1889 = vld [vmem:[#allocation6 + $0x28] sm:$0xff]
    %v1890 = vld [vmem:[#allocation6 + $0x30] sm:$0xff]
    %v1891 = vld [vmem:[#allocation6 + $0x38] sm:$0xff]
    %v1892 = vld [vmem:[#allocation6 + $0x40] sm:$0xff]
    %v1893 = vld [vmem:[#allocation6 + $0x48] sm:$0xff]
    %v1894 = vld [vmem:[#allocation6 + $0x50] sm:$0xff]
    %v1895 = vld [vmem:[#allocation6 + $0x58] sm:$0xff]
    %v1896 = vld [vmem:[#allocation6 + $0x60] sm:$0xff]
    %v1897 = vld [vmem:[#allocation6 + $0x68] sm:$0xff]
    %v1898 = vld [vmem:[#allocation6 + $0x70] sm:$0xff]
    %v1899 = vld [vmem:[#allocation6 + $0x78] sm:$0xff]
    %v1900 = vld [vmem:[#allocation6 + $0x80] sm:$0xff]
    %v1901 = vld [vmem:[#allocation6 + $0x88] sm:$0xff]
    %v1902 = vld [vmem:[#allocation6 + $0x90] sm:$0xff]
    %v1903 = vld [vmem:[#allocation6 + $0x98] sm:$0xff]
    %v1904 = vld [vmem:[#allocation6 + $0xa0] sm:$0xff]
    %v1905 = vld [vmem:[#allocation6 + $0xa8] sm:$0xff]
    %v1906 = vld [vmem:[#allocation6 + $0xb0] sm:$0xff]
    %v1907 = vld [vmem:[#allocation6 + $0xb8] sm:$0xff]
    %v1908 = vld [vmem:[#allocation6 + $0xc0] sm:$0xff]
    %v1909 = vld [vmem:[#allocation6 + $0xc8] sm:$0xff]
    %v1910 = vld [vmem:[#allocation6 + $0xd0] sm:$0xff]
    %v1911 = vld [vmem:[#allocation6 + $0xd8] sm:$0xff]
    %v1912 = vld [vmem:[#allocation6 + $0xe0] sm:$0xff]
    %v1913 = vld [vmem:[#allocation6 + $0xe8] sm:$0xff]
    %v1914 = vld [vmem:[#allocation6 + $0xf0] sm:$0xff]
    %v1915 = vld [vmem:[#allocation6 + $0xf8] sm:$0xff]
    %v1916 = vld [vmem:[#allocation6 + $0x100] sm:$0xff]
    %v1917 = vld [vmem:[#allocation6 + $0x108] sm:$0xff]
    %v1918 = vld [vmem:[#allocation6 + $0x110] sm:$0xff]
    %v1919 = vld [vmem:[#allocation6 + $0x118] sm:$0xff]
    %v1920 = vld [vmem:[#allocation6 + $0x120] sm:$0xff]
    %v1921 = vld [vmem:[#allocation6 + $0x128] sm:$0xff]
    %v1922 = vld [vmem:[#allocation6 + $0x130] sm:$0xff]
    %v1923 = vld [vmem:[#allocation6 + $0x138] sm:$0xff]
    %v1924 = vld [vmem:[#allocation6 + $0x140] sm:$0xff]
    %v1925 = vld [vmem:[#allocation6 + $0x148] sm:$0xff]
    %v1926 = vld [vmem:[#allocation6 + $0x150] sm:$0xff]
    %v1927 = vld [vmem:[#allocation6 + $0x158] sm:$0xff]
    %v1928 = vld [vmem:[#allocation6 + $0x160] sm:$0xff]
    %v1929 = vld [vmem:[#allocation6 + $0x168] sm:$0xff]
    %v1930 = vld [vmem:[#allocation6 + $0x170] sm:$0xff]
    %v1931 = vld [vmem:[#allocation6 + $0x178] sm:$0xff]
    %v1932 = vld [vmem:[#allocation6 + $0x180] sm:$0xff]
    %v1933 = vld [vmem:[#allocation6 + $0x188] sm:$0xff]
    %v1934 = vld [vmem:[#allocation6 + $0x190] sm:$0xff]
    %v1935 = vld [vmem:[#allocation6 + $0x198] sm:$0xff]
    %v1936 = vld [vmem:[#allocation6 + $0x1a0] sm:$0xff]
    %v1937 = vld [vmem:[#allocation6 + $0x1a8] sm:$0xff]
    %v1938 = vld [vmem:[#allocation6 + $0x1b0] sm:$0xff]
    %v1939 = vld [vmem:[#allocation6 + $0x1b8] sm:$0xff]
    %v1940 = vld [vmem:[#allocation6 + $0x1c0] sm:$0xff]
    %v1941 = vld [vmem:[#allocation6 + $0x1c8] sm:$0xff]
    %v1942 = vld [vmem:[#allocation6 + $0x1d0] sm:$0xff]
    %v1943 = vld [vmem:[#allocation6 + $0x1d8] sm:$0xff]
    %v1944 = vld [vmem:[#allocation6 + $0x1e0] sm:$0xff]
    %v1945 = vld [vmem:[#allocation6 + $0x1e8] sm:$0xff]
    %v1946 = vld [vmem:[#allocation6 + $0x1f0] sm:$0xff]
    %v1947 = vld [vmem:[#allocation6 + $0x1f8] sm:$0xff]
    %v1948 = vld [vmem:[%s8] sm:$0xf]
    %v1950 = vlaneseq
    %v1951 = vshrl.u32 %v1950, 7
    %v1952 = vsub.s32 0, %v1951
    %v1953 = vrot.slane %v1948, %v1952
    %v1954 = vlaneseq
    %v1955 = vshrl.u32 %v1954, 7
    %v1956 = vsub.s32 1, %v1955
    %v1957 = vrot.slane %v1948, %v1956
    %v1958 = vlaneseq
    %v1959 = vshrl.u32 %v1958, 7
    %v1960 = vsub.s32 2, %v1959
    %v1961 = vrot.slane %v1948, %v1960
    %v1962 = vlaneseq
    %v1963 = vshrl.u32 %v1962, 7
    %v1964 = vsub.s32 3, %v1963
    %v1965 = vrot.slane %v1948, %v1964
    %1970 = vmatprep.subr.mxu0 %v1945
    %1971 = vmatpush1.msra.mxu0 %v1944
    %1972 = vmatprep.subr.mxu0 %v1941
    %1973 = vmatpush1.msra.mxu0 %v1940
    %1974 = vmatprep.subr.mxu0 %v1937
    %1975 = vmatpush1.msra.mxu0 %v1936
    %1976 = vmatprep.subr.mxu0 %v1933
    %1977 = vmatpush1.msra.mxu0 %v1932
    %1978 = vmatprep.subr.mxu0 %v1929
    %1979 = vmatpush1.msra.mxu0 %v1928
    %1980 = vmatprep.subr.mxu0 %v1925
    %1981 = vmatpush1.msra.mxu0 %v1924
    %1982 = vmatprep.subr.mxu0 %v1921
    %1983 = vmatpush1.msra.mxu0 %v1920
    %1984 = vmatprep.subr.mxu0 %v1917
    %1985 = vmatpush1.msra.mxu0 %v1916
    %1986 = vmatprep.subr.mxu0 %v1913
    %1987 = vmatpush1.msra.mxu0 %v1912
    %1988 = vmatprep.subr.mxu0 %v1909
    %1989 = vmatpush1.msra.mxu0 %v1908
    %1990 = vmatprep.subr.mxu0 %v1905
    %1991 = vmatpush1.msra.mxu0 %v1904
    %1992 = vmatprep.subr.mxu0 %v1901
    %1993 = vmatpush1.msra.mxu0 %v1900
    %1994 = vmatprep.subr.mxu0 %v1897
    %1995 = vmatpush1.msra.mxu0 %v1896
    %1996 = vmatprep.subr.mxu0 %v1893
    %1997 = vmatpush1.msra.mxu0 %v1892
    %1998 = vmatprep.subr.mxu0 %v1889
    %1999 = vmatpush1.msra.mxu0 %v1888
    %2000 = vmatprep.subr.mxu0 %v1885
    %2001 = vmatpush1.msra.mxu0 %v1884
    %2002 = vmatprep.subr.mxu0 0.0
    %2003 = vmatpush2.msra.mxu0 0.0
    %2004 = vmatprep.subr.mxu0 0.0
    %2005 = vmatpush2.msra.mxu0 0.0
    %2006 = vmatprep.subr.mxu0 0.0
    %2007 = vmatpush2.msra.mxu0 0.0
    %2008 = vmatprep.subr.mxu0 0.0
    %2009 = vmatpush2.msra.mxu0 0.0
    %2010 = vmatprep.subr.mxu0 0.0
    %2011 = vmatpush2.msra.mxu0 0.0
    %2012 = vmatprep.subr.mxu0 0.0
    %2013 = vmatpush2.msra.mxu0 0.0
    %2014 = vmatprep.subr.mxu0 0.0
    %2015 = vmatpush2.msra.mxu0 0.0
    %2016 = vmatprep.subr.mxu0 0.0
    %2017 = vmatpush2.msra.mxu0 0.0
    %2018 = vmatprep.subr.mxu0 0.0
    %2019 = vmatpush2.msra.mxu0 0.0
    %2020 = vmatprep.subr.mxu0 0.0
    %2021 = vmatpush2.msra.mxu0 0.0
    %2022 = vmatprep.subr.mxu0 0.0
    %2023 = vmatpush2.msra.mxu0 0.0
    %2024 = vmatprep.subr.mxu0 0.0
    %2025 = vmatpush2.msra.mxu0 0.0
    %2026 = vmatprep.subr.mxu0 0.0
    %2027 = vmatpush2.msra.mxu0 0.0
    %2028 = vmatprep.subr.mxu0 0.0
    %2029 = vmatpush2.msra.mxu0 0.0
    %2030 = vmatprep.subr.mxu0 0.0
    %2031 = vmatpush2.msra.mxu0 0.0
    %2032 = vmatprep.subr.mxu0 0.0
    %2033 = vmatpush2.msra.mxu0 0.0
    %2034 = vmatprep.mubr.f32.mxu0 0.0
    %2035 = vmatmul.mubr.f32.gmra.mxu0 %v1883
    %v2036 = vpop.f32.mrf.mxu0
    %v2037 = vadd.f32 %v1953, %v2036
    %v2038 = vpop.f32.mrf.mxu0
    %v2039 = vadd.f32 %v1957, %v2038
    %2040 = vdwg.mxu0
    %2041 = vmatprep.subr.mxu0 %v1947
    %2042 = vmatpush1.msra.mxu0 %v1946
    %2043 = vmatprep.subr.mxu0 %v1943
    %2044 = vmatpush1.msra.mxu0 %v1942
    %2045 = vmatprep.subr.mxu0 %v1939
    %2046 = vmatpush1.msra.mxu0 %v1938
    %2047 = vmatprep.subr.mxu0 %v1935
    %2048 = vmatpush1.msra.mxu0 %v1934
    %2049 = vmatprep.subr.mxu0 %v1931
    %2050 = vmatpush1.msra.mxu0 %v1930
    %2051 = vmatprep.subr.mxu0 %v1927
    %2052 = vmatpush1.msra.mxu0 %v1926
    %2053 = vmatprep.subr.mxu0 %v1923
    %2054 = vmatpush1.msra.mxu0 %v1922
    %2055 = vmatprep.subr.mxu0 %v1919
    %2056 = vmatpush1.msra.mxu0 %v1918
    %2057 = vmatprep.subr.mxu0 %v1915
    %2058 = vmatpush1.msra.mxu0 %v1914
    %2059 = vmatprep.subr.mxu0 %v1911
    %2060 = vmatpush1.msra.mxu0 %v1910
    %2061 = vmatprep.subr.mxu0 %v1907
    %2062 = vmatpush1.msra.mxu0 %v1906
    %2063 = vmatprep.subr.mxu0 %v1903
    %2064 = vmatpush1.msra.mxu0 %v1902
    %2065 = vmatprep.subr.mxu0 %v1899
    %2066 = vmatpush1.msra.mxu0 %v1898
    %2067 = vmatprep.subr.mxu0 %v1895
    %2068 = vmatpush1.msra.mxu0 %v1894
    %2069 = vmatprep.subr.mxu0 %v1891
    %2070 = vmatpush1.msra.mxu0 %v1890
    %2071 = vmatprep.subr.mxu0 %v1887
    %2072 = vmatpush1.msra.mxu0 %v1886
    %2073 = vmatprep.subr.mxu0 0.0
    %2074 = vmatpush2.msra.mxu0 0.0
    %2075 = vmatprep.subr.mxu0 0.0
    %2076 = vmatpush2.msra.mxu0 0.0
    %2077 = vmatprep.subr.mxu0 0.0
    %2078 = vmatpush2.msra.mxu0 0.0
    %2079 = vmatprep.subr.mxu0 0.0
    %2080 = vmatpush2.msra.mxu0 0.0
    %2081 = vmatprep.subr.mxu0 0.0
    %2082 = vmatpush2.msra.mxu0 0.0
    %2083 = vmatprep.subr.mxu0 0.0
    %2084 = vmatpush2.msra.mxu0 0.0
    %2085 = vmatprep.subr.mxu0 0.0
    %2086 = vmatpush2.msra.mxu0 0.0
    %2087 = vmatprep.subr.mxu0 0.0
    %2088 = vmatpush2.msra.mxu0 0.0
    %2089 = vmatprep.subr.mxu0 0.0
    %2090 = vmatpush2.msra.mxu0 0.0
    %2091 = vmatprep.subr.mxu0 0.0
    %2092 = vmatpush2.msra.mxu0 0.0
    %2093 = vmatprep.subr.mxu0 0.0
    %2094 = vmatpush2.msra.mxu0 0.0
    %2095 = vmatprep.subr.mxu0 0.0
    %2096 = vmatpush2.msra.mxu0 0.0
    %2097 = vmatprep.subr.mxu0 0.0
    %2098 = vmatpush2.msra.mxu0 0.0
    %2099 = vmatprep.subr.mxu0 0.0
    %2100 = vmatpush2.msra.mxu0 0.0
    %2101 = vmatprep.subr.mxu0 0.0
    %2102 = vmatpush2.msra.mxu0 0.0
    %2103 = vmatprep.subr.mxu0 0.0
    %2104 = vmatpush2.msra.mxu0 0.0
    %2105 = vmatprep.mubr.f32.mxu0 0.0
    %2106 = vmatmul.mubr.f32.gmra.mxu0 %v1883
    %v2107 = vpop.f32.mrf.mxu0
    %v2108 = vadd.f32 %v1961, %v2107
    %v2109 = vpop.f32.mrf.mxu0
    %v2110 = vadd.f32 %v1965, %v2109
    %2111 = vdwg.mxu0
    %v2112 = vld [vmem:[%s1] sm:$0xff]
    %v2113 = vld [vmem:[%s1 + $0x8] sm:$0xff]
    %v2114 = vld [vmem:[%s1 + $0x10] sm:$0xff]
    %v2115 = vld [vmem:[%s1 + $0x18] sm:$0xff]
    %v2116 = vld [vmem:[%s1 + $0x20] sm:$0xff]
    %v2117 = vld [vmem:[%s9] sm:$0xff]
    %v2118 = vld [vmem:[%s9 + $0x8] sm:$0xff]
    %v2119 = vld [vmem:[%s9 + $0x10] sm:$0xff]
    %v2120 = vld [vmem:[%s9 + $0x18] sm:$0xff]
    %v2121 = vld [vmem:[%s9 + $0x20] sm:$0xff]
    %v2122 = vld [vmem:[%s9 + $0x28] sm:$0xff]
    %v2123 = vld [vmem:[%s9 + $0x30] sm:$0xff]
    %v2124 = vld [vmem:[%s9 + $0x38] sm:$0xff]
    %v2125 = vld [vmem:[%s9 + $0x40] sm:$0xff]
    %v2126 = vld [vmem:[%s9 + $0x48] sm:$0xff]
    %v2127 = vld [vmem:[%s9 + $0x50] sm:$0xff]
    %v2128 = vld [vmem:[%s9 + $0x58] sm:$0xff]
    %v2129 = vld [vmem:[%s3] sm:$0xff]
    %v2130 = vld [vmem:[%s3 + $0x8] sm:$0xff]
    %v2131 = vld [vmem:[%s3 + $0x10] sm:$0xff]
    %v2132 = vld [vmem:[%s3 + $0x18] sm:$0xff]
    %v2133 = vld [vmem:[%s3 + $0x20] sm:$0xff]
    %vm2134 = vcmask 15360
    %v2136 = vsel %vm2134, %v2129, 0
    %v2139 = vsel %vm2134, %v2130, 0
    %v2142 = vsel %vm2134, %v2131, 0
    %v2145 = vsel %vm2134, %v2132, 0
    %v2148 = vsel %vm2134, %v2133, 0
    %v2151 = vsel %vm182, %v2037, 0
    %v2154 = vsel %vm182, %v2039, 0
    %2156 = vmatprep.subr.mxu0 0.0
    %2157 = vmatpush1.msra.mxu0 0.0
    %2158 = vmatprep.subr.mxu0 0.0
    %2159 = vmatpush1.msra.mxu0 0.0
    %2160 = vmatprep.subr.mxu0 0.0
    %2161 = vmatpush1.msra.mxu0 0.0
    %2162 = vmatprep.subr.mxu0 0.0
    %2163 = vmatpush1.msra.mxu0 0.0
    %2164 = vmatprep.subr.mxu0 0.0
    %2165 = vmatpush1.msra.mxu0 0.0
    %2166 = vmatprep.subr.mxu0 0.0
    %2167 = vmatpush1.msra.mxu0 0.0
    %2168 = vmatprep.subr.mxu0 0.0
    %2169 = vmatpush1.msra.mxu0 0.0
    %2170 = vmatprep.subr.mxu0 0.0
    %2171 = vmatpush1.msra.mxu0 0.0
    %2172 = vmatprep.subr.mxu0 0.0
    %2173 = vmatpush1.msra.mxu0 0.0
    %2174 = vmatprep.subr.mxu0 0.0
    %2175 = vmatpush1.msra.mxu0 0.0
    %2176 = vmatprep.subr.mxu0 0.0
    %2177 = vmatpush1.msra.mxu0 0.0
    %2178 = vmatprep.subr.mxu0 0.0
    %2179 = vmatpush1.msra.mxu0 0.0
    %2180 = vmatprep.subr.mxu0 0.0
    %2181 = vmatpush1.msra.mxu0 0.0
    %2182 = vmatprep.subr.mxu0 0.0
    %2183 = vmatpush1.msra.mxu0 0.0
    %2184 = vmatprep.subr.mxu0 0.0
    %2185 = vmatpush1.msra.mxu0 0.0
    %2186 = vmatprep.subr.mxu0 %v2154
    %2187 = vmatpush1.msra.mxu0 %v2151
    %2188 = vmatprep.subr.mxu0 0.0
    %2189 = vmatpush2.msra.mxu0 0.0
    %2190 = vmatprep.subr.mxu0 0.0
    %2191 = vmatpush2.msra.mxu0 0.0
    %2192 = vmatprep.subr.mxu0 0.0
    %2193 = vmatpush2.msra.mxu0 0.0
    %2194 = vmatprep.subr.mxu0 0.0
    %2195 = vmatpush2.msra.mxu0 0.0
    %2196 = vmatprep.subr.mxu0 0.0
    %2197 = vmatpush2.msra.mxu0 0.0
    %2198 = vmatprep.subr.mxu0 0.0
    %2199 = vmatpush2.msra.mxu0 0.0
    %2200 = vmatprep.subr.mxu0 0.0
    %2201 = vmatpush2.msra.mxu0 0.0
    %2202 = vmatprep.subr.mxu0 0.0
    %2203 = vmatpush2.msra.mxu0 0.0
    %2204 = vmatprep.subr.mxu0 0.0
    %2205 = vmatpush2.msra.mxu0 0.0
    %2206 = vmatprep.subr.mxu0 0.0
    %2207 = vmatpush2.msra.mxu0 0.0
    %2208 = vmatprep.subr.mxu0 0.0
    %2209 = vmatpush2.msra.mxu0 0.0
    %2210 = vmatprep.subr.mxu0 0.0
    %2211 = vmatpush2.msra.mxu0 0.0
    %2212 = vmatprep.subr.mxu0 0.0
    %2213 = vmatpush2.msra.mxu0 0.0
    %2214 = vmatprep.subr.mxu0 0.0
    %2215 = vmatpush2.msra.mxu0 0.0
    %2216 = vmatprep.subr.mxu0 0.0
    %2217 = vmatpush2.msra.mxu0 0.0
    %2218 = vmatprep.subr.mxu0 0.0
    %2219 = vmatpush2.msra.mxu0 0.0
    %2220 = vmatprep.mubr.f32.mxu0 0.0
    %2221 = vmatmul.mubr.f32.gmra.mxu0 %v2136
    %v2222 = vpop.f32.mrf.mxu0
    %v2223 = vadd.f32 0.0, %v2222
    %v2224 = vpop.f32.mrf.mxu0
    %v2225 = vadd.f32 0.0, %v2224
    %2226 = vmatprep.mubr.f32.mxu0 0.0
    %2227 = vmatmul.mubr.f32.gmra.mxu0 %v2139
    %v2228 = vpop.f32.mrf.mxu0
    %v2229 = vadd.f32 0.0, %v2228
    %v2230 = vpop.f32.mrf.mxu0
    %v2231 = vadd.f32 0.0, %v2230
    %2232 = vmatprep.mubr.f32.mxu0 0.0
    %2233 = vmatmul.mubr.f32.gmra.mxu0 %v2142
    %v2234 = vpop.f32.mrf.mxu0
    %v2235 = vadd.f32 0.0, %v2234
    %v2236 = vpop.f32.mrf.mxu0
    %v2237 = vadd.f32 0.0, %v2236
    %2238 = vmatprep.mubr.f32.mxu0 0.0
    %2239 = vmatmul.mubr.f32.gmra.mxu0 %v2145
    %v2240 = vpop.f32.mrf.mxu0
    %v2241 = vadd.f32 0.0, %v2240
    %v2242 = vpop.f32.mrf.mxu0
    %v2243 = vadd.f32 0.0, %v2242
    %2244 = vmatprep.mubr.f32.mxu0 0.0
    %2245 = vmatmul.mubr.f32.gmra.mxu0 %v2148
    %v2246 = vpop.f32.mrf.mxu0
    %v2247 = vadd.f32 0.0, %v2246
    %v2248 = vpop.f32.mrf.mxu0
    %v2249 = vadd.f32 0.0, %v2248
    %2250 = vdwg.mxu0
    %vm2251 = vcmask 392192
    %v2253 = vsel %vm2251, %v2112, 0
    %v2256 = vsel %vm2251, %v2113, 0
    %v2259 = vsel %vm2251, %v2114, 0
    %v2262 = vsel %vm2251, %v2115, 0
    %v2265 = vsel %vm2251, %v2116, 0
    %2267 = vmatprep.subr.mxu0 0.0
    %2268 = vmatpush1.msra.mxu0 0.0
    %2269 = vmatprep.subr.mxu0 0.0
    %2270 = vmatpush1.msra.mxu0 0.0
    %2271 = vmatprep.subr.mxu0 0.0
    %2272 = vmatpush1.msra.mxu0 0.0
    %2273 = vmatprep.subr.mxu0 0.0
    %2274 = vmatpush1.msra.mxu0 0.0
    %2275 = vmatprep.subr.mxu0 0.0
    %2276 = vmatpush1.msra.mxu0 0.0
    %2277 = vmatprep.subr.mxu0 0.0
    %2278 = vmatpush1.msra.mxu0 0.0
    %2279 = vmatprep.subr.mxu0 0.0
    %2280 = vmatpush1.msra.mxu0 0.0
    %2281 = vmatprep.subr.mxu0 0.0
    %2282 = vmatpush1.msra.mxu0 0.0
    %2283 = vmatprep.subr.mxu0 0.0
    %2284 = vmatpush1.msra.mxu0 0.0
    %2285 = vmatprep.subr.mxu0 0.0
    %2286 = vmatpush1.msra.mxu0 0.0
    %2287 = vmatprep.subr.mxu0 %v2128
    %2288 = vmatpush1.msra.mxu0 %v2127
    %2289 = vmatprep.subr.mxu0 %v2126
    %2290 = vmatpush1.msra.mxu0 %v2125
    %2291 = vmatprep.subr.mxu0 %v2124
    %2292 = vmatpush1.msra.mxu0 %v2123
    %2293 = vmatprep.subr.mxu0 %v2122
    %2294 = vmatpush1.msra.mxu0 %v2121
    %2295 = vmatprep.subr.mxu0 %v2120
    %2296 = vmatpush1.msra.mxu0 %v2119
    %2297 = vmatprep.subr.mxu0 %v2118
    %2298 = vmatpush1.msra.mxu0 %v2117
    %2299 = vmatprep.subr.mxu0 0.0
    %2300 = vmatpush2.msra.mxu0 0.0
    %2301 = vmatprep.subr.mxu0 0.0
    %2302 = vmatpush2.msra.mxu0 0.0
    %2303 = vmatprep.subr.mxu0 0.0
    %2304 = vmatpush2.msra.mxu0 0.0
    %2305 = vmatprep.subr.mxu0 0.0
    %2306 = vmatpush2.msra.mxu0 0.0
    %2307 = vmatprep.subr.mxu0 0.0
    %2308 = vmatpush2.msra.mxu0 0.0
    %2309 = vmatprep.subr.mxu0 0.0
    %2310 = vmatpush2.msra.mxu0 0.0
    %2311 = vmatprep.subr.mxu0 0.0
    %2312 = vmatpush2.msra.mxu0 0.0
    %2313 = vmatprep.subr.mxu0 0.0
    %2314 = vmatpush2.msra.mxu0 0.0
    %2315 = vmatprep.subr.mxu0 0.0
    %2316 = vmatpush2.msra.mxu0 0.0
    %2317 = vmatprep.subr.mxu0 0.0
    %2318 = vmatpush2.msra.mxu0 0.0
    %2319 = vmatprep.subr.mxu0 0.0
    %2320 = vmatpush2.msra.mxu0 0.0
    %2321 = vmatprep.subr.mxu0 0.0
    %2322 = vmatpush2.msra.mxu0 0.0
    %2323 = vmatprep.subr.mxu0 0.0
    %2324 = vmatpush2.msra.mxu0 0.0
    %2325 = vmatprep.subr.mxu0 0.0
    %2326 = vmatpush2.msra.mxu0 0.0
    %2327 = vmatprep.subr.mxu0 0.0
    %2328 = vmatpush2.msra.mxu0 0.0
    %2329 = vmatprep.subr.mxu0 0.0
    %2330 = vmatpush2.msra.mxu0 0.0
    %2331 = vmatprep.mubr.f32.mxu0 0.0
    %2332 = vmatmul.mubr.f32.gmra.mxu0 %v2253
    %v2333 = vpop.f32.mrf.mxu0
    %v2334 = vadd.f32 %v2223, %v2333
    %v2335 = vpop.f32.mrf.mxu0
    %v2336 = vadd.f32 %v2225, %v2335
    %2337 = vmatprep.mubr.f32.mxu0 0.0
    %2338 = vmatmul.mubr.f32.gmra.mxu0 %v2256
    %v2339 = vpop.f32.mrf.mxu0
    %v2340 = vadd.f32 %v2229, %v2339
    %v2341 = vpop.f32.mrf.mxu0
    %v2342 = vadd.f32 %v2231, %v2341
    %2343 = vmatprep.mubr.f32.mxu0 0.0
    %2344 = vmatmul.mubr.f32.gmra.mxu0 %v2259
    %v2345 = vpop.f32.mrf.mxu0
    %v2346 = vadd.f32 %v2235, %v2345
    %v2347 = vpop.f32.mrf.mxu0
    %v2348 = vadd.f32 %v2237, %v2347
    %2349 = vmatprep.mubr.f32.mxu0 0.0
    %2350 = vmatmul.mubr.f32.gmra.mxu0 %v2262
    %v2351 = vpop.f32.mrf.mxu0
    %v2352 = vadd.f32 %v2241, %v2351
    %v2353 = vpop.f32.mrf.mxu0
    %v2354 = vadd.f32 %v2243, %v2353
    %2355 = vmatprep.mubr.f32.mxu0 0.0
    %2356 = vmatmul.mubr.f32.gmra.mxu0 %v2265
    %v2357 = vpop.f32.mrf.mxu0
    %v2358 = vadd.f32 %v2247, %v2357
    %v2359 = vpop.f32.mrf.mxu0
    %v2360 = vadd.f32 %v2249, %v2359
    %2361 = vdwg.mxu0
    %v2362 = vtanh.pop %v2334
    %v2363 = vtanh.pop %v2340
    %v2364 = vtanh.pop %v2346
    %v2365 = vtanh.pop %v2352
    %v2366 = vtanh.pop %v2358
    %v2367 = vxor.u32 %v2336, 2147483648
    %v2368 = vxor.u32 %v2342, 2147483648
    %v2369 = vxor.u32 %v2348, 2147483648
    %v2370 = vxor.u32 %v2354, 2147483648
    %v2371 = vxor.u32 %v2360, 2147483648
    %v2372 = vmul.f32 %v2367, 1.442695
    %v2373 = vpow.pop %v2372
    %v2374 = vmul.f32 %v2368, 1.442695
    %v2375 = vpow.pop %v2374
    %v2376 = vmul.f32 %v2369, 1.442695
    %v2377 = vpow.pop %v2376
    %v2378 = vmul.f32 %v2370, 1.442695
    %v2379 = vpow.pop %v2378
    %v2380 = vmul.f32 %v2371, 1.442695
    %v2381 = vpow.pop %v2380
    %v2382 = vadd.f32 %v2373, 1.0
    %v2383 = vadd.f32 %v2375, 1.0
    %v2384 = vadd.f32 %v2377, 1.0
    %v2385 = vadd.f32 %v2379, 1.0
    %v2386 = vadd.f32 %v2381, 1.0
    %v2387 = vrcp.pop %v2382
    %v2388 = vmul.f32 1.0, %v2387
    %v2389 = vrcp.pop %v2383
    %v2390 = vmul.f32 1.0, %v2389
    %v2391 = vrcp.pop %v2384
    %v2392 = vmul.f32 1.0, %v2391
    %v2393 = vrcp.pop %v2385
    %v2394 = vmul.f32 1.0, %v2393
    %v2395 = vrcp.pop %v2386
    %v2396 = vmul.f32 1.0, %v2395
    %v2397 = vmul.f32 %v2362, %v2388
    %v2398 = vmul.f32 %v2363, %v2390
    %v2399 = vmul.f32 %v2364, %v2392
    %v2400 = vmul.f32 %v2365, %v2394
    %v2401 = vmul.f32 %v2366, %v2396
    %v2402 = vld [vmem:[%s10] sm:$0xff]
    %v2403 = vld [vmem:[%s10 + $0x8] sm:$0xff]
    %v2404 = vld [vmem:[%s10 + $0x10] sm:$0xff]
    %v2405 = vld [vmem:[%s10 + $0x18] sm:$0xff]
    %v2406 = vld [vmem:[%s10 + $0x20] sm:$0xff]
    %v2407 = vld [vmem:[%s10 + $0x28] sm:$0xff]
    %v2408 = vld [vmem:[%s10 + $0x30] sm:$0xff]
    %v2409 = vld [vmem:[%s10 + $0x38] sm:$0xff]
    %v2410 = vld [vmem:[%s10 + $0x40] sm:$0xff]
    %v2411 = vld [vmem:[%s10 + $0x48] sm:$0xff]
    %v2412 = vld [vmem:[%s10 + $0x50] sm:$0xff]
    %v2413 = vld [vmem:[%s10 + $0x58] sm:$0xff]
    %v2414 = vld [vmem:[%s10 + $0x60] sm:$0xff]
    %v2415 = vld [vmem:[%s10 + $0x68] sm:$0xff]
    %v2416 = vld [vmem:[%s10 + $0x70] sm:$0xff]
    %v2417 = vld [vmem:[%s10 + $0x78] sm:$0xff]
    %v2418 = vld [vmem:[#allocation2] sm:$0x1]
    %v2420 = vlaneseq
    %v2421 = vshrl.u32 %v2420, 7
    %v2422 = vsub.s32 0, %v2421
    %v2423 = vrot.slane %v2418, %v2422
    %2425 = vmatprep.subr.mxu0 0.0
    %2426 = vmatpush1.msra.mxu0 %v2417
    %2427 = vmatprep.subr.mxu0 0.0
    %2428 = vmatpush1.msra.mxu0 %v2416
    %2429 = vmatprep.subr.mxu0 0.0
    %2430 = vmatpush1.msra.mxu0 %v2415
    %2431 = vmatprep.subr.mxu0 0.0
    %2432 = vmatpush1.msra.mxu0 %v2414
    %2433 = vmatprep.subr.mxu0 0.0
    %2434 = vmatpush1.msra.mxu0 %v2413
    %2435 = vmatprep.subr.mxu0 0.0
    %2436 = vmatpush1.msra.mxu0 %v2412
    %2437 = vmatprep.subr.mxu0 0.0
    %2438 = vmatpush1.msra.mxu0 %v2411
    %2439 = vmatprep.subr.mxu0 0.0
    %2440 = vmatpush1.msra.mxu0 %v2410
    %2441 = vmatprep.subr.mxu0 0.0
    %2442 = vmatpush1.msra.mxu0 %v2409
    %2443 = vmatprep.subr.mxu0 0.0
    %2444 = vmatpush1.msra.mxu0 %v2408
    %2445 = vmatprep.subr.mxu0 0.0
    %2446 = vmatpush1.msra.mxu0 %v2407
    %2447 = vmatprep.subr.mxu0 0.0
    %2448 = vmatpush1.msra.mxu0 %v2406
    %2449 = vmatprep.subr.mxu0 0.0
    %2450 = vmatpush1.msra.mxu0 %v2405
    %2451 = vmatprep.subr.mxu0 0.0
    %2452 = vmatpush1.msra.mxu0 %v2404
    %2453 = vmatprep.subr.mxu0 0.0
    %2454 = vmatpush1.msra.mxu0 %v2403
    %2455 = vmatprep.subr.mxu0 0.0
    %2456 = vmatpush1.msra.mxu0 %v2402
    %2457 = vmatprep.subr.mxu0 0.0
    %2458 = vmatpush2.msra.mxu0 0.0
    %2459 = vmatprep.subr.mxu0 0.0
    %2460 = vmatpush2.msra.mxu0 0.0
    %2461 = vmatprep.subr.mxu0 0.0
    %2462 = vmatpush2.msra.mxu0 0.0
    %2463 = vmatprep.subr.mxu0 0.0
    %2464 = vmatpush2.msra.mxu0 0.0
    %2465 = vmatprep.subr.mxu0 0.0
    %2466 = vmatpush2.msra.mxu0 0.0
    %2467 = vmatprep.subr.mxu0 0.0
    %2468 = vmatpush2.msra.mxu0 0.0
    %2469 = vmatprep.subr.mxu0 0.0
    %2470 = vmatpush2.msra.mxu0 0.0
    %2471 = vmatprep.subr.mxu0 0.0
    %2472 = vmatpush2.msra.mxu0 0.0
    %2473 = vmatprep.subr.mxu0 0.0
    %2474 = vmatpush2.msra.mxu0 0.0
    %2475 = vmatprep.subr.mxu0 0.0
    %2476 = vmatpush2.msra.mxu0 0.0
    %2477 = vmatprep.subr.mxu0 0.0
    %2478 = vmatpush2.msra.mxu0 0.0
    %2479 = vmatprep.subr.mxu0 0.0
    %2480 = vmatpush2.msra.mxu0 0.0
    %2481 = vmatprep.subr.mxu0 0.0
    %2482 = vmatpush2.msra.mxu0 0.0
    %2483 = vmatprep.subr.mxu0 0.0
    %2484 = vmatpush2.msra.mxu0 0.0
    %2485 = vmatprep.subr.mxu0 0.0
    %2486 = vmatpush2.msra.mxu0 0.0
    %2487 = vmatprep.subr.mxu0 0.0
    %2488 = vmatpush2.msra.mxu0 0.0
    %2489 = vmatprep.mubr.f32.mxu0 0.0
    %2490 = vmatmul.mubr.f32.gmra.mxu0 %v2397
    %v2491 = vpop.f32.mrf.mxu0
    %v2492 = vadd.f32 %v2423, %v2491
    %v2493 = vpop.f32.mrf.mxu0
    %2494 = vmatprep.mubr.f32.mxu0 0.0
    %2495 = vmatmul.mubr.f32.gmra.mxu0 %v2398
    %v2496 = vpop.f32.mrf.mxu0
    %v2497 = vadd.f32 %v2423, %v2496
    %v2498 = vpop.f32.mrf.mxu0
    %2499 = vmatprep.mubr.f32.mxu0 0.0
    %2500 = vmatmul.mubr.f32.gmra.mxu0 %v2399
    %v2501 = vpop.f32.mrf.mxu0
    %v2502 = vadd.f32 %v2423, %v2501
    %v2503 = vpop.f32.mrf.mxu0
    %2504 = vmatprep.mubr.f32.mxu0 0.0
    %2505 = vmatmul.mubr.f32.gmra.mxu0 %v2400
    %v2506 = vpop.f32.mrf.mxu0
    %v2507 = vadd.f32 %v2423, %v2506
    %v2508 = vpop.f32.mrf.mxu0
    %2509 = vmatprep.mubr.f32.mxu0 0.0
    %2510 = vmatmul.mubr.f32.gmra.mxu0 %v2401
    %v2511 = vpop.f32.mrf.mxu0
    %v2512 = vadd.f32 %v2423, %v2511
    %v2513 = vpop.f32.mrf.mxu0
    %2514 = vdwg.mxu0
    %v2515 = vmul.f32 %v2492, 1.442695
    %v2516 = vpow.pop %v2515
    %v2517 = vmul.f32 %v2497, 1.442695
    %v2518 = vpow.pop %v2517
    %v2519 = vmul.f32 %v2502, 1.442695
    %v2520 = vpow.pop %v2519
    %v2521 = vmul.f32 %v2507, 1.442695
    %v2522 = vpow.pop %v2521
    %v2523 = vmul.f32 %v2512, 1.442695
    %v2524 = vpow.pop %v2523
    %v2525 = vld [vmem:[%s4] sm:$0x3]
    %vm2526 = vcmask 326656
    %v2528 = vsel %vm2526, %v2525, 0
    %2530 = vmatprep.subr.mxu0 0.0
    %2531 = vmatpush1.msra.mxu0 0.0
    %2532 = vmatprep.subr.mxu0 0.0
    %2533 = vmatpush1.msra.mxu0 0.0
    %2534 = vmatprep.subr.mxu0 0.0
    %2535 = vmatpush1.msra.mxu0 0.0
    %2536 = vmatprep.subr.mxu0 0.0
    %2537 = vmatpush1.msra.mxu0 0.0
    %2538 = vmatprep.subr.mxu0 0.0
    %2539 = vmatpush1.msra.mxu0 0.0
    %2540 = vmatprep.subr.mxu0 0.0
    %2541 = vmatpush1.msra.mxu0 0.0
    %2542 = vmatprep.subr.mxu0 0.0
    %2543 = vmatpush1.msra.mxu0 0.0
    %2544 = vmatprep.subr.mxu0 0.0
    %2545 = vmatpush1.msra.mxu0 0.0
    %2546 = vmatprep.subr.mxu0 0.0
    %2547 = vmatpush1.msra.mxu0 0.0
    %2548 = vmatprep.subr.mxu0 0.0
    %2549 = vmatpush1.msra.mxu0 0.0
    %2550 = vmatprep.subr.mxu0 0.0
    %2551 = vmatpush1.msra.mxu0 0.0
    %2552 = vmatprep.subr.mxu0 0.0
    %2553 = vmatpush1.msra.mxu0 %v2524
    %2554 = vmatprep.subr.mxu0 0.0
    %2555 = vmatpush1.msra.mxu0 %v2522
    %2556 = vmatprep.subr.mxu0 0.0
    %2557 = vmatpush1.msra.mxu0 %v2520
    %2558 = vmatprep.subr.mxu0 0.0
    %2559 = vmatpush1.msra.mxu0 %v2518
    %2560 = vmatprep.subr.mxu0 0.0
    %2561 = vmatpush1.msra.mxu0 %v2516
    %2562 = vmatprep.subr.mxu0 0.0
    %2563 = vmatpush2.msra.mxu0 0.0
    %2564 = vmatprep.subr.mxu0 0.0
    %2565 = vmatpush2.msra.mxu0 0.0
    %2566 = vmatprep.subr.mxu0 0.0
    %2567 = vmatpush2.msra.mxu0 0.0
    %2568 = vmatprep.subr.mxu0 0.0
    %2569 = vmatpush2.msra.mxu0 0.0
    %2570 = vmatprep.subr.mxu0 0.0
    %2571 = vmatpush2.msra.mxu0 0.0
    %2572 = vmatprep.subr.mxu0 0.0
    %2573 = vmatpush2.msra.mxu0 0.0
    %2574 = vmatprep.subr.mxu0 0.0
    %2575 = vmatpush2.msra.mxu0 0.0
    %2576 = vmatprep.subr.mxu0 0.0
    %2577 = vmatpush2.msra.mxu0 0.0
    %2578 = vmatprep.subr.mxu0 0.0
    %2579 = vmatpush2.msra.mxu0 0.0
    %2580 = vmatprep.subr.mxu0 0.0
    %2581 = vmatpush2.msra.mxu0 0.0
    %2582 = vmatprep.subr.mxu0 0.0
    %2583 = vmatpush2.msra.mxu0 0.0
    %2584 = vmatprep.subr.mxu0 0.0
    %2585 = vmatpush2.msra.mxu0 0.0
    %2586 = vmatprep.subr.mxu0 0.0
    %2587 = vmatpush2.msra.mxu0 0.0
    %2588 = vmatprep.subr.mxu0 0.0
    %2589 = vmatpush2.msra.mxu0 0.0
    %2590 = vmatprep.subr.mxu0 0.0
    %2591 = vmatpush2.msra.mxu0 0.0
    %2592 = vmatprep.subr.mxu0 0.0
    %2593 = vmatpush2.msra.mxu0 0.0
    %2594 = vmatprep.mubr.f32.mxu0 0.0
    %2595 = vmatmul.mubr.f32.gmra.mxu0 %v2528
    %v2596 = vpop.f32.mrf.mxu0
    %v2597 = vadd.f32 0.0, %v2596
    %v2598 = vpop.f32.mrf.mxu0
    %2599 = vdwg.mxu0
    %2601 = vset.pattern.permute.xlu0 0
    %2602 = vperm.xlu0 %2601, %v2516
    %v2603 = vpop.permute.xlu0 %2602
    %2606 = vset.pattern.permute.xlu0 0
    %2607 = vperm.xlu0 %2606, %v2518
    %v2608 = vpop.permute.xlu0 %2607
    %2611 = vset.pattern.permute.xlu0 0
    %2612 = vperm.xlu0 %2611, %v2520
    %v2613 = vpop.permute.xlu0 %2612
    %2616 = vset.pattern.permute.xlu0 0
    %2617 = vperm.xlu0 %2616, %v2522
    %v2618 = vpop.permute.xlu0 %2617
    %2621 = vset.pattern.permute.xlu0 0
    %2622 = vperm.xlu0 %2621, %v2524
    %v2623 = vpop.permute.xlu0 %2622
    %v2625 = vmul.f32 %v2603, %v2112
    %v2626 = vmul.f32 %v2608, %v2113
    %v2627 = vmul.f32 %v2613, %v2114
    %v2628 = vmul.f32 %v2618, %v2115
    %v2629 = vmul.f32 %v2623, %v2116
    %2630 = vmatprep.subr.mxu0 0.0
    %2631 = vmatpush1.msra.mxu0 0.0
    %2632 = vmatprep.subr.mxu0 0.0
    %2633 = vmatpush1.msra.mxu0 0.0
    %2634 = vmatprep.subr.mxu0 0.0
    %2635 = vmatpush1.msra.mxu0 0.0
    %2636 = vmatprep.subr.mxu0 0.0
    %2637 = vmatpush1.msra.mxu0 0.0
    %2638 = vmatprep.subr.mxu0 0.0
    %2639 = vmatpush1.msra.mxu0 0.0
    %2640 = vmatprep.subr.mxu0 0.0
    %2641 = vmatpush1.msra.mxu0 0.0
    %2642 = vmatprep.subr.mxu0 0.0
    %2643 = vmatpush1.msra.mxu0 0.0
    %2644 = vmatprep.subr.mxu0 0.0
    %2645 = vmatpush1.msra.mxu0 0.0
    %2646 = vmatprep.subr.mxu0 0.0
    %2647 = vmatpush1.msra.mxu0 0.0
    %2648 = vmatprep.subr.mxu0 0.0
    %2649 = vmatpush1.msra.mxu0 0.0
    %2650 = vmatprep.subr.mxu0 0.0
    %2651 = vmatpush1.msra.mxu0 0.0
    %2652 = vmatprep.subr.mxu0 0.0
    %2653 = vmatpush1.msra.mxu0 %v2629
    %2654 = vmatprep.subr.mxu0 0.0
    %2655 = vmatpush1.msra.mxu0 %v2628
    %2656 = vmatprep.subr.mxu0 0.0
    %2657 = vmatpush1.msra.mxu0 %v2627
    %2658 = vmatprep.subr.mxu0 0.0
    %2659 = vmatpush1.msra.mxu0 %v2626
    %2660 = vmatprep.subr.mxu0 0.0
    %2661 = vmatpush1.msra.mxu0 %v2625
    %2662 = vmatprep.subr.mxu0 0.0
    %2663 = vmatpush2.msra.mxu0 0.0
    %2664 = vmatprep.subr.mxu0 0.0
    %2665 = vmatpush2.msra.mxu0 0.0
    %2666 = vmatprep.subr.mxu0 0.0
    %2667 = vmatpush2.msra.mxu0 0.0
    %2668 = vmatprep.subr.mxu0 0.0
    %2669 = vmatpush2.msra.mxu0 0.0
    %2670 = vmatprep.subr.mxu0 0.0
    %2671 = vmatpush2.msra.mxu0 0.0
    %2672 = vmatprep.subr.mxu0 0.0
    %2673 = vmatpush2.msra.mxu0 0.0
    %2674 = vmatprep.subr.mxu0 0.0
    %2675 = vmatpush2.msra.mxu0 0.0
    %2676 = vmatprep.subr.mxu0 0.0
    %2677 = vmatpush2.msra.mxu0 0.0
    %2678 = vmatprep.subr.mxu0 0.0
    %2679 = vmatpush2.msra.mxu0 0.0
    %2680 = vmatprep.subr.mxu0 0.0
    %2681 = vmatpush2.msra.mxu0 0.0
    %2682 = vmatprep.subr.mxu0 0.0
    %2683 = vmatpush2.msra.mxu0 0.0
    %2684 = vmatprep.subr.mxu0 0.0
    %2685 = vmatpush2.msra.mxu0 0.0
    %2686 = vmatprep.subr.mxu0 0.0
    %2687 = vmatpush2.msra.mxu0 0.0
    %2688 = vmatprep.subr.mxu0 0.0
    %2689 = vmatpush2.msra.mxu0 0.0
    %2690 = vmatprep.subr.mxu0 0.0
    %2691 = vmatpush2.msra.mxu0 0.0
    %2692 = vmatprep.subr.mxu0 0.0
    %2693 = vmatpush2.msra.mxu0 0.0
    %2694 = vmatprep.mubr.f32.mxu0 0.0
    %2695 = vmatmul.mubr.f32.gmra.mxu0 %v2528
    %v2696 = vpop.f32.mrf.mxu0
    %v2697 = vadd.f32 0.0, %v2696
    %v2698 = vpop.f32.mrf.mxu0
    %2699 = vdwg.mxu0
    %2701 = vset.pattern.permute.xlu0 0
    %2702 = vperm.xlu0 %2701, %v2597
    %v2703 = vpop.permute.xlu0 %2702
    %v2705 = vrcp.pop %v2703
    %v2706 = vmul.f32 %v2697, %v2705
    %v2707 = vtanh.pop %v2108
    %v2708 = vxor.u32 %v2110, 2147483648
    %v2709 = vmul.f32 %v2708, 1.442695
    %v2710 = vpow.pop %v2709
    %v2711 = vadd.f32 %v2710, 1.0
    %v2712 = vrcp.pop %v2711
    %v2713 = vmul.f32 1.0, %v2712
    %v2714 = vmul.f32 %v2707, %v2713
    %v2715 = vld [vmem:[#allocation8] sm:$0xff]
    %v2716 = vld [vmem:[#allocation8 + $0x8] sm:$0xff]
    %v2717 = vld [vmem:[#allocation8 + $0x10] sm:$0xff]
    %v2718 = vld [vmem:[#allocation8 + $0x18] sm:$0xff]
    %v2719 = vld [vmem:[#allocation8 + $0x20] sm:$0xff]
    %v2720 = vld [vmem:[#allocation8 + $0x28] sm:$0xff]
    %v2721 = vld [vmem:[#allocation8 + $0x30] sm:$0xff]
    %v2722 = vld [vmem:[#allocation8 + $0x38] sm:$0xff]
    %v2723 = vld [vmem:[#allocation8 + $0x40] sm:$0xff]
    %v2724 = vld [vmem:[#allocation8 + $0x48] sm:$0xff]
    %v2725 = vld [vmem:[#allocation8 + $0x50] sm:$0xff]
    %v2726 = vld [vmem:[#allocation8 + $0x58] sm:$0xff]
    %v2727 = vld [vmem:[%s13] sm:$0x3]
    %v2729 = vlaneseq
    %v2730 = vshrl.u32 %v2729, 7
    %v2731 = vsub.s32 0, %v2730
    %v2732 = vrot.slane %v2727, %v2731
    %v2733 = vlaneseq
    %v2734 = vshrl.u32 %v2733, 7
    %v2735 = vsub.s32 1, %v2734
    %v2736 = vrot.slane %v2727, %v2735
    %v2740 = vsel %vm2251, %v2706, 0
    %2742 = vmatprep.subr.mxu0 0.0
    %2743 = vmatpush1.msra.mxu0 0.0
    %2744 = vmatprep.subr.mxu0 0.0
    %2745 = vmatpush1.msra.mxu0 0.0
    %2746 = vmatprep.subr.mxu0 0.0
    %2747 = vmatpush1.msra.mxu0 0.0
    %2748 = vmatprep.subr.mxu0 0.0
    %2749 = vmatpush1.msra.mxu0 0.0
    %2750 = vmatprep.subr.mxu0 0.0
    %2751 = vmatpush1.msra.mxu0 0.0
    %2752 = vmatprep.subr.mxu0 0.0
    %2753 = vmatpush1.msra.mxu0 0.0
    %2754 = vmatprep.subr.mxu0 0.0
    %2755 = vmatpush1.msra.mxu0 0.0
    %2756 = vmatprep.subr.mxu0 0.0
    %2757 = vmatpush1.msra.mxu0 0.0
    %2758 = vmatprep.subr.mxu0 0.0
    %2759 = vmatpush1.msra.mxu0 0.0
    %2760 = vmatprep.subr.mxu0 0.0
    %2761 = vmatpush1.msra.mxu0 0.0
    %2762 = vmatprep.subr.mxu0 %v2726
    %2763 = vmatpush1.msra.mxu0 %v2725
    %2764 = vmatprep.subr.mxu0 %v2724
    %2765 = vmatpush1.msra.mxu0 %v2723
    %2766 = vmatprep.subr.mxu0 %v2722
    %2767 = vmatpush1.msra.mxu0 %v2721
    %2768 = vmatprep.subr.mxu0 %v2720
    %2769 = vmatpush1.msra.mxu0 %v2719
    %2770 = vmatprep.subr.mxu0 %v2718
    %2771 = vmatpush1.msra.mxu0 %v2717
    %2772 = vmatprep.subr.mxu0 %v2716
    %2773 = vmatpush1.msra.mxu0 %v2715
    %2774 = vmatprep.subr.mxu0 0.0
    %2775 = vmatpush2.msra.mxu0 0.0
    %2776 = vmatprep.subr.mxu0 0.0
    %2777 = vmatpush2.msra.mxu0 0.0
    %2778 = vmatprep.subr.mxu0 0.0
    %2779 = vmatpush2.msra.mxu0 0.0
    %2780 = vmatprep.subr.mxu0 0.0
    %2781 = vmatpush2.msra.mxu0 0.0
    %2782 = vmatprep.subr.mxu0 0.0
    %2783 = vmatpush2.msra.mxu0 0.0
    %2784 = vmatprep.subr.mxu0 0.0
    %2785 = vmatpush2.msra.mxu0 0.0
    %2786 = vmatprep.subr.mxu0 0.0
    %2787 = vmatpush2.msra.mxu0 0.0
    %2788 = vmatprep.subr.mxu0 0.0
    %2789 = vmatpush2.msra.mxu0 0.0
    %2790 = vmatprep.subr.mxu0 0.0
    %2791 = vmatpush2.msra.mxu0 0.0
    %2792 = vmatprep.subr.mxu0 0.0
    %2793 = vmatpush2.msra.mxu0 0.0
    %2794 = vmatprep.subr.mxu0 0.0
    %2795 = vmatpush2.msra.mxu0 0.0
    %2796 = vmatprep.subr.mxu0 0.0
    %2797 = vmatpush2.msra.mxu0 0.0
    %2798 = vmatprep.subr.mxu0 0.0
    %2799 = vmatpush2.msra.mxu0 0.0
    %2800 = vmatprep.subr.mxu0 0.0
    %2801 = vmatpush2.msra.mxu0 0.0
    %2802 = vmatprep.subr.mxu0 0.0
    %2803 = vmatpush2.msra.mxu0 0.0
    %2804 = vmatprep.subr.mxu0 0.0
    %2805 = vmatpush2.msra.mxu0 0.0
    %2806 = vmatprep.mubr.f32.mxu0 0.0
    %2807 = vmatmul.mubr.f32.gmra.mxu0 %v2740
    %v2808 = vpop.f32.mrf.mxu0
    %v2809 = vadd.f32 %v2732, %v2808
    %v2810 = vpop.f32.mrf.mxu0
    %v2811 = vadd.f32 %v2736, %v2810
    %2812 = vdwg.mxu0
    %v2813 = vtanh.pop %v2809
    %v2814 = vxor.u32 %v2811, 2147483648
    %v2815 = vmul.f32 %v2814, 1.442695
    %v2816 = vpow.pop %v2815
    %v2817 = vadd.f32 %v2816, 1.0
    %v2818 = vrcp.pop %v2817
    %v2819 = vmul.f32 1.0, %v2818
    %v2820 = vmul.f32 %v2813, %v2819
    %v2821 = vmul.f32 %v2714, %v2820
    %v2822 = vld [vmem:[%s2] sm:$0x3]
    %v2823 = vld [vmem:[#allocation9] sm:$0xff]
    %v2824 = vld [vmem:[#allocation9 + $0x8] sm:$0xff]
    %v2825 = vld [vmem:[#allocation9 + $0x10] sm:$0xff]
    %v2826 = vld [vmem:[#allocation9 + $0x18] sm:$0xff]
    %v2827 = vld [vmem:[#allocation9 + $0x20] sm:$0xff]
    %v2828 = vld [vmem:[#allocation9 + $0x28] sm:$0xff]
    %v2829 = vld [vmem:[#allocation9 + $0x30] sm:$0xff]
    %v2830 = vld [vmem:[#allocation9 + $0x38] sm:$0xff]
    %v2831 = vld [vmem:[#allocation9 + $0x40] sm:$0xff]
    %v2832 = vld [vmem:[#allocation9 + $0x48] sm:$0xff]
    %v2833 = vld [vmem:[#allocation9 + $0x50] sm:$0xff]
    %v2834 = vld [vmem:[#allocation9 + $0x58] sm:$0xff]
    %v2835 = vld [vmem:[#allocation9 + $0x60] sm:$0xff]
    %v2836 = vld [vmem:[#allocation9 + $0x68] sm:$0xff]
    %v2837 = vld [vmem:[#allocation9 + $0x70] sm:$0xff]
    %v2838 = vld [vmem:[#allocation9 + $0x78] sm:$0xff]
    %v2839 = vld [vmem:[#allocation9 + $0x80] sm:$0xff]
    %v2840 = vld [vmem:[#allocation9 + $0x88] sm:$0xff]
    %v2841 = vld [vmem:[#allocation9 + $0x90] sm:$0xff]
    %v2842 = vld [vmem:[#allocation9 + $0x98] sm:$0xff]
    %v2843 = vld [vmem:[#allocation9 + $0xa0] sm:$0xff]
    %v2844 = vld [vmem:[#allocation9 + $0xa8] sm:$0xff]
    %v2845 = vld [vmem:[#allocation9 + $0xb0] sm:$0xff]
    %v2846 = vld [vmem:[#allocation9 + $0xb8] sm:$0xff]
    %v2847 = vld [vmem:[#allocation9 + $0xc0] sm:$0xff]
    %v2848 = vld [vmem:[#allocation9 + $0xc8] sm:$0xff]
    %v2849 = vld [vmem:[#allocation9 + $0xd0] sm:$0xff]
    %v2850 = vld [vmem:[#allocation9 + $0xd8] sm:$0xff]
    %v2851 = vld [vmem:[#allocation9 + $0xe0] sm:$0xff]
    %v2852 = vld [vmem:[#allocation9 + $0xe8] sm:$0xff]
    %v2853 = vld [vmem:[#allocation9 + $0xf0] sm:$0xff]
    %v2854 = vld [vmem:[#allocation9 + $0xf8] sm:$0xff]
    %v2855 = vld [vmem:[#allocation9 + $0x100] sm:$0xff]
    %v2856 = vld [vmem:[#allocation9 + $0x108] sm:$0xff]
    %v2857 = vld [vmem:[#allocation9 + $0x110] sm:$0xff]
    %v2858 = vld [vmem:[#allocation9 + $0x118] sm:$0xff]
    %v2859 = vld [vmem:[#allocation9 + $0x120] sm:$0xff]
    %v2860 = vld [vmem:[#allocation9 + $0x128] sm:$0xff]
    %v2861 = vld [vmem:[#allocation9 + $0x130] sm:$0xff]
    %v2862 = vld [vmem:[#allocation9 + $0x138] sm:$0xff]
    %v2863 = vld [vmem:[#allocation9 + $0x140] sm:$0xff]
    %v2864 = vld [vmem:[#allocation9 + $0x148] sm:$0xff]
    %v2865 = vld [vmem:[#allocation9 + $0x150] sm:$0xff]
    %v2866 = vld [vmem:[#allocation9 + $0x158] sm:$0xff]
    %v2867 = vld [vmem:[#allocation9 + $0x160] sm:$0xff]
    %v2868 = vld [vmem:[#allocation9 + $0x168] sm:$0xff]
    %v2869 = vld [vmem:[#allocation9 + $0x170] sm:$0xff]
    %v2870 = vld [vmem:[#allocation9 + $0x178] sm:$0xff]
    %v2871 = vld [vmem:[#allocation9 + $0x180] sm:$0xff]
    %v2872 = vld [vmem:[#allocation9 + $0x188] sm:$0xff]
    %v2873 = vld [vmem:[#allocation9 + $0x190] sm:$0xff]
    %v2874 = vld [vmem:[#allocation9 + $0x198] sm:$0xff]
    %v2875 = vld [vmem:[#allocation9 + $0x1a0] sm:$0xff]
    %v2876 = vld [vmem:[#allocation9 + $0x1a8] sm:$0xff]
    %v2877 = vld [vmem:[#allocation9 + $0x1b0] sm:$0xff]
    %v2878 = vld [vmem:[#allocation9 + $0x1b8] sm:$0xff]
    %v2879 = vld [vmem:[#allocation9 + $0x1c0] sm:$0xff]
    %v2880 = vld [vmem:[#allocation9 + $0x1c8] sm:$0xff]
    %v2881 = vld [vmem:[#allocation9 + $0x1d0] sm:$0xff]
    %v2882 = vld [vmem:[#allocation9 + $0x1d8] sm:$0xff]
    %v2883 = vld [vmem:[#allocation9 + $0x1e0] sm:$0xff]
    %v2884 = vld [vmem:[#allocation9 + $0x1e8] sm:$0xff]
    %v2885 = vld [vmem:[#allocation9 + $0x1f0] sm:$0xff]
    %v2886 = vld [vmem:[#allocation9 + $0x1f8] sm:$0xff]
    %v2887 = vld [vmem:[#allocation11] sm:$0xff]
    %v2888 = vld [vmem:[#allocation11 + $0x8] sm:$0xff]
    %v2889 = vld [vmem:[#allocation11 + $0x10] sm:$0xff]
    %v2890 = vld [vmem:[#allocation11 + $0x18] sm:$0xff]
    %v2891 = vld [vmem:[#allocation11 + $0x20] sm:$0xff]
    %v2892 = vld [vmem:[#allocation11 + $0x28] sm:$0xff]
    %v2893 = vld [vmem:[#allocation11 + $0x30] sm:$0xff]
    %v2894 = vld [vmem:[#allocation11 + $0x38] sm:$0xff]
    %v2895 = vld [vmem:[#allocation11 + $0x40] sm:$0xff]
    %v2896 = vld [vmem:[#allocation11 + $0x48] sm:$0xff]
    %v2897 = vld [vmem:[#allocation11 + $0x50] sm:$0xff]
    %v2898 = vld [vmem:[#allocation11 + $0x58] sm:$0xff]
    %v2899 = vld [vmem:[#allocation11 + $0x60] sm:$0xff]
    %v2900 = vld [vmem:[#allocation11 + $0x68] sm:$0xff]
    %v2901 = vld [vmem:[#allocation11 + $0x70] sm:$0xff]
    %v2902 = vld [vmem:[#allocation11 + $0x78] sm:$0xff]
    %v2903 = vld [vmem:[#allocation11 + $0x80] sm:$0xff]
    %v2904 = vld [vmem:[#allocation11 + $0x88] sm:$0xff]
    %v2905 = vld [vmem:[#allocation11 + $0x90] sm:$0xff]
    %v2906 = vld [vmem:[#allocation11 + $0x98] sm:$0xff]
    %v2907 = vld [vmem:[#allocation11 + $0xa0] sm:$0xff]
    %v2908 = vld [vmem:[#allocation11 + $0xa8] sm:$0xff]
    %v2909 = vld [vmem:[#allocation11 + $0xb0] sm:$0xff]
    %v2910 = vld [vmem:[#allocation11 + $0xb8] sm:$0xff]
    %v2911 = vld [vmem:[#allocation11 + $0xc0] sm:$0xff]
    %v2912 = vld [vmem:[#allocation11 + $0xc8] sm:$0xff]
    %v2913 = vld [vmem:[#allocation11 + $0xd0] sm:$0xff]
    %v2914 = vld [vmem:[#allocation11 + $0xd8] sm:$0xff]
    %v2915 = vld [vmem:[#allocation11 + $0xe0] sm:$0xff]
    %v2916 = vld [vmem:[#allocation11 + $0xe8] sm:$0xff]
    %v2917 = vld [vmem:[#allocation11 + $0xf0] sm:$0xff]
    %v2918 = vld [vmem:[#allocation11 + $0xf8] sm:$0xff]
    %v2919 = vld [vmem:[#allocation11 + $0x100] sm:$0xff]
    %v2920 = vld [vmem:[#allocation11 + $0x108] sm:$0xff]
    %v2921 = vld [vmem:[#allocation11 + $0x110] sm:$0xff]
    %v2922 = vld [vmem:[#allocation11 + $0x118] sm:$0xff]
    %v2923 = vld [vmem:[#allocation11 + $0x120] sm:$0xff]
    %v2924 = vld [vmem:[#allocation11 + $0x128] sm:$0xff]
    %v2925 = vld [vmem:[#allocation11 + $0x130] sm:$0xff]
    %v2926 = vld [vmem:[#allocation11 + $0x138] sm:$0xff]
    %v2927 = vld [vmem:[#allocation11 + $0x140] sm:$0xff]
    %v2928 = vld [vmem:[#allocation11 + $0x148] sm:$0xff]
    %v2929 = vld [vmem:[#allocation11 + $0x150] sm:$0xff]
    %v2930 = vld [vmem:[#allocation11 + $0x158] sm:$0xff]
    %v2931 = vld [vmem:[#allocation11 + $0x160] sm:$0xff]
    %v2932 = vld [vmem:[#allocation11 + $0x168] sm:$0xff]
    %v2933 = vld [vmem:[#allocation11 + $0x170] sm:$0xff]
    %v2934 = vld [vmem:[#allocation11 + $0x178] sm:$0xff]
    %v2935 = vld [vmem:[#allocation11 + $0x180] sm:$0x7]
    %v2936 = vld [vmem:[#allocation11 + $0x188] sm:$0x7]
    %v2937 = vld [vmem:[#allocation11 + $0x190] sm:$0x7]
    %v2938 = vld [vmem:[#allocation11 + $0x198] sm:$0x7]
    %vm2939 = vcmask 809984
    %v2941 = vsel %vm2939, %v2822, 0
    %vm2943 = vcmask 1042432
    %v2945 = vsel %vm2943, %v2935, 0
    %v2948 = vsel %vm2943, %v2936, 0
    %v2951 = vsel %vm2943, %v2937, 0
    %v2954 = vsel %vm2943, %v2938, 0
    %2956 = vmatprep.subr.mxu0 0.0
    %2957 = vmatpush1.msra.mxu0 0.0
    %2958 = vmatprep.subr.mxu0 0.0
    %2959 = vmatpush1.msra.mxu0 0.0
    %2960 = vmatprep.subr.mxu0 0.0
    %2961 = vmatpush1.msra.mxu0 0.0
    %2962 = vmatprep.subr.mxu0 %v2948
    %2963 = vmatpush1.msra.mxu0 %v2945
    %2964 = vmatprep.subr.mxu0 %v2932
    %2965 = vmatpush1.msra.mxu0 %v2931
    %2966 = vmatprep.subr.mxu0 %v2928
    %2967 = vmatpush1.msra.mxu0 %v2927
    %2968 = vmatprep.subr.mxu0 %v2924
    %2969 = vmatpush1.msra.mxu0 %v2923
    %2970 = vmatprep.subr.mxu0 %v2920
    %2971 = vmatpush1.msra.mxu0 %v2919
    %2972 = vmatprep.subr.mxu0 %v2916
    %2973 = vmatpush1.msra.mxu0 %v2915
    %2974 = vmatprep.subr.mxu0 %v2912
    %2975 = vmatpush1.msra.mxu0 %v2911
    %2976 = vmatprep.subr.mxu0 %v2908
    %2977 = vmatpush1.msra.mxu0 %v2907
    %2978 = vmatprep.subr.mxu0 %v2904
    %2979 = vmatpush1.msra.mxu0 %v2903
    %2980 = vmatprep.subr.mxu0 %v2900
    %2981 = vmatpush1.msra.mxu0 %v2899
    %2982 = vmatprep.subr.mxu0 %v2896
    %2983 = vmatpush1.msra.mxu0 %v2895
    %2984 = vmatprep.subr.mxu0 %v2892
    %2985 = vmatpush1.msra.mxu0 %v2891
    %2986 = vmatprep.subr.mxu0 %v2888
    %2987 = vmatpush1.msra.mxu0 %v2887
    %2988 = vmatprep.subr.mxu0 0.0
    %2989 = vmatpush2.msra.mxu0 0.0
    %2990 = vmatprep.subr.mxu0 0.0
    %2991 = vmatpush2.msra.mxu0 0.0
    %2992 = vmatprep.subr.mxu0 0.0
    %2993 = vmatpush2.msra.mxu0 0.0
    %2994 = vmatprep.subr.mxu0 0.0
    %2995 = vmatpush2.msra.mxu0 0.0
    %2996 = vmatprep.subr.mxu0 0.0
    %2997 = vmatpush2.msra.mxu0 0.0
    %2998 = vmatprep.subr.mxu0 0.0
    %2999 = vmatpush2.msra.mxu0 0.0
    %3000 = vmatprep.subr.mxu0 0.0
    %3001 = vmatpush2.msra.mxu0 0.0
    %3002 = vmatprep.subr.mxu0 0.0
    %3003 = vmatpush2.msra.mxu0 0.0
    %3004 = vmatprep.subr.mxu0 0.0
    %3005 = vmatpush2.msra.mxu0 0.0
    %3006 = vmatprep.subr.mxu0 0.0
    %3007 = vmatpush2.msra.mxu0 0.0
    %3008 = vmatprep.subr.mxu0 0.0
    %3009 = vmatpush2.msra.mxu0 0.0
    %3010 = vmatprep.subr.mxu0 0.0
    %3011 = vmatpush2.msra.mxu0 0.0
    %3012 = vmatprep.subr.mxu0 0.0
    %3013 = vmatpush2.msra.mxu0 0.0
    %3014 = vmatprep.subr.mxu0 0.0
    %3015 = vmatpush2.msra.mxu0 0.0
    %3016 = vmatprep.subr.mxu0 0.0
    %3017 = vmatpush2.msra.mxu0 0.0
    %3018 = vmatprep.subr.mxu0 0.0
    %3019 = vmatpush2.msra.mxu0 0.0
    %3020 = vmatprep.mubr.f32.mxu0 0.0
    %3021 = vmatmul.mubr.f32.gmra.mxu0 %v2941
    %v3022 = vpop.f32.mrf.mxu0
    %v3023 = vadd.f32 0.0, %v3022
    %v3024 = vpop.f32.mrf.mxu0
    %v3025 = vadd.f32 0.0, %v3024
    %3026 = vdwg.mxu0
    %3027 = vmatprep.subr.mxu0 0.0
    %3028 = vmatpush1.msra.mxu0 0.0
    %3029 = vmatprep.subr.mxu0 0.0
    %3030 = vmatpush1.msra.mxu0 0.0
    %3031 = vmatprep.subr.mxu0 0.0
    %3032 = vmatpush1.msra.mxu0 0.0
    %3033 = vmatprep.subr.mxu0 %v2954
    %3034 = vmatpush1.msra.mxu0 %v2951
    %3035 = vmatprep.subr.mxu0 %v2934
    %3036 = vmatpush1.msra.mxu0 %v2933
    %3037 = vmatprep.subr.mxu0 %v2930
    %3038 = vmatpush1.msra.mxu0 %v2929
    %3039 = vmatprep.subr.mxu0 %v2926
    %3040 = vmatpush1.msra.mxu0 %v2925
    %3041 = vmatprep.subr.mxu0 %v2922
    %3042 = vmatpush1.msra.mxu0 %v2921
    %3043 = vmatprep.subr.mxu0 %v2918
    %3044 = vmatpush1.msra.mxu0 %v2917
    %3045 = vmatprep.subr.mxu0 %v2914
    %3046 = vmatpush1.msra.mxu0 %v2913
    %3047 = vmatprep.subr.mxu0 %v2910
    %3048 = vmatpush1.msra.mxu0 %v2909
    %3049 = vmatprep.subr.mxu0 %v2906
    %3050 = vmatpush1.msra.mxu0 %v2905
    %3051 = vmatprep.subr.mxu0 %v2902
    %3052 = vmatpush1.msra.mxu0 %v2901
    %3053 = vmatprep.subr.mxu0 %v2898
    %3054 = vmatpush1.msra.mxu0 %v2897
    %3055 = vmatprep.subr.mxu0 %v2894
    %3056 = vmatpush1.msra.mxu0 %v2893
    %3057 = vmatprep.subr.mxu0 %v2890
    %3058 = vmatpush1.msra.mxu0 %v2889
    %3059 = vmatprep.subr.mxu0 0.0
    %3060 = vmatpush2.msra.mxu0 0.0
    %3061 = vmatprep.subr.mxu0 0.0
    %3062 = vmatpush2.msra.mxu0 0.0
    %3063 = vmatprep.subr.mxu0 0.0
    %3064 = vmatpush2.msra.mxu0 0.0
    %3065 = vmatprep.subr.mxu0 0.0
    %3066 = vmatpush2.msra.mxu0 0.0
    %3067 = vmatprep.subr.mxu0 0.0
    %3068 = vmatpush2.msra.mxu0 0.0
    %3069 = vmatprep.subr.mxu0 0.0
    %3070 = vmatpush2.msra.mxu0 0.0
    %3071 = vmatprep.subr.mxu0 0.0
    %3072 = vmatpush2.msra.mxu0 0.0
    %3073 = vmatprep.subr.mxu0 0.0
    %3074 = vmatpush2.msra.mxu0 0.0
    %3075 = vmatprep.subr.mxu0 0.0
    %3076 = vmatpush2.msra.mxu0 0.0
    %3077 = vmatprep.subr.mxu0 0.0
    %3078 = vmatpush2.msra.mxu0 0.0
    %3079 = vmatprep.subr.mxu0 0.0
    %3080 = vmatpush2.msra.mxu0 0.0
    %3081 = vmatprep.subr.mxu0 0.0
    %3082 = vmatpush2.msra.mxu0 0.0
    %3083 = vmatprep.subr.mxu0 0.0
    %3084 = vmatpush2.msra.mxu0 0.0
    %3085 = vmatprep.subr.mxu0 0.0
    %3086 = vmatpush2.msra.mxu0 0.0
    %3087 = vmatprep.subr.mxu0 0.0
    %3088 = vmatpush2.msra.mxu0 0.0
    %3089 = vmatprep.subr.mxu0 0.0
    %3090 = vmatpush2.msra.mxu0 0.0
    %3091 = vmatprep.mubr.f32.mxu0 0.0
    %3092 = vmatmul.mubr.f32.gmra.mxu0 %v2941
    %v3093 = vpop.f32.mrf.mxu0
    %v3094 = vadd.f32 0.0, %v3093
    %v3095 = vpop.f32.mrf.mxu0
    %v3096 = vadd.f32 0.0, %v3095
    %3097 = vdwg.mxu0
    %3098 = vmatprep.subr.mxu0 %v2884
    %3099 = vmatpush1.msra.mxu0 %v2883
    %3100 = vmatprep.subr.mxu0 %v2880
    %3101 = vmatpush1.msra.mxu0 %v2879
    %3102 = vmatprep.subr.mxu0 %v2876
    %3103 = vmatpush1.msra.mxu0 %v2875
    %3104 = vmatprep.subr.mxu0 %v2872
    %3105 = vmatpush1.msra.mxu0 %v2871
    %3106 = vmatprep.subr.mxu0 %v2868
    %3107 = vmatpush1.msra.mxu0 %v2867
    %3108 = vmatprep.subr.mxu0 %v2864
    %3109 = vmatpush1.msra.mxu0 %v2863
    %3110 = vmatprep.subr.mxu0 %v2860
    %3111 = vmatpush1.msra.mxu0 %v2859
    %3112 = vmatprep.subr.mxu0 %v2856
    %3113 = vmatpush1.msra.mxu0 %v2855
    %3114 = vmatprep.subr.mxu0 %v2852
    %3115 = vmatpush1.msra.mxu0 %v2851
    %3116 = vmatprep.subr.mxu0 %v2848
    %3117 = vmatpush1.msra.mxu0 %v2847
    %3118 = vmatprep.subr.mxu0 %v2844
    %3119 = vmatpush1.msra.mxu0 %v2843
    %3120 = vmatprep.subr.mxu0 %v2840
    %3121 = vmatpush1.msra.mxu0 %v2839
    %3122 = vmatprep.subr.mxu0 %v2836
    %3123 = vmatpush1.msra.mxu0 %v2835
    %3124 = vmatprep.subr.mxu0 %v2832
    %3125 = vmatpush1.msra.mxu0 %v2831
    %3126 = vmatprep.subr.mxu0 %v2828
    %3127 = vmatpush1.msra.mxu0 %v2827
    %3128 = vmatprep.subr.mxu0 %v2824
    %3129 = vmatpush1.msra.mxu0 %v2823
    %3130 = vmatprep.subr.mxu0 0.0
    %3131 = vmatpush2.msra.mxu0 0.0
    %3132 = vmatprep.subr.mxu0 0.0
    %3133 = vmatpush2.msra.mxu0 0.0
    %3134 = vmatprep.subr.mxu0 0.0
    %3135 = vmatpush2.msra.mxu0 0.0
    %3136 = vmatprep.subr.mxu0 0.0
    %3137 = vmatpush2.msra.mxu0 0.0
    %3138 = vmatprep.subr.mxu0 0.0
    %3139 = vmatpush2.msra.mxu0 0.0
    %3140 = vmatprep.subr.mxu0 0.0
    %3141 = vmatpush2.msra.mxu0 0.0
    %3142 = vmatprep.subr.mxu0 0.0
    %3143 = vmatpush2.msra.mxu0 0.0
    %3144 = vmatprep.subr.mxu0 0.0
    %3145 = vmatpush2.msra.mxu0 0.0
    %3146 = vmatprep.subr.mxu0 0.0
    %3147 = vmatpush2.msra.mxu0 0.0
    %3148 = vmatprep.subr.mxu0 0.0
    %3149 = vmatpush2.msra.mxu0 0.0
    %3150 = vmatprep.subr.mxu0 0.0
    %3151 = vmatpush2.msra.mxu0 0.0
    %3152 = vmatprep.subr.mxu0 0.0
    %3153 = vmatpush2.msra.mxu0 0.0
    %3154 = vmatprep.subr.mxu0 0.0
    %3155 = vmatpush2.msra.mxu0 0.0
    %3156 = vmatprep.subr.mxu0 0.0
    %3157 = vmatpush2.msra.mxu0 0.0
    %3158 = vmatprep.subr.mxu0 0.0
    %3159 = vmatpush2.msra.mxu0 0.0
    %3160 = vmatprep.subr.mxu0 0.0
    %3161 = vmatpush2.msra.mxu0 0.0
    %3162 = vmatprep.mubr.f32.mxu0 0.0
    %3163 = vmatmul.mubr.f32.gmra.mxu0 %v2821
    %v3164 = vpop.f32.mrf.mxu0
    %v3165 = vadd.f32 %v3023, %v3164
    %v3166 = vpop.f32.mrf.mxu0
    %v3167 = vadd.f32 %v3025, %v3166
    %3168 = vdwg.mxu0
    %3169 = vmatprep.subr.mxu0 %v2886
    %3170 = vmatpush1.msra.mxu0 %v2885
    %3171 = vmatprep.subr.mxu0 %v2882
    %3172 = vmatpush1.msra.mxu0 %v2881
    %3173 = vmatprep.subr.mxu0 %v2878
    %3174 = vmatpush1.msra.mxu0 %v2877
    %3175 = vmatprep.subr.mxu0 %v2874
    %3176 = vmatpush1.msra.mxu0 %v2873
    %3177 = vmatprep.subr.mxu0 %v2870
    %3178 = vmatpush1.msra.mxu0 %v2869
    %3179 = vmatprep.subr.mxu0 %v2866
    %3180 = vmatpush1.msra.mxu0 %v2865
    %3181 = vmatprep.subr.mxu0 %v2862
    %3182 = vmatpush1.msra.mxu0 %v2861
    %3183 = vmatprep.subr.mxu0 %v2858
    %3184 = vmatpush1.msra.mxu0 %v2857
    %3185 = vmatprep.subr.mxu0 %v2854
    %3186 = vmatpush1.msra.mxu0 %v2853
    %3187 = vmatprep.subr.mxu0 %v2850
    %3188 = vmatpush1.msra.mxu0 %v2849
    %3189 = vmatprep.subr.mxu0 %v2846
    %3190 = vmatpush1.msra.mxu0 %v2845
    %3191 = vmatprep.subr.mxu0 %v2842
    %3192 = vmatpush1.msra.mxu0 %v2841
    %3193 = vmatprep.subr.mxu0 %v2838
    %3194 = vmatpush1.msra.mxu0 %v2837
    %3195 = vmatprep.subr.mxu0 %v2834
    %3196 = vmatpush1.msra.mxu0 %v2833
    %3197 = vmatprep.subr.mxu0 %v2830
    %3198 = vmatpush1.msra.mxu0 %v2829
    %3199 = vmatprep.subr.mxu0 %v2826
    %3200 = vmatpush1.msra.mxu0 %v2825
    %3201 = vmatprep.subr.mxu0 0.0
    %3202 = vmatpush2.msra.mxu0 0.0
    %3203 = vmatprep.subr.mxu0 0.0
    %3204 = vmatpush2.msra.mxu0 0.0
    %3205 = vmatprep.subr.mxu0 0.0
    %3206 = vmatpush2.msra.mxu0 0.0
    %3207 = vmatprep.subr.mxu0 0.0
    %3208 = vmatpush2.msra.mxu0 0.0
    %3209 = vmatprep.subr.mxu0 0.0
    %3210 = vmatpush2.msra.mxu0 0.0
    %3211 = vmatprep.subr.mxu0 0.0
    %3212 = vmatpush2.msra.mxu0 0.0
    %3213 = vmatprep.subr.mxu0 0.0
    %3214 = vmatpush2.msra.mxu0 0.0
    %3215 = vmatprep.subr.mxu0 0.0
    %3216 = vmatpush2.msra.mxu0 0.0
    %3217 = vmatprep.subr.mxu0 0.0
    %3218 = vmatpush2.msra.mxu0 0.0
    %3219 = vmatprep.subr.mxu0 0.0
    %3220 = vmatpush2.msra.mxu0 0.0
    %3221 = vmatprep.subr.mxu0 0.0
    %3222 = vmatpush2.msra.mxu0 0.0
    %3223 = vmatprep.subr.mxu0 0.0
    %3224 = vmatpush2.msra.mxu0 0.0
    %3225 = vmatprep.subr.mxu0 0.0
    %3226 = vmatpush2.msra.mxu0 0.0
    %3227 = vmatprep.subr.mxu0 0.0
    %3228 = vmatpush2.msra.mxu0 0.0
    %3229 = vmatprep.subr.mxu0 0.0
    %3230 = vmatpush2.msra.mxu0 0.0
    %3231 = vmatprep.subr.mxu0 0.0
    %3232 = vmatpush2.msra.mxu0 0.0
    %3233 = vmatprep.mubr.f32.mxu0 0.0
    %3234 = vmatmul.mubr.f32.gmra.mxu0 %v2821
    %v3235 = vpop.f32.mrf.mxu0
    %v3236 = vadd.f32 %v3094, %v3235
    %v3237 = vpop.f32.mrf.mxu0
    %v3238 = vadd.f32 %v3096, %v3237
    %3239 = vdwg.mxu0
    %v3240 = vld [vmem:[%s16] sm:$0xf]
    %v3242 = vlaneseq
    %v3243 = vshrl.u32 %v3242, 7
    %v3244 = vsub.s32 0, %v3243
    %v3245 = vrot.slane %v3240, %v3244
    %v3246 = vlaneseq
    %v3247 = vshrl.u32 %v3246, 7
    %v3248 = vsub.s32 1, %v3247
    %v3249 = vrot.slane %v3240, %v3248
    %v3250 = vlaneseq
    %v3251 = vshrl.u32 %v3250, 7
    %v3252 = vsub.s32 2, %v3251
    %v3253 = vrot.slane %v3240, %v3252
    %v3254 = vlaneseq
    %v3255 = vshrl.u32 %v3254, 7
    %v3256 = vsub.s32 3, %v3255
    %v3257 = vrot.slane %v3240, %v3256
    %v3262 = vadd.f32 %v3165, %v3245
    %v3263 = vadd.f32 %v3167, %v3249
    %v3264 = vadd.f32 %v3236, %v3253
    %v3265 = vadd.f32 %v3238, %v3257
    %v3266 = vtanh.pop %v3262
    %v3267 = vtanh.pop %v3263
    %v3268 = vxor.u32 %v3264, 2147483648
    %v3269 = vxor.u32 %v3265, 2147483648
    %v3270 = vmul.f32 %v3268, 1.442695
    %v3271 = vpow.pop %v3270
    %v3272 = vmul.f32 %v3269, 1.442695
    %v3273 = vpow.pop %v3272
    %v3274 = vadd.f32 %v3271, 1.0
    %v3275 = vadd.f32 %v3273, 1.0
    %v3276 = vrcp.pop %v3274
    %v3277 = vmul.f32 1.0, %v3276
    %v3278 = vrcp.pop %v3275
    %v3279 = vmul.f32 1.0, %v3278
    %v3280 = vmul.f32 %v3266, %v3277
    %v3281 = vmul.f32 %v3267, %v3279
    %v3282 = vld [vmem:[%s17] sm:$0xff]
    %v3283 = vld [vmem:[%s17 + $0x8] sm:$0xff]
    %v3284 = vld [vmem:[%s17 + $0x10] sm:$0xff]
    %v3285 = vld [vmem:[%s17 + $0x18] sm:$0xff]
    %v3286 = vld [vmem:[%s17 + $0x20] sm:$0xff]
    %v3287 = vld [vmem:[%s17 + $0x28] sm:$0xff]
    %v3288 = vld [vmem:[%s17 + $0x30] sm:$0xff]
    %v3289 = vld [vmem:[%s17 + $0x38] sm:$0xff]
    %v3290 = vld [vmem:[%s17 + $0x40] sm:$0xff]
    %v3291 = vld [vmem:[%s17 + $0x48] sm:$0xff]
    %v3292 = vld [vmem:[%s17 + $0x50] sm:$0xff]
    %v3293 = vld [vmem:[%s17 + $0x58] sm:$0xff]
    %v3294 = vld [vmem:[%s17 + $0x60] sm:$0xff]
    %v3295 = vld [vmem:[%s17 + $0x68] sm:$0xff]
    %v3296 = vld [vmem:[%s17 + $0x70] sm:$0xff]
    %v3297 = vld [vmem:[%s17 + $0x78] sm:$0xff]
    %v3298 = vld [vmem:[%s17 + $0x80] sm:$0xff]
    %v3299 = vld [vmem:[%s17 + $0x88] sm:$0xff]
    %v3300 = vld [vmem:[%s17 + $0x90] sm:$0xff]
    %v3301 = vld [vmem:[%s17 + $0x98] sm:$0xff]
    %v3302 = vld [vmem:[%s17 + $0xa0] sm:$0xff]
    %v3303 = vld [vmem:[%s17 + $0xa8] sm:$0xff]
    %v3304 = vld [vmem:[%s17 + $0xb0] sm:$0xff]
    %v3305 = vld [vmem:[%s17 + $0xb8] sm:$0xff]
    %v3306 = vld [vmem:[%s17 + $0xc0] sm:$0xff]
    %v3307 = vld [vmem:[%s17 + $0xc8] sm:$0xff]
    %v3308 = vld [vmem:[%s17 + $0xd0] sm:$0xff]
    %v3309 = vld [vmem:[%s17 + $0xd8] sm:$0xff]
    %v3310 = vld [vmem:[%s17 + $0xe0] sm:$0xff]
    %v3311 = vld [vmem:[%s17 + $0xe8] sm:$0xff]
    %v3312 = vld [vmem:[%s17 + $0xf0] sm:$0xff]
    %v3313 = vld [vmem:[%s17 + $0xf8] sm:$0xff]
    %v3314 = vld [vmem:[%s18] sm:$0x1]
    %v3316 = vlaneseq
    %v3317 = vshrl.u32 %v3316, 7
    %v3318 = vsub.s32 0, %v3317
    %v3319 = vrot.slane %v3314, %v3318
    %3321 = vmatprep.subr.mxu0 0.0
    %3322 = vmatpush1.msra.mxu0 %v3297
    %3323 = vmatprep.subr.mxu0 0.0
    %3324 = vmatpush1.msra.mxu0 %v3296
    %3325 = vmatprep.subr.mxu0 0.0
    %3326 = vmatpush1.msra.mxu0 %v3295
    %3327 = vmatprep.subr.mxu0 0.0
    %3328 = vmatpush1.msra.mxu0 %v3294
    %3329 = vmatprep.subr.mxu0 0.0
    %3330 = vmatpush1.msra.mxu0 %v3293
    %3331 = vmatprep.subr.mxu0 0.0
    %3332 = vmatpush1.msra.mxu0 %v3292
    %3333 = vmatprep.subr.mxu0 0.0
    %3334 = vmatpush1.msra.mxu0 %v3291
    %3335 = vmatprep.subr.mxu0 0.0
    %3336 = vmatpush1.msra.mxu0 %v3290
    %3337 = vmatprep.subr.mxu0 0.0
    %3338 = vmatpush1.msra.mxu0 %v3289
    %3339 = vmatprep.subr.mxu0 0.0
    %3340 = vmatpush1.msra.mxu0 %v3288
    %3341 = vmatprep.subr.mxu0 0.0
    %3342 = vmatpush1.msra.mxu0 %v3287
    %3343 = vmatprep.subr.mxu0 0.0
    %3344 = vmatpush1.msra.mxu0 %v3286
    %3345 = vmatprep.subr.mxu0 0.0
    %3346 = vmatpush1.msra.mxu0 %v3285
    %3347 = vmatprep.subr.mxu0 0.0
    %3348 = vmatpush1.msra.mxu0 %v3284
    %3349 = vmatprep.subr.mxu0 0.0
    %3350 = vmatpush1.msra.mxu0 %v3283
    %3351 = vmatprep.subr.mxu0 0.0
    %3352 = vmatpush1.msra.mxu0 %v3282
    %3353 = vmatprep.subr.mxu0 0.0
    %3354 = vmatpush2.msra.mxu0 %v3313
    %3355 = vmatprep.subr.mxu0 0.0
    %3356 = vmatpush2.msra.mxu0 %v3312
    %3357 = vmatprep.subr.mxu0 0.0
    %3358 = vmatpush2.msra.mxu0 %v3311
    %3359 = vmatprep.subr.mxu0 0.0
    %3360 = vmatpush2.msra.mxu0 %v3310
    %3361 = vmatprep.subr.mxu0 0.0
    %3362 = vmatpush2.msra.mxu0 %v3309
    %3363 = vmatprep.subr.mxu0 0.0
    %3364 = vmatpush2.msra.mxu0 %v3308
    %3365 = vmatprep.subr.mxu0 0.0
    %3366 = vmatpush2.msra.mxu0 %v3307
    %3367 = vmatprep.subr.mxu0 0.0
    %3368 = vmatpush2.msra.mxu0 %v3306
    %3369 = vmatprep.subr.mxu0 0.0
    %3370 = vmatpush2.msra.mxu0 %v3305
    %3371 = vmatprep.subr.mxu0 0.0
    %3372 = vmatpush2.msra.mxu0 %v3304
    %3373 = vmatprep.subr.mxu0 0.0
    %3374 = vmatpush2.msra.mxu0 %v3303
    %3375 = vmatprep.subr.mxu0 0.0
    %3376 = vmatpush2.msra.mxu0 %v3302
    %3377 = vmatprep.subr.mxu0 0.0
    %3378 = vmatpush2.msra.mxu0 %v3301
    %3379 = vmatprep.subr.mxu0 0.0
    %3380 = vmatpush2.msra.mxu0 %v3300
    %3381 = vmatprep.subr.mxu0 0.0
    %3382 = vmatpush2.msra.mxu0 %v3299
    %3383 = vmatprep.subr.mxu0 0.0
    %3384 = vmatpush2.msra.mxu0 %v3298
    %3385 = vmatprep.mubr.f32.mxu0 %v3281
    %3386 = vmatmul.mubr.f32.gmra.mxu0 %v3280
    %v3387 = vpop.f32.mrf.mxu0
    %v3388 = vadd.f32 %v3319, %v3387
    %v3389 = vpop.f32.mrf.mxu0
    %3390 = vdwg.mxu0
    %vm3391 = vcmask 123904
    %3392 = vst.msk [vmem:[#allocation12] sm:$0x3] %vm3391, %v3388
    // Predicated region
    $region98: #{model_forward.1} parent=1 // pred_check
      _
    $region99: #{model_forward.1} parent=1 // pred_check_branch
      %3394 = sbr.rel (0) target = $region101
    $region100: #{model_forward.1} parent=1 // pred_region
      %s3396 = ssub.s32 32, 32
      %3397 = vsyncadd [#allocation5], %s3396
      %s3399 = sshll.u32 [#allocation12], 4
      %s3400 = int_to_ptr.vmem [resolvable:$true] %s3399
      %3402 = dma.vmem_to_hbm [thread:$0]  %s3400, 32, %s19, [#allocation5]
    $region101: #{model_forward.1} parent=1 // pred_fallthru
      _
    // Predicated region
    $region102: #{model_forward.1} parent=1 // pred_check
      _
    $region103: #{model_forward.1} parent=1 // pred_check_branch
      %3404 = sbr.rel (0) target = $region105
    $region104: #{model_forward.1} parent=1 // pred_region
      %3405 = dma.done [#allocation5], 32
    $region105: #{model_forward.1} parent=1 // pred_fallthru
      _
    %3406 = vsyncpa [#allocation4], 1
    %3407 = vsyncpa [#allocation7], 1
    %3408 = vsyncpa [#allocation10], 1
    %3409 = vsyncpa [#allocation5], 1

</llo_original>
